<compile_context>
chip_gen: v7x
topology: tpu7x:2x2x1
jax: 0.10.0
libtpu: 0.0.40
codegen_flags: <defaults>
</compile_context>

<pallas_src>
import functools

import numpy as np
import jax
import jax.numpy as jnp
from jax.experimental import pallas as pl
from jax.experimental.pallas import tpu as pltpu


_PT = 8    # sublane-aligned top halo rows
_GAP = 8   # sublane-aligned zero gap between stacked images (>= 2 = 5x5 pad)


# ----------------------------------------------------------------------------
# Fused Conv_Down kernel (one block of NB batch images per grid step)
# ----------------------------------------------------------------------------
def _conv_down_kernel(x_ref, w1_ref, wbr_ref, w3_ref, sb_ref, o_ref,
                      xpad, c1pad, catpad, *, H, NB, S, neg_slope):
    PT = _PT
    Lout = o_ref.shape[-1]                       # W * out_dim (lane-fused)
    Lin = xpad.shape[-1]                         # W * in_dim
    SPAN = (NB - 1) * S + H                      # rows covered by one stacked slab
    f32, bf16 = jnp.float32, jnp.bfloat16

    # ---- zero only the non-image rows (top halo + inter-image gaps + tail) --
    # Interior image rows are fully overwritten below every grid step, so they
    # never need clearing.  All chunks are 8-row (sublane) aligned.
    for s in [0] + [PT + H + b * S for b in range(NB)]:
        xpad[s:s + _GAP, :] = jnp.zeros((_GAP, Lin), bf16)
        c1pad[s:s + _GAP, :] = jnp.zeros((_GAP, Lout), bf16)
        catpad[s:s + _GAP, :] = jnp.zeros((_GAP, 3 * Lout), bf16)

    def bn_act(acc, idx):
        # folded Conv-bias + eval-mode BatchNorm affine, then LeakyReLU(0.2)
        y = acc * sb_ref[2 * idx:2 * idx + 1, :] + sb_ref[2 * idx + 1:2 * idx + 2, :]
        return jnp.maximum(y, neg_slope * y)     # == leaky_relu for 0<slope<1

    def conv_slab(src_ref, w_ref, tap0, K):
        # 'same' KxK conv over the whole stacked slab as K row-shifted matmuls;
        # W taps / input channels / W-zero-padding live in the banded weight.
        p = (K - 1) // 2
        acc = None
        for dy in range(K):
            r0 = PT - p + dy
            t = jnp.dot(src_ref[r0:r0 + SPAN, :], w_ref[tap0 + dy],
                        preferred_element_type=f32)
            acc = t if acc is None else acc + t
        return acc

    # ---- conv_1 : 3x3, in_dim -> out_dim ------------------------------------
    for b in range(NB):
        xpad[PT + b * S:PT + b * S + H, :] = x_ref[b].astype(bf16)
    c1 = bn_act(conv_slab(xpad, w1_ref, 0, 3), 0)          # (SPAN, Lout) f32
    c1b = c1.astype(bf16)
    for b in range(NB):
        c1pad[PT + b * S:PT + b * S + H, :] = c1b[b * S:b * S + H, :]

    # ---- branches: 1x1 / 3x3 / 5x5 (shared bf16 banded-weight stack) --------
    br1 = bn_act(jnp.dot(c1b, wbr_ref[0], preferred_element_type=f32), 1)  # 1x1
    br2 = bn_act(conv_slab(c1pad, wbr_ref, 1, 3), 2)                        # 3x3
    br3 = bn_act(conv_slab(c1pad, wbr_ref, 4, 5), 3)                        # 5x5
    for b in range(NB):
        r0 = PT + b * S
        s0 = b * S
        catpad[r0:r0 + H, 0 * Lout:1 * Lout] = br1[s0:s0 + H, :].astype(bf16)
        catpad[r0:r0 + H, 1 * Lout:2 * Lout] = br2[s0:s0 + H, :].astype(bf16)
        catpad[r0:r0 + H, 2 * Lout:3 * Lout] = br3[s0:s0 + H, :].astype(bf16)

    # ---- conv_3 : 3x3 over the lane-concat [c2_1|c2_2|c2_3] -----------------
    # Three dots of contraction depth 3*Lout (=384) instead of nine of 128.
    out = bn_act(conv_slab(catpad, w3_ref, 0, 3), 4)        # (SPAN, Lout) f32

    # Dropout(p=0.3) is identity in eval mode.
    # TODO(synk): training-mode dropout could be fused via pltpu.prng_random_bits.
    for b in range(NB):
        o_ref[b, :, :] = out[b * S:b * S + H, :].astype(o_ref.dtype)


# ----------------------------------------------------------------------------
# Host-side parameter preparation (banded bf16 weights, packed scale/bias)
# ----------------------------------------------------------------------------
def _banded_weight_np(w_hwio, width):
    """Fold spatial-W taps, input channels and W zero-padding into the matmul.

    Returns Wb with  Wb[dy, (w+dx-p)*Cin + ci, w*Cout + co] = w[dy, dx, ci, co]
    (taps falling outside [0, width) are dropped == zero padding), so that one
    output row is a single (width*Cin) x (width*Cout) matmul per dy tap.
    """
    w = np.asarray(w_hwio, np.float32)
    K, _, cin, cout = w.shape
    p = (K - 1) // 2
    wb = np.zeros((K, width * cin, width * cout), np.float32)
    for dy in range(K):
        for dx in range(K):
            for col in range(width):
                src = col + dx - p
                if 0 <= src < width:
                    wb[dy, src * cin:(src + 1) * cin,
                       col * cout:(col + 1) * cout] = w[dy, dx]
    return wb


def prepare_fused_params(params, width):
    """Precompute (once, host-side) banded bf16 weights and packed f32 affines."""
    w1, s1, b1 = params["conv_1"]
    w21, s21, b21 = params["conv_2_1"]
    w22, s22, b22 = params["conv_2_2"]
    w23, s23, b23 = params["conv_2_3"]
    w3, s3, b3 = params["conv_3"]
    cout = w1.shape[-1]

    def band(w):
        return _banded_weight_np(np.asarray(w, np.float32), width)

    # Branch convs share the (W*cout, W*cout) contraction -> one stacked input:
    # rows 0 = 1x1, 1..3 = 3x3 taps, 4..8 = 5x5 taps.
    wbr = np.concatenate([band(w21), band(w22), band(w23)], axis=0)

    # conv_3: concatenate the three per-branch banded weights along the
    # contraction axis so each dy tap is one (3*W*cout, W*cout) matmul against
    # the lane-concatenated [branch0|branch1|branch2] slab.
    w3np = np.asarray(w3, np.float32)                       # (3, 3, 3*cout, cout)
    w3b = np.concatenate(
        [band(w3np[:, :, j * cout:(j + 1) * cout, :]) for j in range(3)],
        axis=1)                                             # (3, 3*W*cout, W*cout)

    def tile(v):
        return np.tile(np.asarray(v, np.float32).reshape(1, cout), (1, width))

    sb = np.concatenate(
        [tile(s1), tile(b1), tile(s21), tile(b21), tile(s22), tile(b22),
         tile(s23), tile(b23), tile(s3), tile(b3)], axis=0)  # (10, W*cout) f32

    return {
        "w1": jnp.asarray(band(w1), jnp.bfloat16),
        "wbr": jnp.asarray(wbr, jnp.bfloat16),
        "w3": jnp.asarray(w3b, jnp.bfloat16),
        "sb": jnp.asarray(sb, jnp.float32),
    }


# ----------------------------------------------------------------------------
# Conv_Down forward (single fused pallas_call)
# ----------------------------------------------------------------------------
def conv_down_forward(x_nchw, fused, *, neg_slope=0.2, images_per_step=None):
    N, cin, H, W = x_nchw.shape
    Lin = W * cin
    Lout = fused["sb"].shape[-1]                 # W * out_dim
    cout = Lout // W

    assert H % 8 == 0, "H must be a multiple of 8 for sublane-aligned stacking"
    nb = N if images_per_step is None else images_per_step
    assert N % nb == 0

    S = H + _GAP                                 # per-image row stride in the slab
    rows = _PT + nb * S                          # top halo + nb images (+ gaps/tail)

    # NCHW -> NHWC -> lane-fused (N, H, W*Cin): channels ride the 128-lane axis.
    x = jnp.transpose(x_nchw, (0, 2, 3, 1)).reshape(N, H, Lin)

    kernel = functools.partial(_conv_down_kernel, H=H, NB=nb, S=S,
                               neg_slope=neg_slope)

    out = pl.pallas_call(
        kernel,
        out_shape=jax.ShapeDtypeStruct((N, H, Lout), x_nchw.dtype),
        grid_spec=pltpu.PrefetchScalarGridSpec(
            num_scalar_prefetch=0,
            grid=(N // nb,),
            in_specs=[
                pl.BlockSpec((nb, H, Lin), lambda g: (g, 0, 0)),          # x
                pl.BlockSpec((3, Lin, Lout), lambda g: (0, 0, 0)),        # w1 banded
                pl.BlockSpec((9, Lout, Lout), lambda g: (0, 0, 0)),       # branch stack
                pl.BlockSpec((3, 3 * Lout, Lout), lambda g: (0, 0, 0)),   # w3 banded
                pl.BlockSpec((10, Lout), lambda g: (0, 0)),               # scale/bias
            ],
            out_specs=pl.BlockSpec((nb, H, Lout), lambda g: (g, 0, 0)),
            scratch_shapes=[
                pltpu.VMEM((rows, Lin), jnp.bfloat16),       # stacked, H-padded x
                pltpu.VMEM((rows, Lout), jnp.bfloat16),      # stacked, H-padded conv_1
                pltpu.VMEM((rows, 3 * Lout), jnp.bfloat16),  # stacked branch concat
            ]),
        compiler_params=pltpu.CompilerParams(
            dimension_semantics=("arbitrary",)),   # tiny grid: avoid duplicated
                                                   # weight DMA across TCs (v7x)
    )(x, fused["w1"], fused["wbr"], fused["w3"], fused["sb"])

    return jnp.transpose(out.reshape(N, H, W, cout), (0, 3, 1, 2))


# ----------------------------------------------------------------------------
# Deterministic parameter construction (Conv2d + eval-mode BatchNorm2d folded)
# ----------------------------------------------------------------------------
def make_conv_bn_params(key, cin, cout, k, eps=1e-5):
    kw, kb, kg, kbt, km, kv = jax.random.split(key, 6)
    fan_in = k * k * cin
    w = jax.random.normal(kw, (k, k, cin, cout), jnp.float32) / jnp.sqrt(fan_in)
    conv_b = 0.1 * jax.random.normal(kb, (cout,), jnp.float32)
    gamma = 1.0 + 0.1 * jax.random.normal(kg, (cout,), jnp.float32)
    beta = 0.1 * jax.random.normal(kbt, (cout,), jnp.float32)
    running_mean = 0.1 * jax.random.normal(km, (cout,), jnp.float32)
    running_var = 1.0 + 0.1 * jnp.abs(jax.random.normal(kv, (cout,), jnp.float32))

    scale = gamma / jnp.sqrt(running_var + eps)           # BN eval-mode scale
    bias = (conv_b - running_mean) * scale + beta         # conv bias folded in
    return w, scale.reshape(1, cout), bias.reshape(1, cout)


def init_conv_down_params(key, in_dim, out_dim):
    ks = jax.random.split(key, 5)
    return {
        "conv_1":   make_conv_bn_params(ks[0], in_dim,      out_dim, 3),
        "conv_2_1": make_conv_bn_params(ks[1], out_dim,     out_dim, 1),
        "conv_2_2": make_conv_bn_params(ks[2], out_dim,     out_dim, 3),
        "conv_2_3": make_conv_bn_params(ks[3], out_dim,     out_dim, 5),
        "conv_3":   make_conv_bn_params(ks[4], out_dim * 3, out_dim, 3),
    }


# ----------------------------------------------------------------------------
# Plain-XLA reference (same semantics, all-f32) for a correctness cross-check
# ----------------------------------------------------------------------------
def _conv_bn_act_ref(x, w, scale, bias, neg_slope=0.2):
    y = jax.lax.conv_general_dilated(
        x, w, window_strides=(1, 1), padding="SAME",
        dimension_numbers=("NHWC", "HWIO", "NHWC"))
    y = y * scale.reshape(1, 1, 1, -1) + bias.reshape(1, 1, 1, -1)
    return jnp.where(y >= 0.0, y, neg_slope * y)


def conv_down_ref(x_nchw, params):
    x = jnp.transpose(x_nchw, (0, 2, 3, 1))
    c1 = _conv_bn_act_ref(x, *params["conv_1"])
    c21 = _conv_bn_act_ref(c1, *params["conv_2_1"])
    c22 = _conv_bn_act_ref(c1, *params["conv_2_2"])
    c23 = _conv_bn_act_ref(c1, *params["conv_2_3"])
    cat = jnp.concatenate([c21, c22, c23], axis=-1)     # == torch.cat(dim=1)
    out = _conv_bn_act_ref(cat, *params["conv_3"])
    return jnp.transpose(out, (0, 3, 1, 2))             # Dropout: identity (eval)


if __name__ == "__main__":
    N, IN_DIM, OUT_DIM, H, W = 2, 4, 8, 16, 16

    key = jax.random.PRNGKey(0)
    kx, kp = jax.random.split(key)
    x = jax.random.normal(kx, (N, IN_DIM, H, W), jnp.float32)    # NCHW input
    params = init_conv_down_params(kp, IN_DIM, OUT_DIM)
    fused = prepare_fused_params(params, W)                      # host-side, once

    fwd = jax.jit(conv_down_forward)
    out = jax.block_until_ready(fwd(x, fused))

    assert out.shape == (N, OUT_DIM, H, W), out.shape
    assert out.dtype == jnp.float32
    assert bool(jnp.all(jnp.isfinite(out)))

    # Cross-check against an all-f32 XLA reference of the same module (eval).
    # Tolerance sized for bf16 MXU operands with f32 accumulation/epilogue.
    ref = jax.block_until_ready(jax.jit(conv_down_ref)(x, params))
    np.testing.assert_allclose(np.asarray(out), np.asarray(ref),
                               rtol=5e-2, atol=1e-1)
    print("KERNEL_OK")
</pallas_src>

<mosaic_0001>
module attributes {stable_mosaic.version = 11 : i64} {
  func.func @_conv_down_kernel(%arg0: i32, %arg1: memref<2x16x64xf32, #tpu.memory_space<vmem>>, %arg2: memref<3x64x128xbf16, #tpu.memory_space<vmem>>, %arg3: memref<9x128x128xbf16, #tpu.memory_space<vmem>>, %arg4: memref<3x384x128xbf16, #tpu.memory_space<vmem>>, %arg5: memref<10x128xf32, #tpu.memory_space<vmem>>, %arg6: memref<2x16x128xf32, #tpu.memory_space<vmem>>, %arg7: memref<56x64xbf16, #tpu.memory_space<vmem>>, %arg8: memref<56x128xbf16, #tpu.memory_space<vmem>>, %arg9: memref<56x384xbf16, #tpu.memory_space<vmem>>) attributes {dimension_semantics = [#tpu.dimension_semantics<arbitrary>], iteration_bounds = array<i64: 1>, scalar_prefetch = 0 : i64, scratch_operands = 3 : i64, tpu.core_type = #tpu.core_type<tc>, window_params = [{transform_indices = @transform_0, window_bounds = array<i64: 2, 16, 64>}, {pipeline_mode = #tpu.pipeline_mode<synchronous>, transform_indices = @transform_1, window_bounds = array<i64: 3, 64, 128>}, {pipeline_mode = #tpu.pipeline_mode<synchronous>, transform_indices = @transform_2, window_bounds = array<i64: 9, 128, 128>}, {pipeline_mode = #tpu.pipeline_mode<synchronous>, transform_indices = @transform_3, window_bounds = array<i64: 3, 384, 128>}, {pipeline_mode = #tpu.pipeline_mode<synchronous>, transform_indices = @transform_4, window_bounds = array<i64: 10, 128>}, {transform_indices = @transform_5, window_bounds = array<i64: 2, 16, 128>}]} {
    %cst = arith.constant 0.000000e+00 : bf16
    %0 = vector.broadcast %cst : bf16 to vector<8x64xbf16>
    %c0 = arith.constant 0 : index
    %c0_0 = arith.constant 0 : index
    %1 = vector.load %arg7[%c0, %c0_0] : memref<56x64xbf16, #tpu.memory_space<vmem>>, vector<8x64xbf16>
    tpu.vector_store %arg7[%c0, %c0_0], %0 {strides = array<i32>} : memref<56x64xbf16, #tpu.memory_space<vmem>>, vector<8x64xbf16>,
    %cst_1 = arith.constant 0.000000e+00 : bf16
    %2 = vector.broadcast %cst_1 : bf16 to vector<8x128xbf16>
    %c0_2 = arith.constant 0 : index
    %c0_3 = arith.constant 0 : index
    %3 = vector.load %arg8[%c0_2, %c0_3] : memref<56x128xbf16, #tpu.memory_space<vmem>>, vector<8x128xbf16>
    tpu.vector_store %arg8[%c0_2, %c0_3], %2 {strides = array<i32>} : memref<56x128xbf16, #tpu.memory_space<vmem>>, vector<8x128xbf16>,
    %cst_4 = arith.constant 0.000000e+00 : bf16
    %4 = vector.broadcast %cst_4 : bf16 to vector<8x384xbf16>
    %c0_5 = arith.constant 0 : index
    %c0_6 = arith.constant 0 : index
    %5 = vector.load %arg9[%c0_5, %c0_6] : memref<56x384xbf16, #tpu.memory_space<vmem>>, vector<8x384xbf16>
    tpu.vector_store %arg9[%c0_5, %c0_6], %4 {strides = array<i32>} : memref<56x384xbf16, #tpu.memory_space<vmem>>, vector<8x384xbf16>,
    %cst_7 = arith.constant 0.000000e+00 : bf16
    %6 = vector.broadcast %cst_7 : bf16 to vector<8x64xbf16>
    %c24 = arith.constant 24 : index
    %c0_8 = arith.constant 0 : index
    %7 = vector.load %arg7[%c24, %c0_8] : memref<56x64xbf16, #tpu.memory_space<vmem>>, vector<8x64xbf16>
    tpu.vector_store %arg7[%c24, %c0_8], %6 {strides = array<i32>} : memref<56x64xbf16, #tpu.memory_space<vmem>>, vector<8x64xbf16>,
    %cst_9 = arith.constant 0.000000e+00 : bf16
    %8 = vector.broadcast %cst_9 : bf16 to vector<8x128xbf16>
    %c24_10 = arith.constant 24 : index
    %c0_11 = arith.constant 0 : index
    %9 = vector.load %arg8[%c24_10, %c0_11] : memref<56x128xbf16, #tpu.memory_space<vmem>>, vector<8x128xbf16>
    tpu.vector_store %arg8[%c24_10, %c0_11], %8 {strides = array<i32>} : memref<56x128xbf16, #tpu.memory_space<vmem>>, vector<8x128xbf16>,
    %cst_12 = arith.constant 0.000000e+00 : bf16
    %10 = vector.broadcast %cst_12 : bf16 to vector<8x384xbf16>
    %c24_13 = arith.constant 24 : index
    %c0_14 = arith.constant 0 : index
    %11 = vector.load %arg9[%c24_13, %c0_14] : memref<56x384xbf16, #tpu.memory_space<vmem>>, vector<8x384xbf16>
    tpu.vector_store %arg9[%c24_13, %c0_14], %10 {strides = array<i32>} : memref<56x384xbf16, #tpu.memory_space<vmem>>, vector<8x384xbf16>,
    %cst_15 = arith.constant 0.000000e+00 : bf16
    %12 = vector.broadcast %cst_15 : bf16 to vector<8x64xbf16>
    %c48 = arith.constant 48 : index
    %c0_16 = arith.constant 0 : index
    %13 = vector.load %arg7[%c48, %c0_16] : memref<56x64xbf16, #tpu.memory_space<vmem>>, vector<8x64xbf16>
    tpu.vector_store %arg7[%c48, %c0_16], %12 {strides = array<i32>} : memref<56x64xbf16, #tpu.memory_space<vmem>>, vector<8x64xbf16>,
    %cst_17 = arith.constant 0.000000e+00 : bf16
    %14 = vector.broadcast %cst_17 : bf16 to vector<8x128xbf16>
    %c48_18 = arith.constant 48 : index
    %c0_19 = arith.constant 0 : index
    %15 = vector.load %arg8[%c48_18, %c0_19] : memref<56x128xbf16, #tpu.memory_space<vmem>>, vector<8x128xbf16>
    tpu.vector_store %arg8[%c48_18, %c0_19], %14 {strides = array<i32>} : memref<56x128xbf16, #tpu.memory_space<vmem>>, vector<8x128xbf16>,
    %cst_20 = arith.constant 0.000000e+00 : bf16
    %16 = vector.broadcast %cst_20 : bf16 to vector<8x384xbf16>
    %c48_21 = arith.constant 48 : index
    %c0_22 = arith.constant 0 : index
    %17 = vector.load %arg9[%c48_21, %c0_22] : memref<56x384xbf16, #tpu.memory_space<vmem>>, vector<8x384xbf16>
    tpu.vector_store %arg9[%c48_21, %c0_22], %16 {strides = array<i32>} : memref<56x384xbf16, #tpu.memory_space<vmem>>, vector<8x384xbf16>,
    %c0_23 = arith.constant 0 : index
    %c0_24 = arith.constant 0 : index
    %c0_25 = arith.constant 0 : index
    %18 = vector.load %arg1[%c0_23, %c0_24, %c0_25] : memref<2x16x64xf32, #tpu.memory_space<vmem>>, vector<1x16x64xf32>
    %19 = vector.shape_cast %18 : vector<1x16x64xf32> to vector<16x64xf32>
    %20 = arith.truncf %19 : vector<16x64xf32> to vector<16x64xbf16>
    %c8 = arith.constant 8 : index
    %c0_26 = arith.constant 0 : index
    %21 = vector.load %arg7[%c8, %c0_26] : memref<56x64xbf16, #tpu.memory_space<vmem>>, vector<16x64xbf16>
    tpu.vector_store %arg7[%c8, %c0_26], %20 {strides = array<i32>} : memref<56x64xbf16, #tpu.memory_space<vmem>>, vector<16x64xbf16>,
    %c1 = arith.constant 1 : index
    %c0_27 = arith.constant 0 : index
    %c0_28 = arith.constant 0 : index
    %22 = vector.load %arg1[%c1, %c0_27, %c0_28] : memref<2x16x64xf32, #tpu.memory_space<vmem>>, vector<1x16x64xf32>
    %23 = vector.shape_cast %22 : vector<1x16x64xf32> to vector<16x64xf32>
    %24 = arith.truncf %23 : vector<16x64xf32> to vector<16x64xbf16>
    %c32 = arith.constant 32 : index
    %c0_29 = arith.constant 0 : index
    %25 = vector.load %arg7[%c32, %c0_29] : memref<56x64xbf16, #tpu.memory_space<vmem>>, vector<16x64xbf16>
    tpu.vector_store %arg7[%c32, %c0_29], %24 {strides = array<i32>} : memref<56x64xbf16, #tpu.memory_space<vmem>>, vector<16x64xbf16>,
    %c7 = arith.constant 7 : index
    %c0_30 = arith.constant 0 : index
    %26 = vector.load %arg7[%c7, %c0_30] : memref<56x64xbf16, #tpu.memory_space<vmem>>, vector<40x64xbf16>
    %c0_31 = arith.constant 0 : index
    %c0_32 = arith.constant 0 : index
    %c0_33 = arith.constant 0 : index
    %27 = vector.load %arg2[%c0_31, %c0_32, %c0_33] : memref<3x64x128xbf16, #tpu.memory_space<vmem>>, vector<1x64x128xbf16>
    %28 = vector.shape_cast %27 : vector<1x64x128xbf16> to vector<64x128xbf16>
    %cst_34 = arith.constant dense<0.000000e+00> : vector<40x128xf32>
    %29 = tpu.matmul %26, %28, %cst_34 {dimension_numbers = #tpu.dot_dimension_numbers<[1], [0], [0], [1], [0, 0, 1, 1], [], []>} : vector<40x64xbf16>, vector<64x128xbf16>, vector<40x128xf32> -> vector<40x128xf32>
    %c8_35 = arith.constant 8 : index
    %c0_36 = arith.constant 0 : index
    %30 = vector.load %arg7[%c8_35, %c0_36] : memref<56x64xbf16, #tpu.memory_space<vmem>>, vector<40x64xbf16>
    %c1_37 = arith.constant 1 : index
    %c0_38 = arith.constant 0 : index
    %c0_39 = arith.constant 0 : index
    %31 = vector.load %arg2[%c1_37, %c0_38, %c0_39] : memref<3x64x128xbf16, #tpu.memory_space<vmem>>, vector<1x64x128xbf16>
    %32 = vector.shape_cast %31 : vector<1x64x128xbf16> to vector<64x128xbf16>
    %cst_40 = arith.constant dense<0.000000e+00> : vector<40x128xf32>
    %33 = tpu.matmul %30, %32, %cst_40 {dimension_numbers = #tpu.dot_dimension_numbers<[1], [0], [0], [1], [0, 0, 1, 1], [], []>} : vector<40x64xbf16>, vector<64x128xbf16>, vector<40x128xf32> -> vector<40x128xf32>
    %34 = arith.addf %29, %33 : vector<40x128xf32>
    %c9 = arith.constant 9 : index
    %c0_41 = arith.constant 0 : index
    %35 = vector.load %arg7[%c9, %c0_41] : memref<56x64xbf16, #tpu.memory_space<vmem>>, vector<40x64xbf16>
    %c2 = arith.constant 2 : index
    %c0_42 = arith.constant 0 : index
    %c0_43 = arith.constant 0 : index
    %36 = vector.load %arg2[%c2, %c0_42, %c0_43] : memref<3x64x128xbf16, #tpu.memory_space<vmem>>, vector<1x64x128xbf16>
    %37 = vector.shape_cast %36 : vector<1x64x128xbf16> to vector<64x128xbf16>
    %cst_44 = arith.constant dense<0.000000e+00> : vector<40x128xf32>
    %38 = tpu.matmul %35, %37, %cst_44 {dimension_numbers = #tpu.dot_dimension_numbers<[1], [0], [0], [1], [0, 0, 1, 1], [], []>} : vector<40x64xbf16>, vector<64x128xbf16>, vector<40x128xf32> -> vector<40x128xf32>
    %39 = arith.addf %34, %38 : vector<40x128xf32>
    %c0_45 = arith.constant 0 : index
    %c0_46 = arith.constant 0 : index
    %40 = vector.load %arg5[%c0_45, %c0_46] : memref<10x128xf32, #tpu.memory_space<vmem>>, vector<1x128xf32>
    %41 = vector.broadcast %40 : vector<1x128xf32> to vector<40x128xf32>
    %42 = arith.mulf %39, %41 : vector<40x128xf32>
    %c1_47 = arith.constant 1 : index
    %c0_48 = arith.constant 0 : index
    %43 = vector.load %arg5[%c1_47, %c0_48] : memref<10x128xf32, #tpu.memory_space<vmem>>, vector<1x128xf32>
    %44 = vector.broadcast %43 : vector<1x128xf32> to vector<40x128xf32>
    %45 = arith.addf %42, %44 : vector<40x128xf32>
    %cst_49 = arith.constant 2.000000e-01 : f32
    %46 = vector.broadcast %cst_49 : f32 to vector<40x128xf32>
    %47 = arith.mulf %46, %45 : vector<40x128xf32>
    %48 = arith.maximumf %45, %47 : vector<40x128xf32>
    %49 = arith.truncf %48 : vector<40x128xf32> to vector<40x128xbf16>
    %50 = vector.extract_strided_slice %49 {offsets = [0, 0], sizes = [16, 128], strides = [1, 1]} : vector<40x128xbf16> to vector<16x128xbf16>
    %c8_50 = arith.constant 8 : index
    %c0_51 = arith.constant 0 : index
    %51 = vector.load %arg8[%c8_50, %c0_51] : memref<56x128xbf16, #tpu.memory_space<vmem>>, vector<16x128xbf16>
    tpu.vector_store %arg8[%c8_50, %c0_51], %50 {strides = array<i32>} : memref<56x128xbf16, #tpu.memory_space<vmem>>, vector<16x128xbf16>,
    %52 = vector.extract_strided_slice %49 {offsets = [24, 0], sizes = [16, 128], strides = [1, 1]} : vector<40x128xbf16> to vector<16x128xbf16>
    %c32_52 = arith.constant 32 : index
    %c0_53 = arith.constant 0 : index
    %53 = vector.load %arg8[%c32_52, %c0_53] : memref<56x128xbf16, #tpu.memory_space<vmem>>, vector<16x128xbf16>
    tpu.vector_store %arg8[%c32_52, %c0_53], %52 {strides = array<i32>} : memref<56x128xbf16, #tpu.memory_space<vmem>>, vector<16x128xbf16>,
    %c0_54 = arith.constant 0 : index
    %c0_55 = arith.constant 0 : index
    %c0_56 = arith.constant 0 : index
    %54 = vector.load %arg3[%c0_54, %c0_55, %c0_56] : memref<9x128x128xbf16, #tpu.memory_space<vmem>>, vector<1x128x128xbf16>
    %55 = vector.shape_cast %54 : vector<1x128x128xbf16> to vector<128x128xbf16>
    %cst_57 = arith.constant dense<0.000000e+00> : vector<40x128xf32>
    %56 = tpu.matmul %49, %55, %cst_57 {dimension_numbers = #tpu.dot_dimension_numbers<[1], [0], [0], [1], [0, 0, 1, 1], [], []>} : vector<40x128xbf16>, vector<128x128xbf16>, vector<40x128xf32> -> vector<40x128xf32>
    %c2_58 = arith.constant 2 : index
    %c0_59 = arith.constant 0 : index
    %57 = vector.load %arg5[%c2_58, %c0_59] : memref<10x128xf32, #tpu.memory_space<vmem>>, vector<1x128xf32>
    %58 = vector.broadcast %57 : vector<1x128xf32> to vector<40x128xf32>
    %59 = arith.mulf %56, %58 : vector<40x128xf32>
    %c3 = arith.constant 3 : index
    %c0_60 = arith.constant 0 : index
    %60 = vector.load %arg5[%c3, %c0_60] : memref<10x128xf32, #tpu.memory_space<vmem>>, vector<1x128xf32>
    %61 = vector.broadcast %60 : vector<1x128xf32> to vector<40x128xf32>
    %62 = arith.addf %59, %61 : vector<40x128xf32>
    %cst_61 = arith.constant 2.000000e-01 : f32
    %63 = vector.broadcast %cst_61 : f32 to vector<40x128xf32>
    %64 = arith.mulf %63, %62 : vector<40x128xf32>
    %65 = arith.maximumf %62, %64 : vector<40x128xf32>
    %c7_62 = arith.constant 7 : index
    %c0_63 = arith.constant 0 : index
    %66 = vector.load %arg8[%c7_62, %c0_63] : memref<56x128xbf16, #tpu.memory_space<vmem>>, vector<40x128xbf16>
    %c1_64 = arith.constant 1 : index
    %c0_65 = arith.constant 0 : index
    %c0_66 = arith.constant 0 : index
    %67 = vector.load %arg3[%c1_64, %c0_65, %c0_66] : memref<9x128x128xbf16, #tpu.memory_space<vmem>>, vector<1x128x128xbf16>
    %68 = vector.shape_cast %67 : vector<1x128x128xbf16> to vector<128x128xbf16>
    %cst_67 = arith.constant dense<0.000000e+00> : vector<40x128xf32>
    %69 = tpu.matmul %66, %68, %cst_67 {dimension_numbers = #tpu.dot_dimension_numbers<[1], [0], [0], [1], [0, 0, 1, 1], [], []>} : vector<40x128xbf16>, vector<128x128xbf16>, vector<40x128xf32> -> vector<40x128xf32>
    %c8_68 = arith.constant 8 : index
    %c0_69 = arith.constant 0 : index
    %70 = vector.load %arg8[%c8_68, %c0_69] : memref<56x128xbf16, #tpu.memory_space<vmem>>, vector<40x128xbf16>
    %c2_70 = arith.constant 2 : index
    %c0_71 = arith.constant 0 : index
    %c0_72 = arith.constant 0 : index
    %71 = vector.load %arg3[%c2_70, %c0_71, %c0_72] : memref<9x128x128xbf16, #tpu.memory_space<vmem>>, vector<1x128x128xbf16>
    %72 = vector.shape_cast %71 : vector<1x128x128xbf16> to vector<128x128xbf16>
    %cst_73 = arith.constant dense<0.000000e+00> : vector<40x128xf32>
    %73 = tpu.matmul %70, %72, %cst_73 {dimension_numbers = #tpu.dot_dimension_numbers<[1], [0], [0], [1], [0, 0, 1, 1], [], []>} : vector<40x128xbf16>, vector<128x128xbf16>, vector<40x128xf32> -> vector<40x128xf32>
    %74 = arith.addf %69, %73 : vector<40x128xf32>
    %c9_74 = arith.constant 9 : index
    %c0_75 = arith.constant 0 : index
    %75 = vector.load %arg8[%c9_74, %c0_75] : memref<56x128xbf16, #tpu.memory_space<vmem>>, vector<40x128xbf16>
    %c3_76 = arith.constant 3 : index
    %c0_77 = arith.constant 0 : index
    %c0_78 = arith.constant 0 : index
    %76 = vector.load %arg3[%c3_76, %c0_77, %c0_78] : memref<9x128x128xbf16, #tpu.memory_space<vmem>>, vector<1x128x128xbf16>
    %77 = vector.shape_cast %76 : vector<1x128x128xbf16> to vector<128x128xbf16>
    %cst_79 = arith.constant dense<0.000000e+00> : vector<40x128xf32>
    %78 = tpu.matmul %75, %77, %cst_79 {dimension_numbers = #tpu.dot_dimension_numbers<[1], [0], [0], [1], [0, 0, 1, 1], [], []>} : vector<40x128xbf16>, vector<128x128xbf16>, vector<40x128xf32> -> vector<40x128xf32>
    %79 = arith.addf %74, %78 : vector<40x128xf32>
    %c4 = arith.constant 4 : index
    %c0_80 = arith.constant 0 : index
    %80 = vector.load %arg5[%c4, %c0_80] : memref<10x128xf32, #tpu.memory_space<vmem>>, vector<1x128xf32>
    %81 = vector.broadcast %80 : vector<1x128xf32> to vector<40x128xf32>
    %82 = arith.mulf %79, %81 : vector<40x128xf32>
    %c5 = arith.constant 5 : index
    %c0_81 = arith.constant 0 : index
    %83 = vector.load %arg5[%c5, %c0_81] : memref<10x128xf32, #tpu.memory_space<vmem>>, vector<1x128xf32>
    %84 = vector.broadcast %83 : vector<1x128xf32> to vector<40x128xf32>
    %85 = arith.addf %82, %84 : vector<40x128xf32>
    %cst_82 = arith.constant 2.000000e-01 : f32
    %86 = vector.broadcast %cst_82 : f32 to vector<40x128xf32>
    %87 = arith.mulf %86, %85 : vector<40x128xf32>
    %88 = arith.maximumf %85, %87 : vector<40x128xf32>
    %c6 = arith.constant 6 : index
    %c0_83 = arith.constant 0 : index
    %89 = vector.load %arg8[%c6, %c0_83] : memref<56x128xbf16, #tpu.memory_space<vmem>>, vector<40x128xbf16>
    %c4_84 = arith.constant 4 : index
    %c0_85 = arith.constant 0 : index
    %c0_86 = arith.constant 0 : index
    %90 = vector.load %arg3[%c4_84, %c0_85, %c0_86] : memref<9x128x128xbf16, #tpu.memory_space<vmem>>, vector<1x128x128xbf16>
    %91 = vector.shape_cast %90 : vector<1x128x128xbf16> to vector<128x128xbf16>
    %cst_87 = arith.constant dense<0.000000e+00> : vector<40x128xf32>
    %92 = tpu.matmul %89, %91, %cst_87 {dimension_numbers = #tpu.dot_dimension_numbers<[1], [0], [0], [1], [0, 0, 1, 1], [], []>} : vector<40x128xbf16>, vector<128x128xbf16>, vector<40x128xf32> -> vector<40x128xf32>
    %c7_88 = arith.constant 7 : index
    %c0_89 = arith.constant 0 : index
    %93 = vector.load %arg8[%c7_88, %c0_89] : memref<56x128xbf16, #tpu.memory_space<vmem>>, vector<40x128xbf16>
    %c5_90 = arith.constant 5 : index
    %c0_91 = arith.constant 0 : index
    %c0_92 = arith.constant 0 : index
    %94 = vector.load %arg3[%c5_90, %c0_91, %c0_92] : memref<9x128x128xbf16, #tpu.memory_space<vmem>>, vector<1x128x128xbf16>
    %95 = vector.shape_cast %94 : vector<1x128x128xbf16> to vector<128x128xbf16>
    %cst_93 = arith.constant dense<0.000000e+00> : vector<40x128xf32>
    %96 = tpu.matmul %93, %95, %cst_93 {dimension_numbers = #tpu.dot_dimension_numbers<[1], [0], [0], [1], [0, 0, 1, 1], [], []>} : vector<40x128xbf16>, vector<128x128xbf16>, vector<40x128xf32> -> vector<40x128xf32>
    %97 = arith.addf %92, %96 : vector<40x128xf32>
    %c8_94 = arith.constant 8 : index
    %c0_95 = arith.constant 0 : index
    %98 = vector.load %arg8[%c8_94, %c0_95] : memref<56x128xbf16, #tpu.memory_space<vmem>>, vector<40x128xbf16>
    %c6_96 = arith.constant 6 : index
    %c0_97 = arith.constant 0 : index
    %c0_98 = arith.constant 0 : index
    %99 = vector.load %arg3[%c6_96, %c0_97, %c0_98] : memref<9x128x128xbf16, #tpu.memory_space<vmem>>, vector<1x128x128xbf16>
    %100 = vector.shape_cast %99 : vector<1x128x128xbf16> to vector<128x128xbf16>
    %cst_99 = arith.constant dense<0.000000e+00> : vector<40x128xf32>
    %101 = tpu.matmul %98, %100, %cst_99 {dimension_numbers = #tpu.dot_dimension_numbers<[1], [0], [0], [1], [0, 0, 1, 1], [], []>} : vector<40x128xbf16>, vector<128x128xbf16>, vector<40x128xf32> -> vector<40x128xf32>
    %102 = arith.addf %97, %101 : vector<40x128xf32>
    %c9_100 = arith.constant 9 : index
    %c0_101 = arith.constant 0 : index
    %103 = vector.load %arg8[%c9_100, %c0_101] : memref<56x128xbf16, #tpu.memory_space<vmem>>, vector<40x128xbf16>
    %c7_102 = arith.constant 7 : index
    %c0_103 = arith.constant 0 : index
    %c0_104 = arith.constant 0 : index
    %104 = vector.load %arg3[%c7_102, %c0_103, %c0_104] : memref<9x128x128xbf16, #tpu.memory_space<vmem>>, vector<1x128x128xbf16>
    %105 = vector.shape_cast %104 : vector<1x128x128xbf16> to vector<128x128xbf16>
    %cst_105 = arith.constant dense<0.000000e+00> : vector<40x128xf32>
    %106 = tpu.matmul %103, %105, %cst_105 {dimension_numbers = #tpu.dot_dimension_numbers<[1], [0], [0], [1], [0, 0, 1, 1], [], []>} : vector<40x128xbf16>, vector<128x128xbf16>, vector<40x128xf32> -> vector<40x128xf32>
    %107 = arith.addf %102, %106 : vector<40x128xf32>
    %c10 = arith.constant 10 : index
    %c0_106 = arith.constant 0 : index
    %108 = vector.load %arg8[%c10, %c0_106] : memref<56x128xbf16, #tpu.memory_space<vmem>>, vector<40x128xbf16>
    %c8_107 = arith.constant 8 : index
    %c0_108 = arith.constant 0 : index
    %c0_109 = arith.constant 0 : index
    %109 = vector.load %arg3[%c8_107, %c0_108, %c0_109] : memref<9x128x128xbf16, #tpu.memory_space<vmem>>, vector<1x128x128xbf16>
    %110 = vector.shape_cast %109 : vector<1x128x128xbf16> to vector<128x128xbf16>
    %cst_110 = arith.constant dense<0.000000e+00> : vector<40x128xf32>
    %111 = tpu.matmul %108, %110, %cst_110 {dimension_numbers = #tpu.dot_dimension_numbers<[1], [0], [0], [1], [0, 0, 1, 1], [], []>} : vector<40x128xbf16>, vector<128x128xbf16>, vector<40x128xf32> -> vector<40x128xf32>
    %112 = arith.addf %107, %111 : vector<40x128xf32>
    %c6_111 = arith.constant 6 : index
    %c0_112 = arith.constant 0 : index
    %113 = vector.load %arg5[%c6_111, %c0_112] : memref<10x128xf32, #tpu.memory_space<vmem>>, vector<1x128xf32>
    %114 = vector.broadcast %113 : vector<1x128xf32> to vector<40x128xf32>
    %115 = arith.mulf %112, %114 : vector<40x128xf32>
    %c7_113 = arith.constant 7 : index
    %c0_114 = arith.constant 0 : index
    %116 = vector.load %arg5[%c7_113, %c0_114] : memref<10x128xf32, #tpu.memory_space<vmem>>, vector<1x128xf32>
    %117 = vector.broadcast %116 : vector<1x128xf32> to vector<40x128xf32>
    %118 = arith.addf %115, %117 : vector<40x128xf32>
    %cst_115 = arith.constant 2.000000e-01 : f32
    %119 = vector.broadcast %cst_115 : f32 to vector<40x128xf32>
    %120 = arith.mulf %119, %118 : vector<40x128xf32>
    %121 = arith.maximumf %118, %120 : vector<40x128xf32>
    %122 = vector.extract_strided_slice %65 {offsets = [0, 0], sizes = [16, 128], strides = [1, 1]} : vector<40x128xf32> to vector<16x128xf32>
    %123 = arith.truncf %122 : vector<16x128xf32> to vector<16x128xbf16>
    %c8_116 = arith.constant 8 : index
    %c0_117 = arith.constant 0 : index
    %124 = vector.load %arg9[%c8_116, %c0_117] : memref<56x384xbf16, #tpu.memory_space<vmem>>, vector<16x128xbf16>
    tpu.vector_store %arg9[%c8_116, %c0_117], %123 {strides = array<i32>} : memref<56x384xbf16, #tpu.memory_space<vmem>>, vector<16x128xbf16>,
    %125 = vector.extract_strided_slice %88 {offsets = [0, 0], sizes = [16, 128], strides = [1, 1]} : vector<40x128xf32> to vector<16x128xf32>
    %126 = arith.truncf %125 : vector<16x128xf32> to vector<16x128xbf16>
    %c8_118 = arith.constant 8 : index
    %c128 = arith.constant 128 : index
    %127 = vector.load %arg9[%c8_118, %c128] : memref<56x384xbf16, #tpu.memory_space<vmem>>, vector<16x128xbf16>
    tpu.vector_store %arg9[%c8_118, %c128], %126 {strides = array<i32>} : memref<56x384xbf16, #tpu.memory_space<vmem>>, vector<16x128xbf16>,
    %128 = vector.extract_strided_slice %121 {offsets = [0, 0], sizes = [16, 128], strides = [1, 1]} : vector<40x128xf32> to vector<16x128xf32>
    %129 = arith.truncf %128 : vector<16x128xf32> to vector<16x128xbf16>
    %c8_119 = arith.constant 8 : index
    %c256 = arith.constant 256 : index
    %130 = vector.load %arg9[%c8_119, %c256] : memref<56x384xbf16, #tpu.memory_space<vmem>>, vector<16x128xbf16>
    tpu.vector_store %arg9[%c8_119, %c256], %129 {strides = array<i32>} : memref<56x384xbf16, #tpu.memory_space<vmem>>, vector<16x128xbf16>,
    %131 = vector.extract_strided_slice %65 {offsets = [24, 0], sizes = [16, 128], strides = [1, 1]} : vector<40x128xf32> to vector<16x128xf32>
    %132 = arith.truncf %131 : vector<16x128xf32> to vector<16x128xbf16>
    %c32_120 = arith.constant 32 : index
    %c0_121 = arith.constant 0 : index
    %133 = vector.load %arg9[%c32_120, %c0_121] : memref<56x384xbf16, #tpu.memory_space<vmem>>, vector<16x128xbf16>
    tpu.vector_store %arg9[%c32_120, %c0_121], %132 {strides = array<i32>} : memref<56x384xbf16, #tpu.memory_space<vmem>>, vector<16x128xbf16>,
    %134 = vector.extract_strided_slice %88 {offsets = [24, 0], sizes = [16, 128], strides = [1, 1]} : vector<40x128xf32> to vector<16x128xf32>
    %135 = arith.truncf %134 : vector<16x128xf32> to vector<16x128xbf16>
    %c32_122 = arith.constant 32 : index
    %c128_123 = arith.constant 128 : index
    %136 = vector.load %arg9[%c32_122, %c128_123] : memref<56x384xbf16, #tpu.memory_space<vmem>>, vector<16x128xbf16>
    tpu.vector_store %arg9[%c32_122, %c128_123], %135 {strides = array<i32>} : memref<56x384xbf16, #tpu.memory_space<vmem>>, vector<16x128xbf16>,
    %137 = vector.extract_strided_slice %121 {offsets = [24, 0], sizes = [16, 128], strides = [1, 1]} : vector<40x128xf32> to vector<16x128xf32>
    %138 = arith.truncf %137 : vector<16x128xf32> to vector<16x128xbf16>
    %c32_124 = arith.constant 32 : index
    %c256_125 = arith.constant 256 : index
    %139 = vector.load %arg9[%c32_124, %c256_125] : memref<56x384xbf16, #tpu.memory_space<vmem>>, vector<16x128xbf16>
    tpu.vector_store %arg9[%c32_124, %c256_125], %138 {strides = array<i32>} : memref<56x384xbf16, #tpu.memory_space<vmem>>, vector<16x128xbf16>,
    %c7_126 = arith.constant 7 : index
    %c0_127 = arith.constant 0 : index
    %140 = vector.load %arg9[%c7_126, %c0_127] : memref<56x384xbf16, #tpu.memory_space<vmem>>, vector<40x384xbf16>
    %c0_128 = arith.constant 0 : index
    %c0_129 = arith.constant 0 : index
    %c0_130 = arith.constant 0 : index
    %141 = vector.load %arg4[%c0_128, %c0_129, %c0_130] : memref<3x384x128xbf16, #tpu.memory_space<vmem>>, vector<1x384x128xbf16>
    %142 = vector.shape_cast %141 : vector<1x384x128xbf16> to vector<384x128xbf16>
    %cst_131 = arith.constant dense<0.000000e+00> : vector<40x128xf32>
    %143 = tpu.matmul %140, %142, %cst_131 {dimension_numbers = #tpu.dot_dimension_numbers<[1], [0], [0], [1], [0, 0, 1, 1], [], []>} : vector<40x384xbf16>, vector<384x128xbf16>, vector<40x128xf32> -> vector<40x128xf32>
    %c8_132 = arith.constant 8 : index
    %c0_133 = arith.constant 0 : index
    %144 = vector.load %arg9[%c8_132, %c0_133] : memref<56x384xbf16, #tpu.memory_space<vmem>>, vector<40x384xbf16>
    %c1_134 = arith.constant 1 : index
    %c0_135 = arith.constant 0 : index
    %c0_136 = arith.constant 0 : index
    %145 = vector.load %arg4[%c1_134, %c0_135, %c0_136] : memref<3x384x128xbf16, #tpu.memory_space<vmem>>, vector<1x384x128xbf16>
    %146 = vector.shape_cast %145 : vector<1x384x128xbf16> to vector<384x128xbf16>
    %cst_137 = arith.constant dense<0.000000e+00> : vector<40x128xf32>
    %147 = tpu.matmul %144, %146, %cst_137 {dimension_numbers = #tpu.dot_dimension_numbers<[1], [0], [0], [1], [0, 0, 1, 1], [], []>} : vector<40x384xbf16>, vector<384x128xbf16>, vector<40x128xf32> -> vector<40x128xf32>
    %148 = arith.addf %143, %147 : vector<40x128xf32>
    %c9_138 = arith.constant 9 : index
    %c0_139 = arith.constant 0 : index
    %149 = vector.load %arg9[%c9_138, %c0_139] : memref<56x384xbf16, #tpu.memory_space<vmem>>, vector<40x384xbf16>
    %c2_140 = arith.constant 2 : index
    %c0_141 = arith.constant 0 : index
    %c0_142 = arith.constant 0 : index
    %150 = vector.load %arg4[%c2_140, %c0_141, %c0_142] : memref<3x384x128xbf16, #tpu.memory_space<vmem>>, vector<1x384x128xbf16>
    %151 = vector.shape_cast %150 : vector<1x384x128xbf16> to vector<384x128xbf16>
    %cst_143 = arith.constant dense<0.000000e+00> : vector<40x128xf32>
    %152 = tpu.matmul %149, %151, %cst_143 {dimension_numbers = #tpu.dot_dimension_numbers<[1], [0], [0], [1], [0, 0, 1, 1], [], []>} : vector<40x384xbf16>, vector<384x128xbf16>, vector<40x128xf32> -> vector<40x128xf32>
    %153 = arith.addf %148, %152 : vector<40x128xf32>
    %c8_144 = arith.constant 8 : index
    %c0_145 = arith.constant 0 : index
    %154 = vector.load %arg5[%c8_144, %c0_145] : memref<10x128xf32, #tpu.memory_space<vmem>>, vector<1x128xf32>
    %155 = vector.broadcast %154 : vector<1x128xf32> to vector<40x128xf32>
    %156 = arith.mulf %153, %155 : vector<40x128xf32>
    %c9_146 = arith.constant 9 : index
    %c0_147 = arith.constant 0 : index
    %157 = vector.load %arg5[%c9_146, %c0_147] : memref<10x128xf32, #tpu.memory_space<vmem>>, vector<1x128xf32>
    %158 = vector.broadcast %157 : vector<1x128xf32> to vector<40x128xf32>
    %159 = arith.addf %156, %158 : vector<40x128xf32>
    %cst_148 = arith.constant 2.000000e-01 : f32
    %160 = vector.broadcast %cst_148 : f32 to vector<40x128xf32>
    %161 = arith.mulf %160, %159 : vector<40x128xf32>
    %162 = arith.maximumf %159, %161 : vector<40x128xf32>
    %163 = vector.extract_strided_slice %162 {offsets = [0, 0], sizes = [16, 128], strides = [1, 1]} : vector<40x128xf32> to vector<16x128xf32>
    %c0_149 = arith.constant 0 : index
    %c0_150 = arith.constant 0 : index
    %c0_151 = arith.constant 0 : index
    %164 = vector.load %arg6[%c0_149, %c0_150, %c0_151] : memref<2x16x128xf32, #tpu.memory_space<vmem>>, vector<1x16x128xf32>
    %165 = vector.shape_cast %164 : vector<1x16x128xf32> to vector<16x128xf32>
    %166 = vector.shape_cast %163 : vector<16x128xf32> to vector<1x16x128xf32>
    tpu.vector_store %arg6[%c0_149, %c0_150, %c0_151], %166 {strides = array<i32>} : memref<2x16x128xf32, #tpu.memory_space<vmem>>, vector<1x16x128xf32>,
    %167 = vector.extract_strided_slice %162 {offsets = [24, 0], sizes = [16, 128], strides = [1, 1]} : vector<40x128xf32> to vector<16x128xf32>
    %c1_152 = arith.constant 1 : index
    %c0_153 = arith.constant 0 : index
    %c0_154 = arith.constant 0 : index
    %168 = vector.load %arg6[%c1_152, %c0_153, %c0_154] : memref<2x16x128xf32, #tpu.memory_space<vmem>>, vector<1x16x128xf32>
    %169 = vector.shape_cast %168 : vector<1x16x128xf32> to vector<16x128xf32>
    %170 = vector.shape_cast %167 : vector<16x128xf32> to vector<1x16x128xf32>
    tpu.vector_store %arg6[%c1_152, %c0_153, %c0_154], %170 {strides = array<i32>} : memref<2x16x128xf32, #tpu.memory_space<vmem>>, vector<1x16x128xf32>,
    return
  }
  func.func @transform_0(%arg0: i32) -> (i32, i32, i32) {
    %c0_i32 = arith.constant 0 : i32
    %c0_i32_0 = arith.constant 0 : i32
    %c0_i32_1 = arith.constant 0 : i32
    return %arg0, %c0_i32, %c0_i32_0 : i32, i32, i32
  }
  func.func @transform_1(%arg0: i32) -> (i32, i32, i32) {
    %c0_i32 = arith.constant 0 : i32
    %c0_i32_0 = arith.constant 0 : i32
    %c0_i32_1 = arith.constant 0 : i32
    %c0_i32_2 = arith.constant 0 : i32
    return %c0_i32, %c0_i32_0, %c0_i32_1 : i32, i32, i32
  }
  func.func @transform_2(%arg0: i32) -> (i32, i32, i32) {
    %c0_i32 = arith.constant 0 : i32
    %c0_i32_0 = arith.constant 0 : i32
    %c0_i32_1 = arith.constant 0 : i32
    %c0_i32_2 = arith.constant 0 : i32
    return %c0_i32, %c0_i32_0, %c0_i32_1 : i32, i32, i32
  }
  func.func @transform_3(%arg0: i32) -> (i32, i32, i32) {
    %c0_i32 = arith.constant 0 : i32
    %c0_i32_0 = arith.constant 0 : i32
    %c0_i32_1 = arith.constant 0 : i32
    %c0_i32_2 = arith.constant 0 : i32
    return %c0_i32, %c0_i32_0, %c0_i32_1 : i32, i32, i32
  }
  func.func @transform_4(%arg0: i32) -> (i32, i32) {
    %c0_i32 = arith.constant 0 : i32
    %c0_i32_0 = arith.constant 0 : i32
    %c0_i32_1 = arith.constant 0 : i32
    return %c0_i32, %c0_i32_0 : i32, i32
  }
  func.func @transform_5(%arg0: i32) -> (i32, i32, i32) {
    %c0_i32 = arith.constant 0 : i32
    %c0_i32_0 = arith.constant 0 : i32
    %c0_i32_1 = arith.constant 0 : i32
    return %arg0, %c0_i32, %c0_i32_0 : i32, i32, i32
  }
}

</mosaic_0001>

<llo_original>
// kernel: conv_down_forward.1
$region0: #{conv_down_forward.1}
  #allocation0 [shape = 'u32[]', space=smem, size = 0x4, offset = 0x4, fixed_abs, tag = 'smem constant byte address 0x4 - core index']
  #allocation1 [shape = 'u32[144,128]{1,0:T(1,128)}', space=vmem, size = 0x12000, scoped, tag = 'internal scratch']
  #allocation2 [shape = 'bf16[56,64]{1,0:T(8,128)(2,1)}', space=vmem, size = 0x3800, scoped, tag = 'scratch operand']
  #allocation3 [shape = 'bf16[56,128]{1,0:T(8,128)(2,1)}', space=vmem, size = 0x3800, scoped, tag = 'scratch operand']
  #allocation4 [shape = 'bf16[56,384]{1,0:T(8,128)(2,1)}', space=vmem, size = 0xa800, scoped, tag = 'scratch operand']
  %s0 = inlined_call_operand.vmem [shape: f32[2,16,64], index: 0, kind: input, shape index: {}]
  %s1 = inlined_call_operand.vmem [shape: bf16[3,64,128], index: 1, kind: input, shape index: {}]
  %s2 = inlined_call_operand.hbm [shape: bf16[9,128,128], index: 2, kind: input, shape index: {}]
  %s3 = inlined_call_operand.hbm [shape: bf16[3,384,128], index: 3, kind: input, shape index: {}]
  %s4 = inlined_call_operand.vmem [shape: f32[10,128], index: 4, kind: input, shape index: {}]
  %s5 = inlined_call_operand.vmem [shape: f32[2,16,128], index: 5, kind: output, shape index: {}]
  %s6 = sld [smem:[#allocation0]]
  $region38: #{conv_down_forward.1} parent=0
    _
  %s8 = ssub.s32 1, %s6
  %s9 = scalar_select 0, %s8, %s6
  $region1: #{conv_down_forward.1} parent=0
    #allocation5 [shape = 'u8[294912]{0}', space=vmem, size = 0x48000, scoped, tag = 'input window, operand 2, single buffered']
    #allocation6 [shape = 's32[1]{0}', space=sflag, size = 0x4, scoped, tag = 'scoped memory for conv_down_forward.1']
    #allocation7 [shape = 'u8[294912]{0}', space=vmem, size = 0x48000, scoped, tag = 'input window, operand 3, single buffered']
    #allocation8 [shape = 's32[1]{0}', space=sflag, size = 0x4, scoped, tag = 'scoped memory for conv_down_forward.1']
    %10 = vsyncpa [#allocation6], 0
    %11 = vsyncpa [#allocation8], 0
    // Predicated region
    $region2: #{conv_down_forward.1} parent=1 // pred_check
      _
    $region3: #{conv_down_forward.1} parent=1 // pred_check_branch
      %13 = sbr.rel (0) target = $region5
    $region4: #{conv_down_forward.1} parent=1 // pred_region
      _
    $region5: #{conv_down_forward.1} parent=1 // pred_fallthru
      _
    // Predicated region
    $region6: #{conv_down_forward.1} parent=1 // pred_check
      _
    $region7: #{conv_down_forward.1} parent=1 // pred_check_branch
      %15 = sbr.rel (0) target = $region9
    $region8: #{conv_down_forward.1} parent=1 // pred_region
      _
    $region9: #{conv_down_forward.1} parent=1 // pred_fallthru
      _
    // Predicated region
    $region10: #{conv_down_forward.1} parent=1 // pred_check
      _
    $region11: #{conv_down_forward.1} parent=1 // pred_check_branch
      %17 = sbr.rel (0) target = $region13
    $region12: #{conv_down_forward.1} parent=1 // pred_region
      %s19 = ssub.s32 9216, 9216
      %20 = vsyncadd [#allocation6], %s19
      %s21 = sshll.u32 [#allocation5], 4
      %s22 = int_to_ptr.vmem [resolvable:$true] %s21
      %27 = dma.hbm_to_vmem [thread:$0]  %s2, 9216, %s22, [#allocation6], 64, 64, 4
    $region13: #{conv_down_forward.1} parent=1 // pred_fallthru
      _
    // Predicated region
    $region14: #{conv_down_forward.1} parent=1 // pred_check
      _
    $region15: #{conv_down_forward.1} parent=1 // pred_check_branch
      %29 = sbr.rel (0) target = $region17
    $region16: #{conv_down_forward.1} parent=1 // pred_region
      %s31 = ssub.s32 9216, 9216
      %32 = vsyncadd [#allocation8], %s31
      %s33 = sshll.u32 [#allocation7], 4
      %s34 = int_to_ptr.vmem [resolvable:$true] %s33
      %39 = dma.hbm_to_vmem [thread:$0]  %s3, 9216, %s34, [#allocation8], 64, 64, 4
    $region17: #{conv_down_forward.1} parent=1 // pred_fallthru
      _
    // Predicated region
    $region18: #{conv_down_forward.1} parent=1 // pred_check
      _
    $region19: #{conv_down_forward.1} parent=1 // pred_check_branch
      %41 = sbr.rel (0) target = $region21
    $region20: #{conv_down_forward.1} parent=1 // pred_region
      _
    $region21: #{conv_down_forward.1} parent=1 // pred_fallthru
      _
    // Predicated region
    $region22: #{conv_down_forward.1} parent=1 // pred_check
      _
    $region23: #{conv_down_forward.1} parent=1 // pred_check_branch
      %43 = sbr.rel (0) target = $region25
    $region24: #{conv_down_forward.1} parent=1 // pred_region
      %44 = dma.done [#allocation6], 9216
    $region25: #{conv_down_forward.1} parent=1 // pred_fallthru
      _
    // Predicated region
    $region26: #{conv_down_forward.1} parent=1 // pred_check
      _
    $region27: #{conv_down_forward.1} parent=1 // pred_check_branch
      %46 = sbr.rel (0) target = $region29
    $region28: #{conv_down_forward.1} parent=1 // pred_region
      %47 = dma.done [#allocation8], 9216
    $region29: #{conv_down_forward.1} parent=1 // pred_fallthru
      _
    %vm49 = vcmask 519168
    %50 = vst.msk [vmem:[#allocation2] sm:$0xf] %vm49, 0
    %51 = vst [vmem:[#allocation3] sm:$0xf] 0
    %52 = vst [vmem:[#allocation4] sm:$0xff] 0
    %53 = vst [vmem:[#allocation4 + $0x8] sm:$0xf] 0
    %54 = vst.msk [vmem:[#allocation2 + $0xc] sm:$0xf] %vm49, 0
    %55 = vst [vmem:[#allocation3 + $0xc] sm:$0xf] 0
    %56 = vst [vmem:[#allocation4 + $0x24] sm:$0xff] 0
    %57 = vst [vmem:[#allocation4 + $0x2c] sm:$0xf] 0
    %58 = vst.msk [vmem:[#allocation2 + $0x18] sm:$0xf] %vm49, 0
    %59 = vst [vmem:[#allocation3 + $0x18] sm:$0xf] 0
    %60 = vst [vmem:[#allocation4 + $0x48] sm:$0xff] 0
    %61 = vst [vmem:[#allocation4 + $0x50] sm:$0xf] 0
    %v62 = vld [vmem:[%s0] sm:$0xff]
    %v63 = vld [vmem:[%s0 + $0x8] sm:$0xff]
    %v64 = vpack.c.bf16 %v63, %v62
    %v66 = vunpack.c.l.b16 %v64
    %v67 = vunpack.c.h.b16 %v64
    %v68 = vpack.c.b16 %v66, %v66
    %v69 = vpack.c.b16 %v67, %v67
    %72 = vst.msk [vmem:[#allocation2 + $0x4] sm:$0xf] %vm49, %v68
    %73 = vst.msk [vmem:[#allocation2 + $0x8] sm:$0xf] %vm49, %v69
    %s74 = scalar_lea.vmem %s0, 16
    %v75 = vld [vmem:[%s74] sm:$0xff]
    %v76 = vld [vmem:[%s74 + $0x8] sm:$0xff]
    %v77 = vpack.c.bf16 %v76, %v75
    %v79 = vunpack.c.l.b16 %v77
    %v80 = vunpack.c.h.b16 %v77
    %v81 = vpack.c.b16 %v79, %v79
    %v82 = vpack.c.b16 %v80, %v80
    %85 = vst.msk [vmem:[#allocation2 + $0x10] sm:$0xf] %vm49, %v81
    %86 = vst.msk [vmem:[#allocation2 + $0x14] sm:$0xf] %vm49, %v82
    %v87 = vld [vmem:[#allocation2] sm:$0x8]
    %v88 = vld [vmem:[#allocation2 + $0x4] sm:$0xf]
    %v89 = vld [vmem:[#allocation2 + $0x8] sm:$0xf]
    %v90 = vld [vmem:[#allocation2 + $0xc] sm:$0xf]
    %v91 = vld [vmem:[#allocation2 + $0x10] sm:$0xf]
    %v92 = vld [vmem:[#allocation2 + $0x14] sm:$0xf]
    %v93 = vld [vmem:[%s1] sm:$0xf]
    %v94 = vld [vmem:[%s1 + $0x4] sm:$0xf]
    %v95 = vld [vmem:[%s1 + $0x8] sm:$0xf]
    %v96 = vld [vmem:[%s1 + $0xc] sm:$0xf]
    %v97 = vld [vmem:[%s1 + $0x10] sm:$0xf]
    %v98 = vld [vmem:[%s1 + $0x14] sm:$0xf]
    %v99 = vld [vmem:[%s1 + $0x18] sm:$0xf]
    %v100 = vld [vmem:[%s1 + $0x1c] sm:$0xf]
    %s101 = scalar_lea.vmem %s1, 32
    %v102 = vld [vmem:[%s101] sm:$0xf]
    %v103 = vld [vmem:[%s101 + $0x4] sm:$0xf]
    %v104 = vld [vmem:[%s101 + $0x8] sm:$0xf]
    %v105 = vld [vmem:[%s101 + $0xc] sm:$0xf]
    %v106 = vld [vmem:[%s101 + $0x10] sm:$0xf]
    %v107 = vld [vmem:[%s101 + $0x14] sm:$0xf]
    %v108 = vld [vmem:[%s101 + $0x18] sm:$0xf]
    %v109 = vld [vmem:[%s101 + $0x1c] sm:$0xf]
    %v115 = vunpack.c.l.b16 %v88
    %v116 = vunpack.c.l.b16 %v89
    %v117 = vunpack.c.l.b16 %v90
    %v118 = vunpack.c.l.b16 %v91
    %v119 = vunpack.c.l.b16 %v92
    %v120 = vpack.c.b16 %v116, %v115
    %v121 = vpack.c.b16 %v118, %v117
    %v122 = vpack.c.b16 %v119, %v119
    %v131 = vunpack.c.l.b16 %v102
    %v132 = vunpack.c.l.b16 %v103
    %v133 = vunpack.c.l.b16 %v104
    %v134 = vunpack.c.l.b16 %v105
    %v135 = vunpack.c.l.b16 %v106
    %v136 = vunpack.c.l.b16 %v107
    %v137 = vunpack.c.l.b16 %v108
    %v138 = vunpack.c.l.b16 %v109
    %v139 = vpack.c.b16 %v132, %v131
    %v140 = vpack.c.b16 %v134, %v133
    %v141 = vpack.c.b16 %v136, %v135
    %v142 = vpack.c.b16 %v138, %v137
    %vm147 = vcmask 523264
    %v149 = vsel %vm147, %v120, 0
    %v152 = vsel %vm147, %v121, 0
    %v155 = vsel %vm147, %v122, 0
    %157 = vmatprep.subr.bf16.mxu0 0
    %158 = vmatpush1.bf16.msra.mxu0 %v139
    %159 = vmatprep.subr.bf16.mxu0 0
    %160 = vmatpush1.bf16.msra.mxu0 %v140
    %161 = vmatprep.subr.bf16.mxu0 0
    %162 = vmatpush1.bf16.msra.mxu0 %v141
    %163 = vmatprep.subr.bf16.mxu0 0
    %164 = vmatpush1.bf16.msra.mxu0 %v142
    %165 = vmatprep.subr.bf16.mxu0 0
    %166 = vmatpush1.bf16.msra.mxu0 0
    %167 = vmatprep.subr.bf16.mxu0 0
    %168 = vmatpush1.bf16.msra.mxu0 0
    %169 = vmatprep.subr.bf16.mxu0 0
    %170 = vmatpush1.bf16.msra.mxu0 0
    %171 = vmatprep.subr.bf16.mxu0 0
    %172 = vmatpush1.bf16.msra.mxu0 0
    %173 = vmatprep.subr.bf16.mxu0 0
    %174 = vmatpush1.bf16.msra.mxu0 0
    %175 = vmatprep.subr.bf16.mxu0 0
    %176 = vmatpush1.bf16.msra.mxu0 0
    %177 = vmatprep.subr.bf16.mxu0 0
    %178 = vmatpush1.bf16.msra.mxu0 0
    %179 = vmatprep.subr.bf16.mxu0 0
    %180 = vmatpush1.bf16.msra.mxu0 0
    %181 = vmatprep.subr.bf16.mxu0 0
    %182 = vmatpush1.bf16.msra.mxu0 0
    %183 = vmatprep.subr.bf16.mxu0 0
    %184 = vmatpush1.bf16.msra.mxu0 0
    %185 = vmatprep.subr.bf16.mxu0 0
    %186 = vmatpush1.bf16.msra.mxu0 0
    %187 = vmatprep.subr.bf16.mxu0 0
    %188 = vmatpush1.bf16.msra.mxu0 0
    %189 = vmatprep.mubr.bf16.mxu0 0
    %190 = vmatmul.mubr.bf16.gmra.mrb[0].mxu0 %v149
    %v191 = vpop.f32.mrb[0].mxu0
    %v192 = vadd.f32 0.0, %v191
    %v193 = vpop.f32.mrb[0].mxu0
    %v194 = vpop.f32.mrb[0].mxu0
    %v195 = vadd.f32 0.0, %v194
    %v196 = vpop.f32.mrb[0].mxu0
    %197 = vmatprep.mubr.bf16.mxu0 0
    %198 = vmatmul.mubr.bf16.gmra.mrb[0].mxu0 %v152
    %v199 = vpop.f32.mrb[0].mxu0
    %v200 = vadd.f32 0.0, %v199
    %v201 = vpop.f32.mrb[0].mxu0
    %v202 = vpop.f32.mrb[0].mxu0
    %v203 = vadd.f32 0.0, %v202
    %v204 = vpop.f32.mrb[0].mxu0
    %205 = vmatprep.mubr.bf16.mxu0 0
    %206 = vmatmul.mubr.bf16.gmra.mrb[0].mxu0 %v155
    %v207 = vpop.f32.mrb[0].mxu0
    %v208 = vadd.f32 0.0, %v207
    %v209 = vpop.f32.mrb[0].mxu0
    %v210 = vpop.f32.mrb[0].mxu0
    %v211 = vpop.f32.mrb[0].mxu0
    %212 = vdwg.mxu0
    %v214 = vunpack.c.l.b16 %v87
    %v215 = vpack.c.b16 %v115, %v214
    %v216 = vpack.c.b16 %v117, %v116
    %v217 = vpack.c.b16 %v119, %v118
    %vm218 = vsmask.f32 4352
    %v220 = vshrl.u32 %v215, 16
    %v222 = vrot.slane %v220, 3
    %v223 = vshll.u32 %v215, 16
    %v225 = vrot.slane %v223, 4
    %v226 = vor.u32 %v222, %v225
    %v228 = vshrl.u32 %v216, 16
    %v230 = vrot.slane %v228, 3
    %v231 = vshll.u32 %v216, 16
    %v233 = vrot.slane %v231, 4
    %v234 = vor.u32 %v230, %v233
    %v235 = vsel %vm218, %v226, %v234
    %v237 = vshrl.u32 %v217, 16
    %v239 = vrot.slane %v237, 3
    %v240 = vshll.u32 %v217, 16
    %v242 = vrot.slane %v240, 4
    %v243 = vor.u32 %v239, %v242
    %v244 = vsel %vm218, %v234, %v243
    %v253 = vunpack.c.l.b16 %v93
    %v254 = vunpack.c.l.b16 %v94
    %v255 = vunpack.c.l.b16 %v95
    %v256 = vunpack.c.l.b16 %v96
    %v257 = vunpack.c.l.b16 %v97
    %v258 = vunpack.c.l.b16 %v98
    %v259 = vunpack.c.l.b16 %v99
    %v260 = vunpack.c.l.b16 %v100
    %v261 = vpack.c.b16 %v254, %v253
    %v262 = vpack.c.b16 %v256, %v255
    %v263 = vpack.c.b16 %v258, %v257
    %v264 = vpack.c.b16 %v260, %v259
    %v270 = vsel %vm147, %v235, 0
    %v273 = vsel %vm147, %v244, 0
    %v276 = vsel %vm147, %v243, 0
    %278 = vmatprep.subr.bf16.mxu0 0
    %279 = vmatpush1.bf16.msra.mxu0 %v261
    %280 = vmatprep.subr.bf16.mxu0 0
    %281 = vmatpush1.bf16.msra.mxu0 %v262
    %282 = vmatprep.subr.bf16.mxu0 0
    %283 = vmatpush1.bf16.msra.mxu0 %v263
    %284 = vmatprep.subr.bf16.mxu0 0
    %285 = vmatpush1.bf16.msra.mxu0 %v264
    %286 = vmatprep.subr.bf16.mxu0 0
    %287 = vmatpush1.bf16.msra.mxu0 0
    %288 = vmatprep.subr.bf16.mxu0 0
    %289 = vmatpush1.bf16.msra.mxu0 0
    %290 = vmatprep.subr.bf16.mxu0 0
    %291 = vmatpush1.bf16.msra.mxu0 0
    %292 = vmatprep.subr.bf16.mxu0 0
    %293 = vmatpush1.bf16.msra.mxu0 0
    %294 = vmatprep.subr.bf16.mxu0 0
    %295 = vmatpush1.bf16.msra.mxu0 0
    %296 = vmatprep.subr.bf16.mxu0 0
    %297 = vmatpush1.bf16.msra.mxu0 0
    %298 = vmatprep.subr.bf16.mxu0 0
    %299 = vmatpush1.bf16.msra.mxu0 0
    %300 = vmatprep.subr.bf16.mxu0 0
    %301 = vmatpush1.bf16.msra.mxu0 0
    %302 = vmatprep.subr.bf16.mxu0 0
    %303 = vmatpush1.bf16.msra.mxu0 0
    %304 = vmatprep.subr.bf16.mxu0 0
    %305 = vmatpush1.bf16.msra.mxu0 0
    %306 = vmatprep.subr.bf16.mxu0 0
    %307 = vmatpush1.bf16.msra.mxu0 0
    %308 = vmatprep.subr.bf16.mxu0 0
    %309 = vmatpush1.bf16.msra.mxu0 0
    %310 = vmatprep.mubr.bf16.mxu0 0
    %311 = vmatmul.mubr.bf16.gmra.mrb[0].mxu0 %v270
    %v312 = vpop.f32.mrb[0].mxu0
    %v313 = vadd.f32 %v192, %v312
    %v314 = vpop.f32.mrb[0].mxu0
    %v315 = vpop.f32.mrb[0].mxu0
    %v316 = vadd.f32 %v195, %v315
    %v317 = vpop.f32.mrb[0].mxu0
    %318 = vmatprep.mubr.bf16.mxu0 0
    %319 = vmatmul.mubr.bf16.gmra.mrb[0].mxu0 %v273
    %v320 = vpop.f32.mrb[0].mxu0
    %v321 = vadd.f32 %v200, %v320
    %v322 = vpop.f32.mrb[0].mxu0
    %v323 = vpop.f32.mrb[0].mxu0
    %v324 = vadd.f32 %v203, %v323
    %v325 = vpop.f32.mrb[0].mxu0
    %326 = vmatprep.mubr.bf16.mxu0 0
    %327 = vmatmul.mubr.bf16.gmra.mrb[0].mxu0 %v276
    %v328 = vpop.f32.mrb[0].mxu0
    %v329 = vadd.f32 %v208, %v328
    %v330 = vpop.f32.mrb[0].mxu0
    %v331 = vpop.f32.mrb[0].mxu0
    %v332 = vpop.f32.mrb[0].mxu0
    %333 = vdwg.mxu0
    %v334 = vld [vmem:[#allocation2 + $0x4] sm:$0xf]
    %v335 = vld [vmem:[#allocation2 + $0x8] sm:$0xf]
    %v336 = vld [vmem:[#allocation2 + $0xc] sm:$0xf]
    %v337 = vld [vmem:[#allocation2 + $0x10] sm:$0xf]
    %v338 = vld [vmem:[#allocation2 + $0x14] sm:$0xf]
    %v339 = vld [vmem:[#allocation2 + $0x18] sm:$0x1]
    %s340 = scalar_lea.vmem %s1, 64
    %v341 = vld [vmem:[%s340] sm:$0xf]
    %v342 = vld [vmem:[%s340 + $0x4] sm:$0xf]
    %v343 = vld [vmem:[%s340 + $0x8] sm:$0xf]
    %v344 = vld [vmem:[%s340 + $0xc] sm:$0xf]
    %v345 = vld [vmem:[%s340 + $0x10] sm:$0xf]
    %v346 = vld [vmem:[%s340 + $0x14] sm:$0xf]
    %v347 = vld [vmem:[%s340 + $0x18] sm:$0xf]
    %v348 = vld [vmem:[%s340 + $0x1c] sm:$0xf]
    %v355 = vunpack.c.l.b16 %v334
    %v356 = vunpack.c.l.b16 %v335
    %v357 = vunpack.c.l.b16 %v336
    %v358 = vunpack.c.l.b16 %v337
    %v359 = vunpack.c.l.b16 %v338
    %v360 = vunpack.c.l.b16 %v339
    %v361 = vpack.c.b16 %v356, %v355
    %v362 = vpack.c.b16 %v358, %v357
    %v363 = vpack.c.b16 %v360, %v359
    %vm364 = vsmask.f32 7424
    %v366 = vshrl.u32 %v361, 16
    %v368 = vshll.u32 %v361, 16
    %v370 = vrot.slane %v368, 1
    %v371 = vor.u32 %v366, %v370
    %v373 = vshll.u32 %v362, 16
    %v375 = vrot.slane %v373, 1
    %v376 = vsel %vm364, %v371, %v375
    %v377 = vshrl.u32 %v362, 16
    %v379 = vor.u32 %v377, %v375
    %v381 = vshll.u32 %v363, 16
    %v383 = vrot.slane %v381, 1
    %v384 = vsel %vm364, %v379, %v383
    %v385 = vshrl.u32 %v363, 16
    %v387 = vor.u32 %v385, %v383
    %v396 = vunpack.c.l.b16 %v341
    %v397 = vunpack.c.l.b16 %v342
    %v398 = vunpack.c.l.b16 %v343
    %v399 = vunpack.c.l.b16 %v344
    %v400 = vunpack.c.l.b16 %v345
    %v401 = vunpack.c.l.b16 %v346
    %v402 = vunpack.c.l.b16 %v347
    %v403 = vunpack.c.l.b16 %v348
    %v404 = vpack.c.b16 %v397, %v396
    %v405 = vpack.c.b16 %v399, %v398
    %v406 = vpack.c.b16 %v401, %v400
    %v407 = vpack.c.b16 %v403, %v402
    %v413 = vsel %vm147, %v376, 0
    %v416 = vsel %vm147, %v384, 0
    %v419 = vsel %vm147, %v387, 0
    %421 = vmatprep.subr.bf16.mxu0 0
    %422 = vmatpush1.bf16.msra.mxu0 %v404
    %423 = vmatprep.subr.bf16.mxu0 0
    %424 = vmatpush1.bf16.msra.mxu0 %v405
    %425 = vmatprep.subr.bf16.mxu0 0
    %426 = vmatpush1.bf16.msra.mxu0 %v406
    %427 = vmatprep.subr.bf16.mxu0 0
    %428 = vmatpush1.bf16.msra.mxu0 %v407
    %429 = vmatprep.subr.bf16.mxu0 0
    %430 = vmatpush1.bf16.msra.mxu0 0
    %431 = vmatprep.subr.bf16.mxu0 0
    %432 = vmatpush1.bf16.msra.mxu0 0
    %433 = vmatprep.subr.bf16.mxu0 0
    %434 = vmatpush1.bf16.msra.mxu0 0
    %435 = vmatprep.subr.bf16.mxu0 0
    %436 = vmatpush1.bf16.msra.mxu0 0
    %437 = vmatprep.subr.bf16.mxu0 0
    %438 = vmatpush1.bf16.msra.mxu0 0
    %439 = vmatprep.subr.bf16.mxu0 0
    %440 = vmatpush1.bf16.msra.mxu0 0
    %441 = vmatprep.subr.bf16.mxu0 0
    %442 = vmatpush1.bf16.msra.mxu0 0
    %443 = vmatprep.subr.bf16.mxu0 0
    %444 = vmatpush1.bf16.msra.mxu0 0
    %445 = vmatprep.subr.bf16.mxu0 0
    %446 = vmatpush1.bf16.msra.mxu0 0
    %447 = vmatprep.subr.bf16.mxu0 0
    %448 = vmatpush1.bf16.msra.mxu0 0
    %449 = vmatprep.subr.bf16.mxu0 0
    %450 = vmatpush1.bf16.msra.mxu0 0
    %451 = vmatprep.subr.bf16.mxu0 0
    %452 = vmatpush1.bf16.msra.mxu0 0
    %453 = vmatprep.mubr.bf16.mxu0 0
    %454 = vmatmul.mubr.bf16.gmra.mrb[0].mxu0 %v413
    %v455 = vpop.f32.mrb[0].mxu0
    %v456 = vadd.f32 0.0, %v455
    %v457 = vpop.f32.mrb[0].mxu0
    %v458 = vpop.f32.mrb[0].mxu0
    %v459 = vadd.f32 0.0, %v458
    %v460 = vpop.f32.mrb[0].mxu0
    %461 = vmatprep.mubr.bf16.mxu0 0
    %462 = vmatmul.mubr.bf16.gmra.mrb[0].mxu0 %v416
    %v463 = vpop.f32.mrb[0].mxu0
    %v464 = vadd.f32 0.0, %v463
    %v465 = vpop.f32.mrb[0].mxu0
    %v466 = vpop.f32.mrb[0].mxu0
    %v467 = vadd.f32 0.0, %v466
    %v468 = vpop.f32.mrb[0].mxu0
    %469 = vmatprep.mubr.bf16.mxu0 0
    %470 = vmatmul.mubr.bf16.gmra.mrb[0].mxu0 %v419
    %v471 = vpop.f32.mrb[0].mxu0
    %v472 = vadd.f32 0.0, %v471
    %v473 = vpop.f32.mrb[0].mxu0
    %v474 = vpop.f32.mrb[0].mxu0
    %v475 = vpop.f32.mrb[0].mxu0
    %476 = vdwg.mxu0
    %v477 = vadd.f32 %v313, %v456
    %v478 = vadd.f32 %v316, %v459
    %v479 = vadd.f32 %v321, %v464
    %v480 = vadd.f32 %v324, %v467
    %v481 = vadd.f32 %v329, %v472
    %v482 = vld [vmem:[%s4] sm:$0x1]
    %v483 = vlaneseq
    %v484 = vshrl.u32 %v483, 7
    %v485 = vsub.s32 0, %v484
    %v486 = vrot.slane %v482, %v485
    %v487 = vmul.f32 %v477, %v486
    %v488 = vmul.f32 %v478, %v486
    %v489 = vmul.f32 %v479, %v486
    %v490 = vmul.f32 %v480, %v486
    %v491 = vmul.f32 %v481, %v486
    %v492 = vld [vmem:[%s4 + $0x1] sm:$0x1]
    %v493 = vlaneseq
    %v494 = vshrl.u32 %v493, 7
    %v495 = vsub.s32 0, %v494
    %v496 = vrot.slane %v492, %v495
    %v497 = vadd.f32 %v487, %v496
    %v498 = vadd.f32 %v488, %v496
    %v499 = vadd.f32 %v489, %v496
    %v500 = vadd.f32 %v490, %v496
    %v501 = vadd.f32 %v491, %v496
    %v502 = vmul.f32 %v497, 0.2
    %v503 = vmul.f32 %v498, 0.2
    %v504 = vmul.f32 %v499, 0.2
    %v505 = vmul.f32 %v500, 0.2
    %v506 = vmul.f32 %v501, 0.2
    %v507 = vmax.f32 %v497, %v502
    %v508 = vmax.f32 %v498, %v503
    %v509 = vmax.f32 %v499, %v504
    %v510 = vmax.f32 %v500, %v505
    %v511 = vmax.f32 %v501, %v506
    %v512 = vpack.c.bf16 %v508, %v507
    %v513 = vpack.c.bf16 %v510, %v509
    %v514 = vpack.c.bf16 %v511, %v511
    %v516 = vunpack.c.l.b16 %v512
    %v517 = vunpack.c.h.b16 %v512
    %v518 = vpack.c.b16 %v516, %v516
    %v519 = vpack.c.b16 %v517, %v517
    %522 = vst [vmem:[#allocation3 + $0x4] sm:$0xf] %v518
    %523 = vst [vmem:[#allocation3 + $0x8] sm:$0xf] %v519
    %v526 = vunpack.c.h.b16 %v513
    %v527 = vunpack.c.l.b16 %v514
    %v528 = vpack.c.b16 %v526, %v526
    %v529 = vpack.c.b16 %v527, %v527
    %532 = vst [vmem:[#allocation3 + $0x10] sm:$0xf] %v528
    %533 = vst [vmem:[#allocation3 + $0x14] sm:$0xf] %v529
    %v534 = vld [vmem:[#allocation5] sm:$0xf]
    %v535 = vld [vmem:[#allocation5 + $0x4] sm:$0xf]
    %v536 = vld [vmem:[#allocation5 + $0x8] sm:$0xf]
    %v537 = vld [vmem:[#allocation5 + $0xc] sm:$0xf]
    %v538 = vld [vmem:[#allocation5 + $0x10] sm:$0xf]
    %v539 = vld [vmem:[#allocation5 + $0x14] sm:$0xf]
    %v540 = vld [vmem:[#allocation5 + $0x18] sm:$0xf]
    %v541 = vld [vmem:[#allocation5 + $0x1c] sm:$0xf]
    %v542 = vld [vmem:[#allocation5 + $0x20] sm:$0xf]
    %v543 = vld [vmem:[#allocation5 + $0x24] sm:$0xf]
    %v544 = vld [vmem:[#allocation5 + $0x28] sm:$0xf]
    %v545 = vld [vmem:[#allocation5 + $0x2c] sm:$0xf]
    %v546 = vld [vmem:[#allocation5 + $0x30] sm:$0xf]
    %v547 = vld [vmem:[#allocation5 + $0x34] sm:$0xf]
    %v548 = vld [vmem:[#allocation5 + $0x38] sm:$0xf]
    %v549 = vld [vmem:[#allocation5 + $0x3c] sm:$0xf]
    %v566 = vunpack.c.l.b16 %v534
    %v567 = vunpack.c.l.b16 %v535
    %v568 = vunpack.c.l.b16 %v536
    %v569 = vunpack.c.l.b16 %v537
    %v570 = vunpack.c.l.b16 %v538
    %v571 = vunpack.c.l.b16 %v539
    %v572 = vunpack.c.l.b16 %v540
    %v573 = vunpack.c.l.b16 %v541
    %v574 = vunpack.c.l.b16 %v542
    %v575 = vunpack.c.l.b16 %v543
    %v576 = vunpack.c.l.b16 %v544
    %v577 = vunpack.c.l.b16 %v545
    %v578 = vunpack.c.l.b16 %v546
    %v579 = vunpack.c.l.b16 %v547
    %v580 = vunpack.c.l.b16 %v548
    %v581 = vunpack.c.l.b16 %v549
    %v582 = vpack.c.b16 %v567, %v566
    %v583 = vpack.c.b16 %v569, %v568
    %v584 = vpack.c.b16 %v571, %v570
    %v585 = vpack.c.b16 %v573, %v572
    %v586 = vpack.c.b16 %v575, %v574
    %v587 = vpack.c.b16 %v577, %v576
    %v588 = vpack.c.b16 %v579, %v578
    %v589 = vpack.c.b16 %v581, %v580
    %598 = vmatprep.subr.bf16.mxu0 0
    %599 = vmatpush1.bf16.msra.mxu0 %v582
    %600 = vmatprep.subr.bf16.mxu0 0
    %601 = vmatpush1.bf16.msra.mxu0 %v583
    %602 = vmatprep.subr.bf16.mxu0 0
    %603 = vmatpush1.bf16.msra.mxu0 %v584
    %604 = vmatprep.subr.bf16.mxu0 0
    %605 = vmatpush1.bf16.msra.mxu0 %v585
    %606 = vmatprep.subr.bf16.mxu0 0
    %607 = vmatpush1.bf16.msra.mxu0 %v586
    %608 = vmatprep.subr.bf16.mxu0 0
    %609 = vmatpush1.bf16.msra.mxu0 %v587
    %610 = vmatprep.subr.bf16.mxu0 0
    %611 = vmatpush1.bf16.msra.mxu0 %v588
    %612 = vmatprep.subr.bf16.mxu0 0
    %613 = vmatpush1.bf16.msra.mxu0 %v589
    %614 = vmatprep.subr.bf16.mxu0 0
    %615 = vmatpush1.bf16.msra.mxu0 0
    %616 = vmatprep.subr.bf16.mxu0 0
    %617 = vmatpush1.bf16.msra.mxu0 0
    %618 = vmatprep.subr.bf16.mxu0 0
    %619 = vmatpush1.bf16.msra.mxu0 0
    %620 = vmatprep.subr.bf16.mxu0 0
    %621 = vmatpush1.bf16.msra.mxu0 0
    %622 = vmatprep.subr.bf16.mxu0 0
    %623 = vmatpush1.bf16.msra.mxu0 0
    %624 = vmatprep.subr.bf16.mxu0 0
    %625 = vmatpush1.bf16.msra.mxu0 0
    %626 = vmatprep.subr.bf16.mxu0 0
    %627 = vmatpush1.bf16.msra.mxu0 0
    %628 = vmatprep.subr.bf16.mxu0 0
    %629 = vmatpush1.bf16.msra.mxu0 0
    %630 = vmatprep.mubr.bf16.mxu0 0
    %631 = vmatmul.mubr.bf16.gmra.mrb[0].mxu0 %v512
    %v632 = vpop.f32.mrb[0].mxu0
    %v633 = vadd.f32 0.0, %v632
    %v634 = vpop.f32.mrb[0].mxu0
    %v635 = vpop.f32.mrb[0].mxu0
    %v636 = vadd.f32 0.0, %v635
    %v637 = vpop.f32.mrb[0].mxu0
    %638 = vmatprep.mubr.bf16.mxu0 0
    %639 = vmatmul.mubr.bf16.gmra.mrb[0].mxu0 %v513
    %v640 = vpop.f32.mrb[0].mxu0
    %v641 = vpop.f32.mrb[0].mxu0
    %v642 = vpop.f32.mrb[0].mxu0
    %v643 = vadd.f32 0.0, %v642
    %v644 = vpop.f32.mrb[0].mxu0
    %645 = vmatprep.mubr.bf16.mxu0 0
    %646 = vmatmul.mubr.bf16.gmra.mrb[0].mxu0 %v514
    %v647 = vpop.f32.mrb[0].mxu0
    %v648 = vadd.f32 0.0, %v647
    %v649 = vpop.f32.mrb[0].mxu0
    %v650 = vpop.f32.mrb[0].mxu0
    %v651 = vpop.f32.mrb[0].mxu0
    %652 = vdwg.mxu0
    %v653 = vld [vmem:[%s4 + $0x2] sm:$0x1]
    %v654 = vlaneseq
    %v655 = vshrl.u32 %v654, 7
    %v656 = vsub.s32 0, %v655
    %v657 = vrot.slane %v653, %v656
    %v658 = vmul.f32 %v633, %v657
    %v659 = vmul.f32 %v636, %v657
    %v660 = vmul.f32 %v643, %v657
    %v661 = vmul.f32 %v648, %v657
    %v662 = vld [vmem:[%s4 + $0x3] sm:$0x1]
    %v663 = vlaneseq
    %v664 = vshrl.u32 %v663, 7
    %v665 = vsub.s32 0, %v664
    %v666 = vrot.slane %v662, %v665
    %v667 = vadd.f32 %v658, %v666
    %v668 = vadd.f32 %v659, %v666
    %v669 = vadd.f32 %v660, %v666
    %v670 = vadd.f32 %v661, %v666
    %v671 = vmul.f32 %v667, 0.2
    %v672 = vmul.f32 %v668, 0.2
    %v673 = vmul.f32 %v669, 0.2
    %v674 = vmul.f32 %v670, 0.2
    %v675 = vmax.f32 %v667, %v671
    %v676 = vmax.f32 %v668, %v672
    %v677 = vmax.f32 %v669, %v673
    %v678 = vmax.f32 %v670, %v674
    %v679 = vld [vmem:[#allocation3] sm:$0x8]
    %v680 = vld [vmem:[#allocation3 + $0x4] sm:$0xf]
    %v681 = vld [vmem:[#allocation3 + $0x8] sm:$0xf]
    %v682 = vld [vmem:[#allocation3 + $0xc] sm:$0xf]
    %v683 = vld [vmem:[#allocation3 + $0x10] sm:$0xf]
    %v684 = vld [vmem:[#allocation3 + $0x14] sm:$0xf]
    %s685 = scalar_lea.vmem [#allocation5], 64
    %v686 = vld [vmem:[%s685] sm:$0xf]
    %v687 = vld [vmem:[%s685 + $0x4] sm:$0xf]
    %v688 = vld [vmem:[%s685 + $0x8] sm:$0xf]
    %v689 = vld [vmem:[%s685 + $0xc] sm:$0xf]
    %v690 = vld [vmem:[%s685 + $0x10] sm:$0xf]
    %v691 = vld [vmem:[%s685 + $0x14] sm:$0xf]
    %v692 = vld [vmem:[%s685 + $0x18] sm:$0xf]
    %v693 = vld [vmem:[%s685 + $0x1c] sm:$0xf]
    %v694 = vld [vmem:[%s685 + $0x20] sm:$0xf]
    %v695 = vld [vmem:[%s685 + $0x24] sm:$0xf]
    %v696 = vld [vmem:[%s685 + $0x28] sm:$0xf]
    %v697 = vld [vmem:[%s685 + $0x2c] sm:$0xf]
    %v698 = vld [vmem:[%s685 + $0x30] sm:$0xf]
    %v699 = vld [vmem:[%s685 + $0x34] sm:$0xf]
    %v700 = vld [vmem:[%s685 + $0x38] sm:$0xf]
    %v701 = vld [vmem:[%s685 + $0x3c] sm:$0xf]
    %s702 = scalar_lea.vmem [#allocation5], 128
    %v703 = vld [vmem:[%s702] sm:$0xf]
    %v704 = vld [vmem:[%s702 + $0x4] sm:$0xf]
    %v705 = vld [vmem:[%s702 + $0x8] sm:$0xf]
    %v706 = vld [vmem:[%s702 + $0xc] sm:$0xf]
    %v707 = vld [vmem:[%s702 + $0x10] sm:$0xf]
    %v708 = vld [vmem:[%s702 + $0x14] sm:$0xf]
    %v709 = vld [vmem:[%s702 + $0x18] sm:$0xf]
    %v710 = vld [vmem:[%s702 + $0x1c] sm:$0xf]
    %v711 = vld [vmem:[%s702 + $0x20] sm:$0xf]
    %v712 = vld [vmem:[%s702 + $0x24] sm:$0xf]
    %v713 = vld [vmem:[%s702 + $0x28] sm:$0xf]
    %v714 = vld [vmem:[%s702 + $0x2c] sm:$0xf]
    %v715 = vld [vmem:[%s702 + $0x30] sm:$0xf]
    %v716 = vld [vmem:[%s702 + $0x34] sm:$0xf]
    %v717 = vld [vmem:[%s702 + $0x38] sm:$0xf]
    %v718 = vld [vmem:[%s702 + $0x3c] sm:$0xf]
    %v724 = vunpack.c.l.b16 %v680
    %v725 = vunpack.c.l.b16 %v681
    %v726 = vunpack.c.l.b16 %v682
    %v727 = vunpack.c.l.b16 %v683
    %v728 = vunpack.c.l.b16 %v684
    %v729 = vpack.c.b16 %v725, %v724
    %v730 = vpack.c.b16 %v727, %v726
    %v731 = vpack.c.b16 %v728, %v728
    %v751 = vunpack.c.l.b16 %v703
    %v752 = vunpack.c.l.b16 %v704
    %v753 = vunpack.c.l.b16 %v705
    %v754 = vunpack.c.l.b16 %v706
    %v755 = vunpack.c.l.b16 %v707
    %v756 = vunpack.c.l.b16 %v708
    %v757 = vunpack.c.l.b16 %v709
    %v758 = vunpack.c.l.b16 %v710
    %v759 = vunpack.c.l.b16 %v711
    %v760 = vunpack.c.l.b16 %v712
    %v761 = vunpack.c.l.b16 %v713
    %v762 = vunpack.c.l.b16 %v714
    %v763 = vunpack.c.l.b16 %v715
    %v764 = vunpack.c.l.b16 %v716
    %v765 = vunpack.c.l.b16 %v717
    %v766 = vunpack.c.l.b16 %v718
    %v767 = vpack.c.b16 %v752, %v751
    %v768 = vpack.c.b16 %v754, %v753
    %v769 = vpack.c.b16 %v756, %v755
    %v770 = vpack.c.b16 %v758, %v757
    %v771 = vpack.c.b16 %v760, %v759
    %v772 = vpack.c.b16 %v762, %v761
    %v773 = vpack.c.b16 %v764, %v763
    %v774 = vpack.c.b16 %v766, %v765
    %783 = vmatprep.subr.bf16.mxu0 0
    %784 = vmatpush1.bf16.msra.mxu0 %v767
    %785 = vmatprep.subr.bf16.mxu0 0
    %786 = vmatpush1.bf16.msra.mxu0 %v768
    %787 = vmatprep.subr.bf16.mxu0 0
    %788 = vmatpush1.bf16.msra.mxu0 %v769
    %789 = vmatprep.subr.bf16.mxu0 0
    %790 = vmatpush1.bf16.msra.mxu0 %v770
    %791 = vmatprep.subr.bf16.mxu0 0
    %792 = vmatpush1.bf16.msra.mxu0 %v771
    %793 = vmatprep.subr.bf16.mxu0 0
    %794 = vmatpush1.bf16.msra.mxu0 %v772
    %795 = vmatprep.subr.bf16.mxu0 0
    %796 = vmatpush1.bf16.msra.mxu0 %v773
    %797 = vmatprep.subr.bf16.mxu0 0
    %798 = vmatpush1.bf16.msra.mxu0 %v774
    %799 = vmatprep.subr.bf16.mxu0 0
    %800 = vmatpush1.bf16.msra.mxu0 0
    %801 = vmatprep.subr.bf16.mxu0 0
    %802 = vmatpush1.bf16.msra.mxu0 0
    %803 = vmatprep.subr.bf16.mxu0 0
    %804 = vmatpush1.bf16.msra.mxu0 0
    %805 = vmatprep.subr.bf16.mxu0 0
    %806 = vmatpush1.bf16.msra.mxu0 0
    %807 = vmatprep.subr.bf16.mxu0 0
    %808 = vmatpush1.bf16.msra.mxu0 0
    %809 = vmatprep.subr.bf16.mxu0 0
    %810 = vmatpush1.bf16.msra.mxu0 0
    %811 = vmatprep.subr.bf16.mxu0 0
    %812 = vmatpush1.bf16.msra.mxu0 0
    %813 = vmatprep.subr.bf16.mxu0 0
    %814 = vmatpush1.bf16.msra.mxu0 0
    %815 = vmatprep.mubr.bf16.mxu0 0
    %816 = vmatmul.mubr.bf16.gmra.mrb[0].mxu0 %v729
    %v817 = vpop.f32.mrb[0].mxu0
    %v818 = vadd.f32 0.0, %v817
    %v819 = vpop.f32.mrb[0].mxu0
    %v820 = vpop.f32.mrb[0].mxu0
    %v821 = vadd.f32 0.0, %v820
    %v822 = vpop.f32.mrb[0].mxu0
    %823 = vmatprep.mubr.bf16.mxu0 0
    %824 = vmatmul.mubr.bf16.gmra.mrb[0].mxu0 %v730
    %v825 = vpop.f32.mrb[0].mxu0
    %v826 = vpop.f32.mrb[0].mxu0
    %v827 = vpop.f32.mrb[0].mxu0
    %v828 = vadd.f32 0.0, %v827
    %v829 = vpop.f32.mrb[0].mxu0
    %830 = vmatprep.mubr.bf16.mxu0 0
    %831 = vmatmul.mubr.bf16.gmra.mrb[0].mxu0 %v731
    %v832 = vpop.f32.mrb[0].mxu0
    %v833 = vadd.f32 0.0, %v832
    %v834 = vpop.f32.mrb[0].mxu0
    %v835 = vpop.f32.mrb[0].mxu0
    %v836 = vpop.f32.mrb[0].mxu0
    %837 = vdwg.mxu0
    %v839 = vunpack.c.l.b16 %v679
    %v840 = vpack.c.b16 %v724, %v839
    %v841 = vpack.c.b16 %v726, %v725
    %v842 = vpack.c.b16 %v728, %v727
    %v844 = vshrl.u32 %v840, 16
    %v846 = vrot.slane %v844, 3
    %v847 = vshll.u32 %v840, 16
    %v849 = vrot.slane %v847, 4
    %v850 = vor.u32 %v846, %v849
    %v852 = vshrl.u32 %v841, 16
    %v854 = vrot.slane %v852, 3
    %v855 = vshll.u32 %v841, 16
    %v857 = vrot.slane %v855, 4
    %v858 = vor.u32 %v854, %v857
    %v859 = vsel %vm218, %v850, %v858
    %v861 = vshrl.u32 %v842, 16
    %v863 = vrot.slane %v861, 3
    %v864 = vshll.u32 %v842, 16
    %v866 = vrot.slane %v864, 4
    %v867 = vor.u32 %v863, %v866
    %v868 = vsel %vm218, %v858, %v867
    %v888 = vunpack.c.l.b16 %v686
    %v889 = vunpack.c.l.b16 %v687
    %v890 = vunpack.c.l.b16 %v688
    %v891 = vunpack.c.l.b16 %v689
    %v892 = vunpack.c.l.b16 %v690
    %v893 = vunpack.c.l.b16 %v691
    %v894 = vunpack.c.l.b16 %v692
    %v895 = vunpack.c.l.b16 %v693
    %v896 = vunpack.c.l.b16 %v694
    %v897 = vunpack.c.l.b16 %v695
    %v898 = vunpack.c.l.b16 %v696
    %v899 = vunpack.c.l.b16 %v697
    %v900 = vunpack.c.l.b16 %v698
    %v901 = vunpack.c.l.b16 %v699
    %v902 = vunpack.c.l.b16 %v700
    %v903 = vunpack.c.l.b16 %v701
    %v904 = vpack.c.b16 %v889, %v888
    %v905 = vpack.c.b16 %v891, %v890
    %v906 = vpack.c.b16 %v893, %v892
    %v907 = vpack.c.b16 %v895, %v894
    %v908 = vpack.c.b16 %v897, %v896
    %v909 = vpack.c.b16 %v899, %v898
    %v910 = vpack.c.b16 %v901, %v900
    %v911 = vpack.c.b16 %v903, %v902
    %920 = vmatprep.subr.bf16.mxu0 0
    %921 = vmatpush1.bf16.msra.mxu0 %v904
    %922 = vmatprep.subr.bf16.mxu0 0
    %923 = vmatpush1.bf16.msra.mxu0 %v905
    %924 = vmatprep.subr.bf16.mxu0 0
    %925 = vmatpush1.bf16.msra.mxu0 %v906
    %926 = vmatprep.subr.bf16.mxu0 0
    %927 = vmatpush1.bf16.msra.mxu0 %v907
    %928 = vmatprep.subr.bf16.mxu0 0
    %929 = vmatpush1.bf16.msra.mxu0 %v908
    %930 = vmatprep.subr.bf16.mxu0 0
    %931 = vmatpush1.bf16.msra.mxu0 %v909
    %932 = vmatprep.subr.bf16.mxu0 0
    %933 = vmatpush1.bf16.msra.mxu0 %v910
    %934 = vmatprep.subr.bf16.mxu0 0
    %935 = vmatpush1.bf16.msra.mxu0 %v911
    %936 = vmatprep.subr.bf16.mxu0 0
    %937 = vmatpush1.bf16.msra.mxu0 0
    %938 = vmatprep.subr.bf16.mxu0 0
    %939 = vmatpush1.bf16.msra.mxu0 0
    %940 = vmatprep.subr.bf16.mxu0 0
    %941 = vmatpush1.bf16.msra.mxu0 0
    %942 = vmatprep.subr.bf16.mxu0 0
    %943 = vmatpush1.bf16.msra.mxu0 0
    %944 = vmatprep.subr.bf16.mxu0 0
    %945 = vmatpush1.bf16.msra.mxu0 0
    %946 = vmatprep.subr.bf16.mxu0 0
    %947 = vmatpush1.bf16.msra.mxu0 0
    %948 = vmatprep.subr.bf16.mxu0 0
    %949 = vmatpush1.bf16.msra.mxu0 0
    %950 = vmatprep.subr.bf16.mxu0 0
    %951 = vmatpush1.bf16.msra.mxu0 0
    %952 = vmatprep.mubr.bf16.mxu0 0
    %953 = vmatmul.mubr.bf16.gmra.mrb[0].mxu0 %v859
    %v954 = vpop.f32.mrb[0].mxu0
    %v955 = vadd.f32 %v818, %v954
    %v956 = vpop.f32.mrb[0].mxu0
    %v957 = vpop.f32.mrb[0].mxu0
    %v958 = vadd.f32 %v821, %v957
    %v959 = vpop.f32.mrb[0].mxu0
    %960 = vmatprep.mubr.bf16.mxu0 0
    %961 = vmatmul.mubr.bf16.gmra.mrb[0].mxu0 %v868
    %v962 = vpop.f32.mrb[0].mxu0
    %v963 = vpop.f32.mrb[0].mxu0
    %v964 = vpop.f32.mrb[0].mxu0
    %v965 = vadd.f32 %v828, %v964
    %v966 = vpop.f32.mrb[0].mxu0
    %967 = vmatprep.mubr.bf16.mxu0 0
    %968 = vmatmul.mubr.bf16.gmra.mrb[0].mxu0 %v867
    %v969 = vpop.f32.mrb[0].mxu0
    %v970 = vadd.f32 %v833, %v969
    %v971 = vpop.f32.mrb[0].mxu0
    %v972 = vpop.f32.mrb[0].mxu0
    %v973 = vpop.f32.mrb[0].mxu0
    %974 = vdwg.mxu0
    %v975 = vld [vmem:[#allocation3 + $0x4] sm:$0xf]
    %v976 = vld [vmem:[#allocation3 + $0x8] sm:$0xf]
    %v977 = vld [vmem:[#allocation3 + $0xc] sm:$0xf]
    %v978 = vld [vmem:[#allocation3 + $0x10] sm:$0xf]
    %v979 = vld [vmem:[#allocation3 + $0x14] sm:$0xf]
    %v980 = vld [vmem:[#allocation3 + $0x18] sm:$0x1]
    %s981 = scalar_lea.vmem [#allocation5], 192
    %v982 = vld [vmem:[%s981] sm:$0xf]
    %v983 = vld [vmem:[%s981 + $0x4] sm:$0xf]
    %v984 = vld [vmem:[%s981 + $0x8] sm:$0xf]
    %v985 = vld [vmem:[%s981 + $0xc] sm:$0xf]
    %v986 = vld [vmem:[%s981 + $0x10] sm:$0xf]
    %v987 = vld [vmem:[%s981 + $0x14] sm:$0xf]
    %v988 = vld [vmem:[%s981 + $0x18] sm:$0xf]
    %v989 = vld [vmem:[%s981 + $0x1c] sm:$0xf]
    %v990 = vld [vmem:[%s981 + $0x20] sm:$0xf]
    %v991 = vld [vmem:[%s981 + $0x24] sm:$0xf]
    %v992 = vld [vmem:[%s981 + $0x28] sm:$0xf]
    %v993 = vld [vmem:[%s981 + $0x2c] sm:$0xf]
    %v994 = vld [vmem:[%s981 + $0x30] sm:$0xf]
    %v995 = vld [vmem:[%s981 + $0x34] sm:$0xf]
    %v996 = vld [vmem:[%s981 + $0x38] sm:$0xf]
    %v997 = vld [vmem:[%s981 + $0x3c] sm:$0xf]
    %v1004 = vunpack.c.l.b16 %v975
    %v1005 = vunpack.c.l.b16 %v976
    %v1006 = vunpack.c.l.b16 %v977
    %v1007 = vunpack.c.l.b16 %v978
    %v1008 = vunpack.c.l.b16 %v979
    %v1009 = vunpack.c.l.b16 %v980
    %v1010 = vpack.c.b16 %v1005, %v1004
    %v1011 = vpack.c.b16 %v1007, %v1006
    %v1012 = vpack.c.b16 %v1009, %v1008
    %v1014 = vshrl.u32 %v1010, 16
    %v1016 = vshll.u32 %v1010, 16
    %v1018 = vrot.slane %v1016, 1
    %v1019 = vor.u32 %v1014, %v1018
    %v1021 = vshll.u32 %v1011, 16
    %v1023 = vrot.slane %v1021, 1
    %v1024 = vsel %vm364, %v1019, %v1023
    %v1025 = vshrl.u32 %v1011, 16
    %v1027 = vor.u32 %v1025, %v1023
    %v1029 = vshll.u32 %v1012, 16
    %v1031 = vrot.slane %v1029, 1
    %v1032 = vsel %vm364, %v1027, %v1031
    %v1033 = vshrl.u32 %v1012, 16
    %v1035 = vor.u32 %v1033, %v1031
    %v1055 = vunpack.c.l.b16 %v982
    %v1056 = vunpack.c.l.b16 %v983
    %v1057 = vunpack.c.l.b16 %v984
    %v1058 = vunpack.c.l.b16 %v985
    %v1059 = vunpack.c.l.b16 %v986
    %v1060 = vunpack.c.l.b16 %v987
    %v1061 = vunpack.c.l.b16 %v988
    %v1062 = vunpack.c.l.b16 %v989
    %v1063 = vunpack.c.l.b16 %v990
    %v1064 = vunpack.c.l.b16 %v991
    %v1065 = vunpack.c.l.b16 %v992
    %v1066 = vunpack.c.l.b16 %v993
    %v1067 = vunpack.c.l.b16 %v994
    %v1068 = vunpack.c.l.b16 %v995
    %v1069 = vunpack.c.l.b16 %v996
    %v1070 = vunpack.c.l.b16 %v997
    %v1071 = vpack.c.b16 %v1056, %v1055
    %v1072 = vpack.c.b16 %v1058, %v1057
    %v1073 = vpack.c.b16 %v1060, %v1059
    %v1074 = vpack.c.b16 %v1062, %v1061
    %v1075 = vpack.c.b16 %v1064, %v1063
    %v1076 = vpack.c.b16 %v1066, %v1065
    %v1077 = vpack.c.b16 %v1068, %v1067
    %v1078 = vpack.c.b16 %v1070, %v1069
    %1087 = vmatprep.subr.bf16.mxu0 0
    %1088 = vmatpush1.bf16.msra.mxu0 %v1071
    %1089 = vmatprep.subr.bf16.mxu0 0
    %1090 = vmatpush1.bf16.msra.mxu0 %v1072
    %1091 = vmatprep.subr.bf16.mxu0 0
    %1092 = vmatpush1.bf16.msra.mxu0 %v1073
    %1093 = vmatprep.subr.bf16.mxu0 0
    %1094 = vmatpush1.bf16.msra.mxu0 %v1074
    %1095 = vmatprep.subr.bf16.mxu0 0
    %1096 = vmatpush1.bf16.msra.mxu0 %v1075
    %1097 = vmatprep.subr.bf16.mxu0 0
    %1098 = vmatpush1.bf16.msra.mxu0 %v1076
    %1099 = vmatprep.subr.bf16.mxu0 0
    %1100 = vmatpush1.bf16.msra.mxu0 %v1077
    %1101 = vmatprep.subr.bf16.mxu0 0
    %1102 = vmatpush1.bf16.msra.mxu0 %v1078
    %1103 = vmatprep.subr.bf16.mxu0 0
    %1104 = vmatpush1.bf16.msra.mxu0 0
    %1105 = vmatprep.subr.bf16.mxu0 0
    %1106 = vmatpush1.bf16.msra.mxu0 0
    %1107 = vmatprep.subr.bf16.mxu0 0
    %1108 = vmatpush1.bf16.msra.mxu0 0
    %1109 = vmatprep.subr.bf16.mxu0 0
    %1110 = vmatpush1.bf16.msra.mxu0 0
    %1111 = vmatprep.subr.bf16.mxu0 0
    %1112 = vmatpush1.bf16.msra.mxu0 0
    %1113 = vmatprep.subr.bf16.mxu0 0
    %1114 = vmatpush1.bf16.msra.mxu0 0
    %1115 = vmatprep.subr.bf16.mxu0 0
    %1116 = vmatpush1.bf16.msra.mxu0 0
    %1117 = vmatprep.subr.bf16.mxu0 0
    %1118 = vmatpush1.bf16.msra.mxu0 0
    %1119 = vmatprep.mubr.bf16.mxu0 0
    %1120 = vmatmul.mubr.bf16.gmra.mrb[0].mxu0 %v1024
    %v1121 = vpop.f32.mrb[0].mxu0
    %v1122 = vadd.f32 0.0, %v1121
    %v1123 = vpop.f32.mrb[0].mxu0
    %v1124 = vpop.f32.mrb[0].mxu0
    %v1125 = vadd.f32 0.0, %v1124
    %v1126 = vpop.f32.mrb[0].mxu0
    %1127 = vmatprep.mubr.bf16.mxu0 0
    %1128 = vmatmul.mubr.bf16.gmra.mrb[0].mxu0 %v1032
    %v1129 = vpop.f32.mrb[0].mxu0
    %v1130 = vpop.f32.mrb[0].mxu0
    %v1131 = vpop.f32.mrb[0].mxu0
    %v1132 = vadd.f32 0.0, %v1131
    %v1133 = vpop.f32.mrb[0].mxu0
    %1134 = vmatprep.mubr.bf16.mxu0 0
    %1135 = vmatmul.mubr.bf16.gmra.mrb[0].mxu0 %v1035
    %v1136 = vpop.f32.mrb[0].mxu0
    %v1137 = vadd.f32 0.0, %v1136
    %v1138 = vpop.f32.mrb[0].mxu0
    %v1139 = vpop.f32.mrb[0].mxu0
    %v1140 = vpop.f32.mrb[0].mxu0
    %1141 = vdwg.mxu0
    %v1142 = vadd.f32 %v955, %v1122
    %v1143 = vadd.f32 %v958, %v1125
    %v1144 = vadd.f32 %v965, %v1132
    %v1145 = vadd.f32 %v970, %v1137
    %v1146 = vld [vmem:[%s4 + $0x4] sm:$0x1]
    %v1147 = vlaneseq
    %v1148 = vshrl.u32 %v1147, 7
    %v1149 = vsub.s32 0, %v1148
    %v1150 = vrot.slane %v1146, %v1149
    %v1151 = vmul.f32 %v1142, %v1150
    %v1152 = vmul.f32 %v1143, %v1150
    %v1153 = vmul.f32 %v1144, %v1150
    %v1154 = vmul.f32 %v1145, %v1150
    %v1155 = vld [vmem:[%s4 + $0x5] sm:$0x1]
    %v1156 = vlaneseq
    %v1157 = vshrl.u32 %v1156, 7
    %v1158 = vsub.s32 0, %v1157
    %v1159 = vrot.slane %v1155, %v1158
    %v1160 = vadd.f32 %v1151, %v1159
    %v1161 = vadd.f32 %v1152, %v1159
    %v1162 = vadd.f32 %v1153, %v1159
    %v1163 = vadd.f32 %v1154, %v1159
    %v1164 = vmul.f32 %v1160, 0.2
    %v1165 = vmul.f32 %v1161, 0.2
    %v1166 = vmul.f32 %v1162, 0.2
    %v1167 = vmul.f32 %v1163, 0.2
    %v1168 = vmax.f32 %v1160, %v1164
    %v1169 = vmax.f32 %v1161, %v1165
    %v1170 = vmax.f32 %v1162, %v1166
    %v1171 = vmax.f32 %v1163, %v1167
    %v1172 = vld [vmem:[#allocation3 + $0x14] sm:$0x7]
    %s1173 = scalar_lea.vmem [#allocation5], 256
    %v1174 = vld [vmem:[%s1173] sm:$0xf]
    %v1175 = vld [vmem:[%s1173 + $0x4] sm:$0xf]
    %v1176 = vld [vmem:[%s1173 + $0x8] sm:$0xf]
    %v1177 = vld [vmem:[%s1173 + $0xc] sm:$0xf]
    %v1178 = vld [vmem:[%s1173 + $0x10] sm:$0xf]
    %v1179 = vld [vmem:[%s1173 + $0x14] sm:$0xf]
    %v1180 = vld [vmem:[%s1173 + $0x18] sm:$0xf]
    %v1181 = vld [vmem:[%s1173 + $0x1c] sm:$0xf]
    %v1182 = vld [vmem:[%s1173 + $0x20] sm:$0xf]
    %v1183 = vld [vmem:[%s1173 + $0x24] sm:$0xf]
    %v1184 = vld [vmem:[%s1173 + $0x28] sm:$0xf]
    %v1185 = vld [vmem:[%s1173 + $0x2c] sm:$0xf]
    %v1186 = vld [vmem:[%s1173 + $0x30] sm:$0xf]
    %v1187 = vld [vmem:[%s1173 + $0x34] sm:$0xf]
    %v1188 = vld [vmem:[%s1173 + $0x38] sm:$0xf]
    %v1189 = vld [vmem:[%s1173 + $0x3c] sm:$0xf]
    %s1190 = scalar_lea.vmem [#allocation5], 320
    %v1191 = vld [vmem:[%s1190] sm:$0xf]
    %v1192 = vld [vmem:[%s1190 + $0x4] sm:$0xf]
    %v1193 = vld [vmem:[%s1190 + $0x8] sm:$0xf]
    %v1194 = vld [vmem:[%s1190 + $0xc] sm:$0xf]
    %v1195 = vld [vmem:[%s1190 + $0x10] sm:$0xf]
    %v1196 = vld [vmem:[%s1190 + $0x14] sm:$0xf]
    %v1197 = vld [vmem:[%s1190 + $0x18] sm:$0xf]
    %v1198 = vld [vmem:[%s1190 + $0x1c] sm:$0xf]
    %v1199 = vld [vmem:[%s1190 + $0x20] sm:$0xf]
    %v1200 = vld [vmem:[%s1190 + $0x24] sm:$0xf]
    %v1201 = vld [vmem:[%s1190 + $0x28] sm:$0xf]
    %v1202 = vld [vmem:[%s1190 + $0x2c] sm:$0xf]
    %v1203 = vld [vmem:[%s1190 + $0x30] sm:$0xf]
    %v1204 = vld [vmem:[%s1190 + $0x34] sm:$0xf]
    %v1205 = vld [vmem:[%s1190 + $0x38] sm:$0xf]
    %v1206 = vld [vmem:[%s1190 + $0x3c] sm:$0xf]
    %v1223 = vunpack.c.l.b16 %v1191
    %v1224 = vunpack.c.l.b16 %v1192
    %v1225 = vunpack.c.l.b16 %v1193
    %v1226 = vunpack.c.l.b16 %v1194
    %v1227 = vunpack.c.l.b16 %v1195
    %v1228 = vunpack.c.l.b16 %v1196
    %v1229 = vunpack.c.l.b16 %v1197
    %v1230 = vunpack.c.l.b16 %v1198
    %v1231 = vunpack.c.l.b16 %v1199
    %v1232 = vunpack.c.l.b16 %v1200
    %v1233 = vunpack.c.l.b16 %v1201
    %v1234 = vunpack.c.l.b16 %v1202
    %v1235 = vunpack.c.l.b16 %v1203
    %v1236 = vunpack.c.l.b16 %v1204
    %v1237 = vunpack.c.l.b16 %v1205
    %v1238 = vunpack.c.l.b16 %v1206
    %v1239 = vpack.c.b16 %v1224, %v1223
    %v1240 = vpack.c.b16 %v1226, %v1225
    %v1241 = vpack.c.b16 %v1228, %v1227
    %v1242 = vpack.c.b16 %v1230, %v1229
    %v1243 = vpack.c.b16 %v1232, %v1231
    %v1244 = vpack.c.b16 %v1234, %v1233
    %v1245 = vpack.c.b16 %v1236, %v1235
    %v1246 = vpack.c.b16 %v1238, %v1237
    %1255 = vmatprep.subr.bf16.mxu0 0
    %1256 = vmatpush1.bf16.msra.mxu0 %v1239
    %1257 = vmatprep.subr.bf16.mxu0 0
    %1258 = vmatpush1.bf16.msra.mxu0 %v1240
    %1259 = vmatprep.subr.bf16.mxu0 0
    %1260 = vmatpush1.bf16.msra.mxu0 %v1241
    %1261 = vmatprep.subr.bf16.mxu0 0
    %1262 = vmatpush1.bf16.msra.mxu0 %v1242
    %1263 = vmatprep.subr.bf16.mxu0 0
    %1264 = vmatpush1.bf16.msra.mxu0 %v1243
    %1265 = vmatprep.subr.bf16.mxu0 0
    %1266 = vmatpush1.bf16.msra.mxu0 %v1244
    %1267 = vmatprep.subr.bf16.mxu0 0
    %1268 = vmatpush1.bf16.msra.mxu0 %v1245
    %1269 = vmatprep.subr.bf16.mxu0 0
    %1270 = vmatpush1.bf16.msra.mxu0 %v1246
    %1271 = vmatprep.subr.bf16.mxu0 0
    %1272 = vmatpush1.bf16.msra.mxu0 0
    %1273 = vmatprep.subr.bf16.mxu0 0
    %1274 = vmatpush1.bf16.msra.mxu0 0
    %1275 = vmatprep.subr.bf16.mxu0 0
    %1276 = vmatpush1.bf16.msra.mxu0 0
    %1277 = vmatprep.subr.bf16.mxu0 0
    %1278 = vmatpush1.bf16.msra.mxu0 0
    %1279 = vmatprep.subr.bf16.mxu0 0
    %1280 = vmatpush1.bf16.msra.mxu0 0
    %1281 = vmatprep.subr.bf16.mxu0 0
    %1282 = vmatpush1.bf16.msra.mxu0 0
    %1283 = vmatprep.subr.bf16.mxu0 0
    %1284 = vmatpush1.bf16.msra.mxu0 0
    %1285 = vmatprep.subr.bf16.mxu0 0
    %1286 = vmatpush1.bf16.msra.mxu0 0
    %1287 = vmatprep.mubr.bf16.mxu0 0
    %1288 = vmatmul.mubr.bf16.gmra.mrb[0].mxu0 %v859
    %v1289 = vpop.f32.mrb[0].mxu0
    %v1290 = vadd.f32 0.0, %v1289
    %v1291 = vpop.f32.mrb[0].mxu0
    %v1292 = vpop.f32.mrb[0].mxu0
    %v1293 = vadd.f32 0.0, %v1292
    %v1294 = vpop.f32.mrb[0].mxu0
    %1295 = vmatprep.mubr.bf16.mxu0 0
    %1296 = vmatmul.mubr.bf16.gmra.mrb[0].mxu0 %v868
    %v1297 = vpop.f32.mrb[0].mxu0
    %v1298 = vpop.f32.mrb[0].mxu0
    %v1299 = vpop.f32.mrb[0].mxu0
    %v1300 = vadd.f32 0.0, %v1299
    %v1301 = vpop.f32.mrb[0].mxu0
    %1302 = vmatprep.mubr.bf16.mxu0 0
    %1303 = vmatmul.mubr.bf16.gmra.mrb[0].mxu0 %v867
    %v1304 = vpop.f32.mrb[0].mxu0
    %v1305 = vadd.f32 0.0, %v1304
    %v1306 = vpop.f32.mrb[0].mxu0
    %v1307 = vpop.f32.mrb[0].mxu0
    %v1308 = vpop.f32.mrb[0].mxu0
    %1309 = vdwg.mxu0
    %v1311 = vunpack.c.l.b16 %v1172
    %v1312 = vpack.c.b16 %v1311, %v727
    %vm1313 = vcmask 1044480
    %v1314 = vrot.slane %v840, 3
    %v1315 = vrot.slane %v841, 3
    %v1316 = vsel %vm1313, %v1314, %v1315
    %v1317 = vrot.slane %v1312, 3
    %v1318 = vsel %vm1313, %v1315, %v1317
    %v1338 = vunpack.c.l.b16 %v1174
    %v1339 = vunpack.c.l.b16 %v1175
    %v1340 = vunpack.c.l.b16 %v1176
    %v1341 = vunpack.c.l.b16 %v1177
    %v1342 = vunpack.c.l.b16 %v1178
    %v1343 = vunpack.c.l.b16 %v1179
    %v1344 = vunpack.c.l.b16 %v1180
    %v1345 = vunpack.c.l.b16 %v1181
    %v1346 = vunpack.c.l.b16 %v1182
    %v1347 = vunpack.c.l.b16 %v1183
    %v1348 = vunpack.c.l.b16 %v1184
    %v1349 = vunpack.c.l.b16 %v1185
    %v1350 = vunpack.c.l.b16 %v1186
    %v1351 = vunpack.c.l.b16 %v1187
    %v1352 = vunpack.c.l.b16 %v1188
    %v1353 = vunpack.c.l.b16 %v1189
    %v1354 = vpack.c.b16 %v1339, %v1338
    %v1355 = vpack.c.b16 %v1341, %v1340
    %v1356 = vpack.c.b16 %v1343, %v1342
    %v1357 = vpack.c.b16 %v1345, %v1344
    %v1358 = vpack.c.b16 %v1347, %v1346
    %v1359 = vpack.c.b16 %v1349, %v1348
    %v1360 = vpack.c.b16 %v1351, %v1350
    %v1361 = vpack.c.b16 %v1353, %v1352
    %1370 = vmatprep.subr.bf16.mxu0 0
    %1371 = vmatpush1.bf16.msra.mxu0 %v1354
    %1372 = vmatprep.subr.bf16.mxu0 0
    %1373 = vmatpush1.bf16.msra.mxu0 %v1355
    %1374 = vmatprep.subr.bf16.mxu0 0
    %1375 = vmatpush1.bf16.msra.mxu0 %v1356
    %1376 = vmatprep.subr.bf16.mxu0 0
    %1377 = vmatpush1.bf16.msra.mxu0 %v1357
    %1378 = vmatprep.subr.bf16.mxu0 0
    %1379 = vmatpush1.bf16.msra.mxu0 %v1358
    %1380 = vmatprep.subr.bf16.mxu0 0
    %1381 = vmatpush1.bf16.msra.mxu0 %v1359
    %1382 = vmatprep.subr.bf16.mxu0 0
    %1383 = vmatpush1.bf16.msra.mxu0 %v1360
    %1384 = vmatprep.subr.bf16.mxu0 0
    %1385 = vmatpush1.bf16.msra.mxu0 %v1361
    %1386 = vmatprep.subr.bf16.mxu0 0
    %1387 = vmatpush1.bf16.msra.mxu0 0
    %1388 = vmatprep.subr.bf16.mxu0 0
    %1389 = vmatpush1.bf16.msra.mxu0 0
    %1390 = vmatprep.subr.bf16.mxu0 0
    %1391 = vmatpush1.bf16.msra.mxu0 0
    %1392 = vmatprep.subr.bf16.mxu0 0
    %1393 = vmatpush1.bf16.msra.mxu0 0
    %1394 = vmatprep.subr.bf16.mxu0 0
    %1395 = vmatpush1.bf16.msra.mxu0 0
    %1396 = vmatprep.subr.bf16.mxu0 0
    %1397 = vmatpush1.bf16.msra.mxu0 0
    %1398 = vmatprep.subr.bf16.mxu0 0
    %1399 = vmatpush1.bf16.msra.mxu0 0
    %1400 = vmatprep.subr.bf16.mxu0 0
    %1401 = vmatpush1.bf16.msra.mxu0 0
    %1402 = vmatprep.mubr.bf16.mxu0 0
    %1403 = vmatmul.mubr.bf16.gmra.mrb[0].mxu0 %v1316
    %v1404 = vpop.f32.mrb[0].mxu0
    %v1405 = vadd.f32 %v1290, %v1404
    %v1406 = vpop.f32.mrb[0].mxu0
    %v1407 = vpop.f32.mrb[0].mxu0
    %v1408 = vadd.f32 %v1293, %v1407
    %v1409 = vpop.f32.mrb[0].mxu0
    %1410 = vmatprep.mubr.bf16.mxu0 0
    %1411 = vmatmul.mubr.bf16.gmra.mrb[0].mxu0 %v1318
    %v1412 = vpop.f32.mrb[0].mxu0
    %v1413 = vpop.f32.mrb[0].mxu0
    %v1414 = vpop.f32.mrb[0].mxu0
    %v1415 = vadd.f32 %v1300, %v1414
    %v1416 = vpop.f32.mrb[0].mxu0
    %1417 = vmatprep.mubr.bf16.mxu0 0
    %1418 = vmatmul.mubr.bf16.gmra.mrb[0].mxu0 %v1317
    %v1419 = vpop.f32.mrb[0].mxu0
    %v1420 = vadd.f32 %v1305, %v1419
    %v1421 = vpop.f32.mrb[0].mxu0
    %v1422 = vpop.f32.mrb[0].mxu0
    %v1423 = vpop.f32.mrb[0].mxu0
    %1424 = vdwg.mxu0
    %s1425 = scalar_lea.vmem [#allocation5], 384
    %v1426 = vld [vmem:[%s1425] sm:$0xf]
    %v1427 = vld [vmem:[%s1425 + $0x4] sm:$0xf]
    %v1428 = vld [vmem:[%s1425 + $0x8] sm:$0xf]
    %v1429 = vld [vmem:[%s1425 + $0xc] sm:$0xf]
    %v1430 = vld [vmem:[%s1425 + $0x10] sm:$0xf]
    %v1431 = vld [vmem:[%s1425 + $0x14] sm:$0xf]
    %v1432 = vld [vmem:[%s1425 + $0x18] sm:$0xf]
    %v1433 = vld [vmem:[%s1425 + $0x1c] sm:$0xf]
    %v1434 = vld [vmem:[%s1425 + $0x20] sm:$0xf]
    %v1435 = vld [vmem:[%s1425 + $0x24] sm:$0xf]
    %v1436 = vld [vmem:[%s1425 + $0x28] sm:$0xf]
    %v1437 = vld [vmem:[%s1425 + $0x2c] sm:$0xf]
    %v1438 = vld [vmem:[%s1425 + $0x30] sm:$0xf]
    %v1439 = vld [vmem:[%s1425 + $0x34] sm:$0xf]
    %v1440 = vld [vmem:[%s1425 + $0x38] sm:$0xf]
    %v1441 = vld [vmem:[%s1425 + $0x3c] sm:$0xf]
    %v1458 = vunpack.c.l.b16 %v1426
    %v1459 = vunpack.c.l.b16 %v1427
    %v1460 = vunpack.c.l.b16 %v1428
    %v1461 = vunpack.c.l.b16 %v1429
    %v1462 = vunpack.c.l.b16 %v1430
    %v1463 = vunpack.c.l.b16 %v1431
    %v1464 = vunpack.c.l.b16 %v1432
    %v1465 = vunpack.c.l.b16 %v1433
    %v1466 = vunpack.c.l.b16 %v1434
    %v1467 = vunpack.c.l.b16 %v1435
    %v1468 = vunpack.c.l.b16 %v1436
    %v1469 = vunpack.c.l.b16 %v1437
    %v1470 = vunpack.c.l.b16 %v1438
    %v1471 = vunpack.c.l.b16 %v1439
    %v1472 = vunpack.c.l.b16 %v1440
    %v1473 = vunpack.c.l.b16 %v1441
    %v1474 = vpack.c.b16 %v1459, %v1458
    %v1475 = vpack.c.b16 %v1461, %v1460
    %v1476 = vpack.c.b16 %v1463, %v1462
    %v1477 = vpack.c.b16 %v1465, %v1464
    %v1478 = vpack.c.b16 %v1467, %v1466
    %v1479 = vpack.c.b16 %v1469, %v1468
    %v1480 = vpack.c.b16 %v1471, %v1470
    %v1481 = vpack.c.b16 %v1473, %v1472
    %1490 = vmatprep.subr.bf16.mxu0 0
    %1491 = vmatpush1.bf16.msra.mxu0 %v1474
    %1492 = vmatprep.subr.bf16.mxu0 0
    %1493 = vmatpush1.bf16.msra.mxu0 %v1475
    %1494 = vmatprep.subr.bf16.mxu0 0
    %1495 = vmatpush1.bf16.msra.mxu0 %v1476
    %1496 = vmatprep.subr.bf16.mxu0 0
    %1497 = vmatpush1.bf16.msra.mxu0 %v1477
    %1498 = vmatprep.subr.bf16.mxu0 0
    %1499 = vmatpush1.bf16.msra.mxu0 %v1478
    %1500 = vmatprep.subr.bf16.mxu0 0
    %1501 = vmatpush1.bf16.msra.mxu0 %v1479
    %1502 = vmatprep.subr.bf16.mxu0 0
    %1503 = vmatpush1.bf16.msra.mxu0 %v1480
    %1504 = vmatprep.subr.bf16.mxu0 0
    %1505 = vmatpush1.bf16.msra.mxu0 %v1481
    %1506 = vmatprep.subr.bf16.mxu0 0
    %1507 = vmatpush1.bf16.msra.mxu0 0
    %1508 = vmatprep.subr.bf16.mxu0 0
    %1509 = vmatpush1.bf16.msra.mxu0 0
    %1510 = vmatprep.subr.bf16.mxu0 0
    %1511 = vmatpush1.bf16.msra.mxu0 0
    %1512 = vmatprep.subr.bf16.mxu0 0
    %1513 = vmatpush1.bf16.msra.mxu0 0
    %1514 = vmatprep.subr.bf16.mxu0 0
    %1515 = vmatpush1.bf16.msra.mxu0 0
    %1516 = vmatprep.subr.bf16.mxu0 0
    %1517 = vmatpush1.bf16.msra.mxu0 0
    %1518 = vmatprep.subr.bf16.mxu0 0
    %1519 = vmatpush1.bf16.msra.mxu0 0
    %1520 = vmatprep.subr.bf16.mxu0 0
    %1521 = vmatpush1.bf16.msra.mxu0 0
    %1522 = vmatprep.mubr.bf16.mxu0 0
    %1523 = vmatmul.mubr.bf16.gmra.mrb[0].mxu0 %v729
    %v1524 = vpop.f32.mrb[0].mxu0
    %v1525 = vadd.f32 0.0, %v1524
    %v1526 = vpop.f32.mrb[0].mxu0
    %v1527 = vpop.f32.mrb[0].mxu0
    %v1528 = vadd.f32 0.0, %v1527
    %v1529 = vpop.f32.mrb[0].mxu0
    %1530 = vmatprep.mubr.bf16.mxu0 0
    %1531 = vmatmul.mubr.bf16.gmra.mrb[0].mxu0 %v730
    %v1532 = vpop.f32.mrb[0].mxu0
    %v1533 = vpop.f32.mrb[0].mxu0
    %v1534 = vpop.f32.mrb[0].mxu0
    %v1535 = vadd.f32 0.0, %v1534
    %v1536 = vpop.f32.mrb[0].mxu0
    %1537 = vmatprep.mubr.bf16.mxu0 0
    %1538 = vmatmul.mubr.bf16.gmra.mrb[0].mxu0 %v731
    %v1539 = vpop.f32.mrb[0].mxu0
    %v1540 = vadd.f32 0.0, %v1539
    %v1541 = vpop.f32.mrb[0].mxu0
    %v1542 = vpop.f32.mrb[0].mxu0
    %v1543 = vpop.f32.mrb[0].mxu0
    %1544 = vdwg.mxu0
    %v1545 = vadd.f32 %v1405, %v1525
    %v1546 = vadd.f32 %v1408, %v1528
    %v1547 = vadd.f32 %v1415, %v1535
    %v1548 = vadd.f32 %v1420, %v1540
    %s1549 = scalar_lea.vmem [#allocation5], 448
    %v1550 = vld [vmem:[%s1549] sm:$0xf]
    %v1551 = vld [vmem:[%s1549 + $0x4] sm:$0xf]
    %v1552 = vld [vmem:[%s1549 + $0x8] sm:$0xf]
    %v1553 = vld [vmem:[%s1549 + $0xc] sm:$0xf]
    %v1554 = vld [vmem:[%s1549 + $0x10] sm:$0xf]
    %v1555 = vld [vmem:[%s1549 + $0x14] sm:$0xf]
    %v1556 = vld [vmem:[%s1549 + $0x18] sm:$0xf]
    %v1557 = vld [vmem:[%s1549 + $0x1c] sm:$0xf]
    %v1558 = vld [vmem:[%s1549 + $0x20] sm:$0xf]
    %v1559 = vld [vmem:[%s1549 + $0x24] sm:$0xf]
    %v1560 = vld [vmem:[%s1549 + $0x28] sm:$0xf]
    %v1561 = vld [vmem:[%s1549 + $0x2c] sm:$0xf]
    %v1562 = vld [vmem:[%s1549 + $0x30] sm:$0xf]
    %v1563 = vld [vmem:[%s1549 + $0x34] sm:$0xf]
    %v1564 = vld [vmem:[%s1549 + $0x38] sm:$0xf]
    %v1565 = vld [vmem:[%s1549 + $0x3c] sm:$0xf]
    %v1582 = vunpack.c.l.b16 %v1550
    %v1583 = vunpack.c.l.b16 %v1551
    %v1584 = vunpack.c.l.b16 %v1552
    %v1585 = vunpack.c.l.b16 %v1553
    %v1586 = vunpack.c.l.b16 %v1554
    %v1587 = vunpack.c.l.b16 %v1555
    %v1588 = vunpack.c.l.b16 %v1556
    %v1589 = vunpack.c.l.b16 %v1557
    %v1590 = vunpack.c.l.b16 %v1558
    %v1591 = vunpack.c.l.b16 %v1559
    %v1592 = vunpack.c.l.b16 %v1560
    %v1593 = vunpack.c.l.b16 %v1561
    %v1594 = vunpack.c.l.b16 %v1562
    %v1595 = vunpack.c.l.b16 %v1563
    %v1596 = vunpack.c.l.b16 %v1564
    %v1597 = vunpack.c.l.b16 %v1565
    %v1598 = vpack.c.b16 %v1583, %v1582
    %v1599 = vpack.c.b16 %v1585, %v1584
    %v1600 = vpack.c.b16 %v1587, %v1586
    %v1601 = vpack.c.b16 %v1589, %v1588
    %v1602 = vpack.c.b16 %v1591, %v1590
    %v1603 = vpack.c.b16 %v1593, %v1592
    %v1604 = vpack.c.b16 %v1595, %v1594
    %v1605 = vpack.c.b16 %v1597, %v1596
    %1614 = vmatprep.subr.bf16.mxu0 0
    %1615 = vmatpush1.bf16.msra.mxu0 %v1598
    %1616 = vmatprep.subr.bf16.mxu0 0
    %1617 = vmatpush1.bf16.msra.mxu0 %v1599
    %1618 = vmatprep.subr.bf16.mxu0 0
    %1619 = vmatpush1.bf16.msra.mxu0 %v1600
    %1620 = vmatprep.subr.bf16.mxu0 0
    %1621 = vmatpush1.bf16.msra.mxu0 %v1601
    %1622 = vmatprep.subr.bf16.mxu0 0
    %1623 = vmatpush1.bf16.msra.mxu0 %v1602
    %1624 = vmatprep.subr.bf16.mxu0 0
    %1625 = vmatpush1.bf16.msra.mxu0 %v1603
    %1626 = vmatprep.subr.bf16.mxu0 0
    %1627 = vmatpush1.bf16.msra.mxu0 %v1604
    %1628 = vmatprep.subr.bf16.mxu0 0
    %1629 = vmatpush1.bf16.msra.mxu0 %v1605
    %1630 = vmatprep.subr.bf16.mxu0 0
    %1631 = vmatpush1.bf16.msra.mxu0 0
    %1632 = vmatprep.subr.bf16.mxu0 0
    %1633 = vmatpush1.bf16.msra.mxu0 0
    %1634 = vmatprep.subr.bf16.mxu0 0
    %1635 = vmatpush1.bf16.msra.mxu0 0
    %1636 = vmatprep.subr.bf16.mxu0 0
    %1637 = vmatpush1.bf16.msra.mxu0 0
    %1638 = vmatprep.subr.bf16.mxu0 0
    %1639 = vmatpush1.bf16.msra.mxu0 0
    %1640 = vmatprep.subr.bf16.mxu0 0
    %1641 = vmatpush1.bf16.msra.mxu0 0
    %1642 = vmatprep.subr.bf16.mxu0 0
    %1643 = vmatpush1.bf16.msra.mxu0 0
    %1644 = vmatprep.subr.bf16.mxu0 0
    %1645 = vmatpush1.bf16.msra.mxu0 0
    %1646 = vmatprep.mubr.bf16.mxu0 0
    %1647 = vmatmul.mubr.bf16.gmra.mrb[0].mxu0 %v1024
    %v1648 = vpop.f32.mrb[0].mxu0
    %v1649 = vadd.f32 0.0, %v1648
    %v1650 = vpop.f32.mrb[0].mxu0
    %v1651 = vpop.f32.mrb[0].mxu0
    %v1652 = vadd.f32 0.0, %v1651
    %v1653 = vpop.f32.mrb[0].mxu0
    %1654 = vmatprep.mubr.bf16.mxu0 0
    %1655 = vmatmul.mubr.bf16.gmra.mrb[0].mxu0 %v1032
    %v1656 = vpop.f32.mrb[0].mxu0
    %v1657 = vpop.f32.mrb[0].mxu0
    %v1658 = vpop.f32.mrb[0].mxu0
    %v1659 = vadd.f32 0.0, %v1658
    %v1660 = vpop.f32.mrb[0].mxu0
    %1661 = vmatprep.mubr.bf16.mxu0 0
    %1662 = vmatmul.mubr.bf16.gmra.mrb[0].mxu0 %v1035
    %v1663 = vpop.f32.mrb[0].mxu0
    %v1664 = vadd.f32 0.0, %v1663
    %v1665 = vpop.f32.mrb[0].mxu0
    %v1666 = vpop.f32.mrb[0].mxu0
    %v1667 = vpop.f32.mrb[0].mxu0
    %1668 = vdwg.mxu0
    %v1669 = vadd.f32 %v1545, %v1649
    %v1670 = vadd.f32 %v1546, %v1652
    %v1671 = vadd.f32 %v1547, %v1659
    %v1672 = vadd.f32 %v1548, %v1664
    %v1673 = vld [vmem:[#allocation3 + $0x4] sm:$0xe]
    %s1674 = scalar_lea.vmem [#allocation5], 512
    %v1675 = vld [vmem:[%s1674] sm:$0xf]
    %v1676 = vld [vmem:[%s1674 + $0x4] sm:$0xf]
    %v1677 = vld [vmem:[%s1674 + $0x8] sm:$0xf]
    %v1678 = vld [vmem:[%s1674 + $0xc] sm:$0xf]
    %v1679 = vld [vmem:[%s1674 + $0x10] sm:$0xf]
    %v1680 = vld [vmem:[%s1674 + $0x14] sm:$0xf]
    %v1681 = vld [vmem:[%s1674 + $0x18] sm:$0xf]
    %v1682 = vld [vmem:[%s1674 + $0x1c] sm:$0xf]
    %v1683 = vld [vmem:[%s1674 + $0x20] sm:$0xf]
    %v1684 = vld [vmem:[%s1674 + $0x24] sm:$0xf]
    %v1685 = vld [vmem:[%s1674 + $0x28] sm:$0xf]
    %v1686 = vld [vmem:[%s1674 + $0x2c] sm:$0xf]
    %v1687 = vld [vmem:[%s1674 + $0x30] sm:$0xf]
    %v1688 = vld [vmem:[%s1674 + $0x34] sm:$0xf]
    %v1689 = vld [vmem:[%s1674 + $0x38] sm:$0xf]
    %v1690 = vld [vmem:[%s1674 + $0x3c] sm:$0xf]
    %v1692 = vunpack.c.l.b16 %v1673
    %v1693 = vpack.c.b16 %v1005, %v1692
    %vm1694 = vcmask 1046528
    %v1695 = vrot.slane %v1693, 1
    %v1696 = vrot.slane %v1011, 1
    %v1697 = vsel %vm1694, %v1695, %v1696
    %v1698 = vrot.slane %v1012, 1
    %v1699 = vsel %vm1694, %v1696, %v1698
    %v1719 = vunpack.c.l.b16 %v1675
    %v1720 = vunpack.c.l.b16 %v1676
    %v1721 = vunpack.c.l.b16 %v1677
    %v1722 = vunpack.c.l.b16 %v1678
    %v1723 = vunpack.c.l.b16 %v1679
    %v1724 = vunpack.c.l.b16 %v1680
    %v1725 = vunpack.c.l.b16 %v1681
    %v1726 = vunpack.c.l.b16 %v1682
    %v1727 = vunpack.c.l.b16 %v1683
    %v1728 = vunpack.c.l.b16 %v1684
    %v1729 = vunpack.c.l.b16 %v1685
    %v1730 = vunpack.c.l.b16 %v1686
    %v1731 = vunpack.c.l.b16 %v1687
    %v1732 = vunpack.c.l.b16 %v1688
    %v1733 = vunpack.c.l.b16 %v1689
    %v1734 = vunpack.c.l.b16 %v1690
    %v1735 = vpack.c.b16 %v1720, %v1719
    %v1736 = vpack.c.b16 %v1722, %v1721
    %v1737 = vpack.c.b16 %v1724, %v1723
    %v1738 = vpack.c.b16 %v1726, %v1725
    %v1739 = vpack.c.b16 %v1728, %v1727
    %v1740 = vpack.c.b16 %v1730, %v1729
    %v1741 = vpack.c.b16 %v1732, %v1731
    %v1742 = vpack.c.b16 %v1734, %v1733
    %1751 = vmatprep.subr.bf16.mxu0 0
    %1752 = vmatpush1.bf16.msra.mxu0 %v1735
    %1753 = vmatprep.subr.bf16.mxu0 0
    %1754 = vmatpush1.bf16.msra.mxu0 %v1736
    %1755 = vmatprep.subr.bf16.mxu0 0
    %1756 = vmatpush1.bf16.msra.mxu0 %v1737
    %1757 = vmatprep.subr.bf16.mxu0 0
    %1758 = vmatpush1.bf16.msra.mxu0 %v1738
    %1759 = vmatprep.subr.bf16.mxu0 0
    %1760 = vmatpush1.bf16.msra.mxu0 %v1739
    %1761 = vmatprep.subr.bf16.mxu0 0
    %1762 = vmatpush1.bf16.msra.mxu0 %v1740
    %1763 = vmatprep.subr.bf16.mxu0 0
    %1764 = vmatpush1.bf16.msra.mxu0 %v1741
    %1765 = vmatprep.subr.bf16.mxu0 0
    %1766 = vmatpush1.bf16.msra.mxu0 %v1742
    %1767 = vmatprep.subr.bf16.mxu0 0
    %1768 = vmatpush1.bf16.msra.mxu0 0
    %1769 = vmatprep.subr.bf16.mxu0 0
    %1770 = vmatpush1.bf16.msra.mxu0 0
    %1771 = vmatprep.subr.bf16.mxu0 0
    %1772 = vmatpush1.bf16.msra.mxu0 0
    %1773 = vmatprep.subr.bf16.mxu0 0
    %1774 = vmatpush1.bf16.msra.mxu0 0
    %1775 = vmatprep.subr.bf16.mxu0 0
    %1776 = vmatpush1.bf16.msra.mxu0 0
    %1777 = vmatprep.subr.bf16.mxu0 0
    %1778 = vmatpush1.bf16.msra.mxu0 0
    %1779 = vmatprep.subr.bf16.mxu0 0
    %1780 = vmatpush1.bf16.msra.mxu0 0
    %1781 = vmatprep.subr.bf16.mxu0 0
    %1782 = vmatpush1.bf16.msra.mxu0 0
    %1783 = vmatprep.mubr.bf16.mxu0 0
    %1784 = vmatmul.mubr.bf16.gmra.mrb[0].mxu0 %v1697
    %v1785 = vpop.f32.mrb[0].mxu0
    %v1786 = vadd.f32 0.0, %v1785
    %v1787 = vpop.f32.mrb[0].mxu0
    %v1788 = vpop.f32.mrb[0].mxu0
    %v1789 = vadd.f32 0.0, %v1788
    %v1790 = vpop.f32.mrb[0].mxu0
    %1791 = vmatprep.mubr.bf16.mxu0 0
    %1792 = vmatmul.mubr.bf16.gmra.mrb[0].mxu0 %v1699
    %v1793 = vpop.f32.mrb[0].mxu0
    %v1794 = vpop.f32.mrb[0].mxu0
    %v1795 = vpop.f32.mrb[0].mxu0
    %v1796 = vadd.f32 0.0, %v1795
    %v1797 = vpop.f32.mrb[0].mxu0
    %1798 = vmatprep.mubr.bf16.mxu0 0
    %1799 = vmatmul.mubr.bf16.gmra.mrb[0].mxu0 %v1698
    %v1800 = vpop.f32.mrb[0].mxu0
    %v1801 = vadd.f32 0.0, %v1800
    %v1802 = vpop.f32.mrb[0].mxu0
    %v1803 = vpop.f32.mrb[0].mxu0
    %v1804 = vpop.f32.mrb[0].mxu0
    %1805 = vdwg.mxu0
    %v1806 = vadd.f32 %v1669, %v1786
    %v1807 = vadd.f32 %v1670, %v1789
    %v1808 = vadd.f32 %v1671, %v1796
    %v1809 = vadd.f32 %v1672, %v1801
    %v1810 = vld [vmem:[%s4 + $0x6] sm:$0x1]
    %v1811 = vlaneseq
    %v1812 = vshrl.u32 %v1811, 7
    %v1813 = vsub.s32 0, %v1812
    %v1814 = vrot.slane %v1810, %v1813
    %v1815 = vmul.f32 %v1806, %v1814
    %v1816 = vmul.f32 %v1807, %v1814
    %v1817 = vmul.f32 %v1808, %v1814
    %v1818 = vmul.f32 %v1809, %v1814
    %v1819 = vld [vmem:[%s4 + $0x7] sm:$0x1]
    %v1820 = vlaneseq
    %v1821 = vshrl.u32 %v1820, 7
    %v1822 = vsub.s32 0, %v1821
    %v1823 = vrot.slane %v1819, %v1822
    %v1824 = vadd.f32 %v1815, %v1823
    %v1825 = vadd.f32 %v1816, %v1823
    %v1826 = vadd.f32 %v1817, %v1823
    %v1827 = vadd.f32 %v1818, %v1823
    %v1828 = vmul.f32 %v1824, 0.2
    %v1829 = vmul.f32 %v1825, 0.2
    %v1830 = vmul.f32 %v1826, 0.2
    %v1831 = vmul.f32 %v1827, 0.2
    %v1832 = vmax.f32 %v1824, %v1828
    %v1833 = vmax.f32 %v1825, %v1829
    %v1834 = vmax.f32 %v1826, %v1830
    %v1835 = vmax.f32 %v1827, %v1831
    %v1836 = vpack.c.bf16 %v676, %v675
    %v1838 = vunpack.c.l.b16 %v1836
    %v1839 = vunpack.c.h.b16 %v1836
    %v1840 = vpack.c.b16 %v1838, %v1838
    %v1841 = vpack.c.b16 %v1839, %v1839
    %1844 = vst [vmem:[#allocation4 + $0xc] sm:$0xf] %v1840
    %1845 = vst [vmem:[#allocation4 + $0x18] sm:$0xf] %v1841
    %v1846 = vpack.c.bf16 %v1169, %v1168
    %v1848 = vunpack.c.l.b16 %v1846
    %v1849 = vunpack.c.h.b16 %v1846
    %v1850 = vpack.c.b16 %v1848, %v1848
    %v1851 = vpack.c.b16 %v1849, %v1849
    %1854 = vst [vmem:[#allocation4 + $0x10] sm:$0xf] %v1850
    %1855 = vst [vmem:[#allocation4 + $0x1c] sm:$0xf] %v1851
    %v1856 = vpack.c.bf16 %v1833, %v1832
    %v1858 = vunpack.c.l.b16 %v1856
    %v1859 = vunpack.c.h.b16 %v1856
    %v1860 = vpack.c.b16 %v1858, %v1858
    %v1861 = vpack.c.b16 %v1859, %v1859
    %1864 = vst [vmem:[#allocation4 + $0x14] sm:$0xf] %v1860
    %1865 = vst [vmem:[#allocation4 + $0x20] sm:$0xf] %v1861
    %v1866 = vpack.c.bf16 %v678, %v677
    %v1868 = vunpack.c.l.b16 %v1866
    %v1869 = vunpack.c.h.b16 %v1866
    %v1870 = vpack.c.b16 %v1868, %v1868
    %v1871 = vpack.c.b16 %v1869, %v1869
    %1874 = vst [vmem:[#allocation4 + $0x30] sm:$0xf] %v1870
    %1875 = vst [vmem:[#allocation4 + $0x3c] sm:$0xf] %v1871
    %v1876 = vpack.c.bf16 %v1171, %v1170
    %v1878 = vunpack.c.l.b16 %v1876
    %v1879 = vunpack.c.h.b16 %v1876
    %v1880 = vpack.c.b16 %v1878, %v1878
    %v1881 = vpack.c.b16 %v1879, %v1879
    %1884 = vst [vmem:[#allocation4 + $0x34] sm:$0xf] %v1880
    %1885 = vst [vmem:[#allocation4 + $0x40] sm:$0xf] %v1881
    %v1886 = vpack.c.bf16 %v1835, %v1834
    %v1888 = vunpack.c.l.b16 %v1886
    %v1889 = vunpack.c.h.b16 %v1886
    %v1890 = vpack.c.b16 %v1888, %v1888
    %v1891 = vpack.c.b16 %v1889, %v1889
    %1894 = vst [vmem:[#allocation4 + $0x38] sm:$0xf] %v1890
    %1895 = vst [vmem:[#allocation4 + $0x44] sm:$0xf] %v1891
    %v1896 = vld [vmem:[#allocation4] sm:$0x88]
    %v1897 = vld [vmem:[#allocation4 + $0x8] sm:$0x8]
    %v1898 = vld [vmem:[#allocation4 + $0xc] sm:$0xff]
    %v1899 = vld [vmem:[#allocation4 + $0x14] sm:$0xf]
    %v1900 = vld [vmem:[#allocation4 + $0x18] sm:$0xff]
    %v1901 = vld [vmem:[#allocation4 + $0x20] sm:$0xf]
    %v1902 = vld [vmem:[#allocation4 + $0x24] sm:$0xff]
    %v1903 = vld [vmem:[#allocation4 + $0x2c] sm:$0xf]
    %v1904 = vld [vmem:[#allocation4 + $0x30] sm:$0xff]
    %v1905 = vld [vmem:[#allocation4 + $0x38] sm:$0xf]
    %v1906 = vld [vmem:[#allocation4 + $0x3c] sm:$0xff]
    %v1907 = vld [vmem:[#allocation4 + $0x44] sm:$0xf]
    %v1908 = vld [vmem:[#allocation7] sm:$0xf]
    %v1909 = vld [vmem:[#allocation7 + $0x4] sm:$0xf]
    %v1910 = vld [vmem:[#allocation7 + $0x8] sm:$0xf]
    %v1911 = vld [vmem:[#allocation7 + $0xc] sm:$0xf]
    %v1912 = vld [vmem:[#allocation7 + $0x10] sm:$0xf]
    %v1913 = vld [vmem:[#allocation7 + $0x14] sm:$0xf]
    %v1914 = vld [vmem:[#allocation7 + $0x18] sm:$0xf]
    %v1915 = vld [vmem:[#allocation7 + $0x1c] sm:$0xf]
    %v1916 = vld [vmem:[#allocation7 + $0x20] sm:$0xf]
    %v1917 = vld [vmem:[#allocation7 + $0x24] sm:$0xf]
    %v1918 = vld [vmem:[#allocation7 + $0x28] sm:$0xf]
    %v1919 = vld [vmem:[#allocation7 + $0x2c] sm:$0xf]
    %v1920 = vld [vmem:[#allocation7 + $0x30] sm:$0xf]
    %v1921 = vld [vmem:[#allocation7 + $0x34] sm:$0xf]
    %v1922 = vld [vmem:[#allocation7 + $0x38] sm:$0xf]
    %v1923 = vld [vmem:[#allocation7 + $0x3c] sm:$0xf]
    %v1924 = vld [vmem:[#allocation7 + $0x40] sm:$0xf]
    %v1925 = vld [vmem:[#allocation7 + $0x44] sm:$0xf]
    %v1926 = vld [vmem:[#allocation7 + $0x48] sm:$0xf]
    %v1927 = vld [vmem:[#allocation7 + $0x4c] sm:$0xf]
    %v1928 = vld [vmem:[#allocation7 + $0x50] sm:$0xf]
    %v1929 = vld [vmem:[#allocation7 + $0x54] sm:$0xf]
    %v1930 = vld [vmem:[#allocation7 + $0x58] sm:$0xf]
    %v1931 = vld [vmem:[#allocation7 + $0x5c] sm:$0xf]
    %v1932 = vld [vmem:[#allocation7 + $0x60] sm:$0xf]
    %v1933 = vld [vmem:[#allocation7 + $0x64] sm:$0xf]
    %v1934 = vld [vmem:[#allocation7 + $0x68] sm:$0xf]
    %v1935 = vld [vmem:[#allocation7 + $0x6c] sm:$0xf]
    %v1936 = vld [vmem:[#allocation7 + $0x70] sm:$0xf]
    %v1937 = vld [vmem:[#allocation7 + $0x74] sm:$0xf]
    %v1938 = vld [vmem:[#allocation7 + $0x78] sm:$0xf]
    %v1939 = vld [vmem:[#allocation7 + $0x7c] sm:$0xf]
    %v1940 = vld [vmem:[#allocation7 + $0x80] sm:$0xf]
    %v1941 = vld [vmem:[#allocation7 + $0x84] sm:$0xf]
    %v1942 = vld [vmem:[#allocation7 + $0x88] sm:$0xf]
    %v1943 = vld [vmem:[#allocation7 + $0x8c] sm:$0xf]
    %v1944 = vld [vmem:[#allocation7 + $0x90] sm:$0xf]
    %v1945 = vld [vmem:[#allocation7 + $0x94] sm:$0xf]
    %v1946 = vld [vmem:[#allocation7 + $0x98] sm:$0xf]
    %v1947 = vld [vmem:[#allocation7 + $0x9c] sm:$0xf]
    %v1948 = vld [vmem:[#allocation7 + $0xa0] sm:$0xf]
    %v1949 = vld [vmem:[#allocation7 + $0xa4] sm:$0xf]
    %v1950 = vld [vmem:[#allocation7 + $0xa8] sm:$0xf]
    %v1951 = vld [vmem:[#allocation7 + $0xac] sm:$0xf]
    %v1952 = vld [vmem:[#allocation7 + $0xb0] sm:$0xf]
    %v1953 = vld [vmem:[#allocation7 + $0xb4] sm:$0xf]
    %v1954 = vld [vmem:[#allocation7 + $0xb8] sm:$0xf]
    %v1955 = vld [vmem:[#allocation7 + $0xbc] sm:$0xf]
    %s1956 = scalar_lea.vmem [#allocation7], 192
    %v1957 = vld [vmem:[%s1956] sm:$0xf]
    %v1958 = vld [vmem:[%s1956 + $0x4] sm:$0xf]
    %v1959 = vld [vmem:[%s1956 + $0x8] sm:$0xf]
    %v1960 = vld [vmem:[%s1956 + $0xc] sm:$0xf]
    %v1961 = vld [vmem:[%s1956 + $0x10] sm:$0xf]
    %v1962 = vld [vmem:[%s1956 + $0x14] sm:$0xf]
    %v1963 = vld [vmem:[%s1956 + $0x18] sm:$0xf]
    %v1964 = vld [vmem:[%s1956 + $0x1c] sm:$0xf]
    %v1965 = vld [vmem:[%s1956 + $0x20] sm:$0xf]
    %v1966 = vld [vmem:[%s1956 + $0x24] sm:$0xf]
    %v1967 = vld [vmem:[%s1956 + $0x28] sm:$0xf]
    %v1968 = vld [vmem:[%s1956 + $0x2c] sm:$0xf]
    %v1969 = vld [vmem:[%s1956 + $0x30] sm:$0xf]
    %v1970 = vld [vmem:[%s1956 + $0x34] sm:$0xf]
    %v1971 = vld [vmem:[%s1956 + $0x38] sm:$0xf]
    %v1972 = vld [vmem:[%s1956 + $0x3c] sm:$0xf]
    %v1973 = vld [vmem:[%s1956 + $0x40] sm:$0xf]
    %v1974 = vld [vmem:[%s1956 + $0x44] sm:$0xf]
    %v1975 = vld [vmem:[%s1956 + $0x48] sm:$0xf]
    %v1976 = vld [vmem:[%s1956 + $0x4c] sm:$0xf]
    %v1977 = vld [vmem:[%s1956 + $0x50] sm:$0xf]
    %v1978 = vld [vmem:[%s1956 + $0x54] sm:$0xf]
    %v1979 = vld [vmem:[%s1956 + $0x58] sm:$0xf]
    %v1980 = vld [vmem:[%s1956 + $0x5c] sm:$0xf]
    %v1981 = vld [vmem:[%s1956 + $0x60] sm:$0xf]
    %v1982 = vld [vmem:[%s1956 + $0x64] sm:$0xf]
    %v1983 = vld [vmem:[%s1956 + $0x68] sm:$0xf]
    %v1984 = vld [vmem:[%s1956 + $0x6c] sm:$0xf]
    %v1985 = vld [vmem:[%s1956 + $0x70] sm:$0xf]
    %v1986 = vld [vmem:[%s1956 + $0x74] sm:$0xf]
    %v1987 = vld [vmem:[%s1956 + $0x78] sm:$0xf]
    %v1988 = vld [vmem:[%s1956 + $0x7c] sm:$0xf]
    %v1989 = vld [vmem:[%s1956 + $0x80] sm:$0xf]
    %v1990 = vld [vmem:[%s1956 + $0x84] sm:$0xf]
    %v1991 = vld [vmem:[%s1956 + $0x88] sm:$0xf]
    %v1992 = vld [vmem:[%s1956 + $0x8c] sm:$0xf]
    %v1993 = vld [vmem:[%s1956 + $0x90] sm:$0xf]
    %v1994 = vld [vmem:[%s1956 + $0x94] sm:$0xf]
    %v1995 = vld [vmem:[%s1956 + $0x98] sm:$0xf]
    %v1996 = vld [vmem:[%s1956 + $0x9c] sm:$0xf]
    %v1997 = vld [vmem:[%s1956 + $0xa0] sm:$0xf]
    %v1998 = vld [vmem:[%s1956 + $0xa4] sm:$0xf]
    %v1999 = vld [vmem:[%s1956 + $0xa8] sm:$0xf]
    %v2000 = vld [vmem:[%s1956 + $0xac] sm:$0xf]
    %v2001 = vld [vmem:[%s1956 + $0xb0] sm:$0xf]
    %v2002 = vld [vmem:[%s1956 + $0xb4] sm:$0xf]
    %v2003 = vld [vmem:[%s1956 + $0xb8] sm:$0xf]
    %v2004 = vld [vmem:[%s1956 + $0xbc] sm:$0xf]
    %v2015 = vunpack.c.l.b16 %v1898
    %v2016 = vunpack.c.h.b16 %v1898
    %v2017 = vunpack.c.l.b16 %v1899
    %v2018 = vunpack.c.l.b16 %v1900
    %v2019 = vunpack.c.h.b16 %v1900
    %v2020 = vunpack.c.l.b16 %v1901
    %v2021 = vunpack.c.l.b16 %v1902
    %v2022 = vunpack.c.h.b16 %v1902
    %v2023 = vunpack.c.l.b16 %v1903
    %v2024 = vunpack.c.l.b16 %v1904
    %v2025 = vunpack.c.h.b16 %v1904
    %v2026 = vunpack.c.l.b16 %v1905
    %v2027 = vunpack.c.l.b16 %v1906
    %v2028 = vunpack.c.h.b16 %v1906
    %v2029 = vunpack.c.l.b16 %v1907
    %v2030 = vpack.c.b16 %v2018, %v2015
    %v2031 = vpack.c.b16 %v2019, %v2016
    %v2032 = vpack.c.b16 %v2020, %v2017
    %v2033 = vpack.c.b16 %v2024, %v2021
    %v2034 = vpack.c.b16 %v2025, %v2022
    %v2035 = vpack.c.b16 %v2026, %v2023
    %v2036 = vpack.c.b16 %v2027, %v2027
    %v2037 = vpack.c.b16 %v2028, %v2028
    %v2038 = vpack.c.b16 %v2029, %v2029
    %v2096 = vunpack.c.l.b16 %v1957
    %v2097 = vunpack.c.l.b16 %v1958
    %v2098 = vunpack.c.l.b16 %v1959
    %v2099 = vunpack.c.l.b16 %v1960
    %v2100 = vunpack.c.l.b16 %v1961
    %v2101 = vunpack.c.l.b16 %v1962
    %v2102 = vunpack.c.l.b16 %v1963
    %v2103 = vunpack.c.l.b16 %v1964
    %v2104 = vunpack.c.l.b16 %v1965
    %v2105 = vunpack.c.l.b16 %v1966
    %v2106 = vunpack.c.l.b16 %v1967
    %v2107 = vunpack.c.l.b16 %v1968
    %v2108 = vunpack.c.l.b16 %v1969
    %v2109 = vunpack.c.l.b16 %v1970
    %v2110 = vunpack.c.l.b16 %v1971
    %v2111 = vunpack.c.l.b16 %v1972
    %v2112 = vunpack.c.l.b16 %v1973
    %v2113 = vunpack.c.l.b16 %v1974
    %v2114 = vunpack.c.l.b16 %v1975
    %v2115 = vunpack.c.l.b16 %v1976
    %v2116 = vunpack.c.l.b16 %v1977
    %v2117 = vunpack.c.l.b16 %v1978
    %v2118 = vunpack.c.l.b16 %v1979
    %v2119 = vunpack.c.l.b16 %v1980
    %v2120 = vunpack.c.l.b16 %v1981
    %v2121 = vunpack.c.l.b16 %v1982
    %v2122 = vunpack.c.l.b16 %v1983
    %v2123 = vunpack.c.l.b16 %v1984
    %v2124 = vunpack.c.l.b16 %v1985
    %v2125 = vunpack.c.l.b16 %v1986
    %v2126 = vunpack.c.l.b16 %v1987
    %v2127 = vunpack.c.l.b16 %v1988
    %v2128 = vunpack.c.l.b16 %v1989
    %v2129 = vunpack.c.l.b16 %v1990
    %v2130 = vunpack.c.l.b16 %v1991
    %v2131 = vunpack.c.l.b16 %v1992
    %v2132 = vunpack.c.l.b16 %v1993
    %v2133 = vunpack.c.l.b16 %v1994
    %v2134 = vunpack.c.l.b16 %v1995
    %v2135 = vunpack.c.l.b16 %v1996
    %v2136 = vunpack.c.l.b16 %v1997
    %v2137 = vunpack.c.l.b16 %v1998
    %v2138 = vunpack.c.l.b16 %v1999
    %v2139 = vunpack.c.l.b16 %v2000
    %v2140 = vunpack.c.l.b16 %v2001
    %v2141 = vunpack.c.l.b16 %v2002
    %v2142 = vunpack.c.l.b16 %v2003
    %v2143 = vunpack.c.l.b16 %v2004
    %v2144 = vpack.c.b16 %v2097, %v2096
    %v2145 = vpack.c.b16 %v2099, %v2098
    %v2146 = vpack.c.b16 %v2101, %v2100
    %v2147 = vpack.c.b16 %v2103, %v2102
    %v2148 = vpack.c.b16 %v2105, %v2104
    %v2149 = vpack.c.b16 %v2107, %v2106
    %v2150 = vpack.c.b16 %v2109, %v2108
    %v2151 = vpack.c.b16 %v2111, %v2110
    %v2152 = vpack.c.b16 %v2113, %v2112
    %v2153 = vpack.c.b16 %v2115, %v2114
    %v2154 = vpack.c.b16 %v2117, %v2116
    %v2155 = vpack.c.b16 %v2119, %v2118
    %v2156 = vpack.c.b16 %v2121, %v2120
    %v2157 = vpack.c.b16 %v2123, %v2122
    %v2158 = vpack.c.b16 %v2125, %v2124
    %v2159 = vpack.c.b16 %v2127, %v2126
    %v2160 = vpack.c.b16 %v2129, %v2128
    %v2161 = vpack.c.b16 %v2131, %v2130
    %v2162 = vpack.c.b16 %v2133, %v2132
    %v2163 = vpack.c.b16 %v2135, %v2134
    %v2164 = vpack.c.b16 %v2137, %v2136
    %v2165 = vpack.c.b16 %v2139, %v2138
    %v2166 = vpack.c.b16 %v2141, %v2140
    %v2167 = vpack.c.b16 %v2143, %v2142
    %2192 = vmatprep.subr.bf16.mxu0 0
    %2193 = vmatpush1.bf16.msra.mxu0 %v2144
    %2194 = vmatprep.subr.bf16.mxu0 0
    %2195 = vmatpush1.bf16.msra.mxu0 %v2145
    %2196 = vmatprep.subr.bf16.mxu0 0
    %2197 = vmatpush1.bf16.msra.mxu0 %v2146
    %2198 = vmatprep.subr.bf16.mxu0 0
    %2199 = vmatpush1.bf16.msra.mxu0 %v2147
    %2200 = vmatprep.subr.bf16.mxu0 0
    %2201 = vmatpush1.bf16.msra.mxu0 %v2148
    %2202 = vmatprep.subr.bf16.mxu0 0
    %2203 = vmatpush1.bf16.msra.mxu0 %v2149
    %2204 = vmatprep.subr.bf16.mxu0 0
    %2205 = vmatpush1.bf16.msra.mxu0 %v2150
    %2206 = vmatprep.subr.bf16.mxu0 0
    %2207 = vmatpush1.bf16.msra.mxu0 %v2151
    %2208 = vmatprep.subr.bf16.mxu0 0
    %2209 = vmatpush1.bf16.msra.mxu0 %v2152
    %2210 = vmatprep.subr.bf16.mxu0 0
    %2211 = vmatpush1.bf16.msra.mxu0 %v2153
    %2212 = vmatprep.subr.bf16.mxu0 0
    %2213 = vmatpush1.bf16.msra.mxu0 %v2154
    %2214 = vmatprep.subr.bf16.mxu0 0
    %2215 = vmatpush1.bf16.msra.mxu0 %v2155
    %2216 = vmatprep.subr.bf16.mxu0 0
    %2217 = vmatpush1.bf16.msra.mxu0 %v2156
    %2218 = vmatprep.subr.bf16.mxu0 0
    %2219 = vmatpush1.bf16.msra.mxu0 %v2157
    %2220 = vmatprep.subr.bf16.mxu0 0
    %2221 = vmatpush1.bf16.msra.mxu0 %v2158
    %2222 = vmatprep.subr.bf16.mxu0 0
    %2223 = vmatpush1.bf16.msra.mxu0 %v2159
    %2224 = vmatprep.mubr.bf16.mxu0 %v2031
    %2225 = vmatmul.mubr.bf16.gmra.mrb[0].mxu0 %v2030
    %v2226 = vpop.f32.mrb[0].mxu0
    %v2227 = vadd.f32 0.0, %v2226
    %v2228 = vpop.f32.mrb[0].mxu0
    %v2229 = vpop.f32.mrb[0].mxu0
    %v2230 = vadd.f32 0.0, %v2229
    %v2231 = vpop.f32.mrb[0].mxu0
    %2232 = vmatprep.mubr.bf16.mxu0 %v2034
    %2233 = vmatmul.mubr.bf16.gmra.mrb[0].mxu0 %v2033
    %v2234 = vpop.f32.mrb[0].mxu0
    %v2235 = vpop.f32.mrb[0].mxu0
    %v2236 = vpop.f32.mrb[0].mxu0
    %v2237 = vadd.f32 0.0, %v2236
    %v2238 = vpop.f32.mrb[0].mxu0
    %2239 = vmatprep.mubr.bf16.mxu0 %v2037
    %2240 = vmatmul.mubr.bf16.gmra.mrb[0].mxu0 %v2036
    %v2241 = vpop.f32.mrb[0].mxu0
    %v2242 = vadd.f32 0.0, %v2241
    %v2243 = vpop.f32.mrb[0].mxu0
    %v2244 = vpop.f32.mrb[0].mxu0
    %v2245 = vpop.f32.mrb[0].mxu0
    %2246 = vdwg.mxu0
    %2247 = vmatprep.subr.bf16.mxu0 0
    %2248 = vmatpush1.bf16.msra.mxu0 %v2160
    %2249 = vmatprep.subr.bf16.mxu0 0
    %2250 = vmatpush1.bf16.msra.mxu0 %v2161
    %2251 = vmatprep.subr.bf16.mxu0 0
    %2252 = vmatpush1.bf16.msra.mxu0 %v2162
    %2253 = vmatprep.subr.bf16.mxu0 0
    %2254 = vmatpush1.bf16.msra.mxu0 %v2163
    %2255 = vmatprep.subr.bf16.mxu0 0
    %2256 = vmatpush1.bf16.msra.mxu0 %v2164
    %2257 = vmatprep.subr.bf16.mxu0 0
    %2258 = vmatpush1.bf16.msra.mxu0 %v2165
    %2259 = vmatprep.subr.bf16.mxu0 0
    %2260 = vmatpush1.bf16.msra.mxu0 %v2166
    %2261 = vmatprep.subr.bf16.mxu0 0
    %2262 = vmatpush1.bf16.msra.mxu0 %v2167
    %2263 = vmatprep.subr.bf16.mxu0 0
    %2264 = vmatpush1.bf16.msra.mxu0 0
    %2265 = vmatprep.subr.bf16.mxu0 0
    %2266 = vmatpush1.bf16.msra.mxu0 0
    %2267 = vmatprep.subr.bf16.mxu0 0
    %2268 = vmatpush1.bf16.msra.mxu0 0
    %2269 = vmatprep.subr.bf16.mxu0 0
    %2270 = vmatpush1.bf16.msra.mxu0 0
    %2271 = vmatprep.subr.bf16.mxu0 0
    %2272 = vmatpush1.bf16.msra.mxu0 0
    %2273 = vmatprep.subr.bf16.mxu0 0
    %2274 = vmatpush1.bf16.msra.mxu0 0
    %2275 = vmatprep.subr.bf16.mxu0 0
    %2276 = vmatpush1.bf16.msra.mxu0 0
    %2277 = vmatprep.subr.bf16.mxu0 0
    %2278 = vmatpush1.bf16.msra.mxu0 0
    %2279 = vmatprep.mubr.bf16.mxu0 0
    %2280 = vmatmul.mubr.bf16.gmra.mrb[0].mxu0 %v2032
    %v2281 = vpop.f32.mrb[0].mxu0
    %v2282 = vadd.f32 %v2227, %v2281
    %v2283 = vpop.f32.mrb[0].mxu0
    %v2284 = vpop.f32.mrb[0].mxu0
    %v2285 = vadd.f32 %v2230, %v2284
    %v2286 = vpop.f32.mrb[0].mxu0
    %2287 = vmatprep.mubr.bf16.mxu0 0
    %2288 = vmatmul.mubr.bf16.gmra.mrb[0].mxu0 %v2035
    %v2289 = vpop.f32.mrb[0].mxu0
    %v2290 = vpop.f32.mrb[0].mxu0
    %v2291 = vpop.f32.mrb[0].mxu0
    %v2292 = vadd.f32 %v2237, %v2291
    %v2293 = vpop.f32.mrb[0].mxu0
    %2294 = vmatprep.mubr.bf16.mxu0 0
    %2295 = vmatmul.mubr.bf16.gmra.mrb[0].mxu0 %v2038
    %v2296 = vpop.f32.mrb[0].mxu0
    %v2297 = vadd.f32 %v2242, %v2296
    %v2298 = vpop.f32.mrb[0].mxu0
    %v2299 = vpop.f32.mrb[0].mxu0
    %v2300 = vpop.f32.mrb[0].mxu0
    %2301 = vdwg.mxu0
    %v2304 = vunpack.c.l.b16 %v1896
    %v2305 = vunpack.c.h.b16 %v1896
    %v2306 = vunpack.c.l.b16 %v1897
    %v2307 = vpack.c.b16 %v2015, %v2304
    %v2308 = vpack.c.b16 %v2016, %v2305
    %v2309 = vpack.c.b16 %v2017, %v2306
    %v2310 = vpack.c.b16 %v2021, %v2018
    %v2311 = vpack.c.b16 %v2022, %v2019
    %v2312 = vpack.c.b16 %v2023, %v2020
    %v2313 = vpack.c.b16 %v2027, %v2024
    %v2314 = vpack.c.b16 %v2028, %v2025
    %v2315 = vpack.c.b16 %v2029, %v2026
    %v2317 = vshrl.u32 %v2307, 16
    %v2319 = vrot.slane %v2317, 3
    %v2320 = vshll.u32 %v2307, 16
    %v2322 = vrot.slane %v2320, 4
    %v2323 = vor.u32 %v2319, %v2322
    %v2325 = vshrl.u32 %v2310, 16
    %v2327 = vrot.slane %v2325, 3
    %v2328 = vshll.u32 %v2310, 16
    %v2330 = vrot.slane %v2328, 4
    %v2331 = vor.u32 %v2327, %v2330
    %v2332 = vsel %vm218, %v2323, %v2331
    %v2334 = vshrl.u32 %v2308, 16
    %v2336 = vrot.slane %v2334, 3
    %v2337 = vshll.u32 %v2308, 16
    %v2339 = vrot.slane %v2337, 4
    %v2340 = vor.u32 %v2336, %v2339
    %v2342 = vshrl.u32 %v2311, 16
    %v2344 = vrot.slane %v2342, 3
    %v2345 = vshll.u32 %v2311, 16
    %v2347 = vrot.slane %v2345, 4
    %v2348 = vor.u32 %v2344, %v2347
    %v2349 = vsel %vm218, %v2340, %v2348
    %v2351 = vshrl.u32 %v2309, 16
    %v2353 = vrot.slane %v2351, 3
    %v2354 = vshll.u32 %v2309, 16
    %v2356 = vrot.slane %v2354, 4
    %v2357 = vor.u32 %v2353, %v2356
    %v2359 = vshrl.u32 %v2312, 16
    %v2361 = vrot.slane %v2359, 3
    %v2362 = vshll.u32 %v2312, 16
    %v2364 = vrot.slane %v2362, 4
    %v2365 = vor.u32 %v2361, %v2364
    %v2366 = vsel %vm218, %v2357, %v2365
    %v2368 = vshrl.u32 %v2313, 16
    %v2370 = vrot.slane %v2368, 3
    %v2371 = vshll.u32 %v2313, 16
    %v2373 = vrot.slane %v2371, 4
    %v2374 = vor.u32 %v2370, %v2373
    %v2375 = vsel %vm218, %v2331, %v2374
    %v2377 = vshrl.u32 %v2314, 16
    %v2379 = vrot.slane %v2377, 3
    %v2380 = vshll.u32 %v2314, 16
    %v2382 = vrot.slane %v2380, 4
    %v2383 = vor.u32 %v2379, %v2382
    %v2384 = vsel %vm218, %v2348, %v2383
    %v2386 = vshrl.u32 %v2315, 16
    %v2388 = vrot.slane %v2386, 3
    %v2389 = vshll.u32 %v2315, 16
    %v2391 = vrot.slane %v2389, 4
    %v2392 = vor.u32 %v2388, %v2391
    %v2393 = vsel %vm218, %v2365, %v2392
    %v2451 = vunpack.c.l.b16 %v1908
    %v2452 = vunpack.c.l.b16 %v1909
    %v2453 = vunpack.c.l.b16 %v1910
    %v2454 = vunpack.c.l.b16 %v1911
    %v2455 = vunpack.c.l.b16 %v1912
    %v2456 = vunpack.c.l.b16 %v1913
    %v2457 = vunpack.c.l.b16 %v1914
    %v2458 = vunpack.c.l.b16 %v1915
    %v2459 = vunpack.c.l.b16 %v1916
    %v2460 = vunpack.c.l.b16 %v1917
    %v2461 = vunpack.c.l.b16 %v1918
    %v2462 = vunpack.c.l.b16 %v1919
    %v2463 = vunpack.c.l.b16 %v1920
    %v2464 = vunpack.c.l.b16 %v1921
    %v2465 = vunpack.c.l.b16 %v1922
    %v2466 = vunpack.c.l.b16 %v1923
    %v2467 = vunpack.c.l.b16 %v1924
    %v2468 = vunpack.c.l.b16 %v1925
    %v2469 = vunpack.c.l.b16 %v1926
    %v2470 = vunpack.c.l.b16 %v1927
    %v2471 = vunpack.c.l.b16 %v1928
    %v2472 = vunpack.c.l.b16 %v1929
    %v2473 = vunpack.c.l.b16 %v1930
    %v2474 = vunpack.c.l.b16 %v1931
    %v2475 = vunpack.c.l.b16 %v1932
    %v2476 = vunpack.c.l.b16 %v1933
    %v2477 = vunpack.c.l.b16 %v1934
    %v2478 = vunpack.c.l.b16 %v1935
    %v2479 = vunpack.c.l.b16 %v1936
    %v2480 = vunpack.c.l.b16 %v1937
    %v2481 = vunpack.c.l.b16 %v1938
    %v2482 = vunpack.c.l.b16 %v1939
    %v2483 = vunpack.c.l.b16 %v1940
    %v2484 = vunpack.c.l.b16 %v1941
    %v2485 = vunpack.c.l.b16 %v1942
    %v2486 = vunpack.c.l.b16 %v1943
    %v2487 = vunpack.c.l.b16 %v1944
    %v2488 = vunpack.c.l.b16 %v1945
    %v2489 = vunpack.c.l.b16 %v1946
    %v2490 = vunpack.c.l.b16 %v1947
    %v2491 = vunpack.c.l.b16 %v1948
    %v2492 = vunpack.c.l.b16 %v1949
    %v2493 = vunpack.c.l.b16 %v1950
    %v2494 = vunpack.c.l.b16 %v1951
    %v2495 = vunpack.c.l.b16 %v1952
    %v2496 = vunpack.c.l.b16 %v1953
    %v2497 = vunpack.c.l.b16 %v1954
    %v2498 = vunpack.c.l.b16 %v1955
    %v2499 = vpack.c.b16 %v2452, %v2451
    %v2500 = vpack.c.b16 %v2454, %v2453
    %v2501 = vpack.c.b16 %v2456, %v2455
    %v2502 = vpack.c.b16 %v2458, %v2457
    %v2503 = vpack.c.b16 %v2460, %v2459
    %v2504 = vpack.c.b16 %v2462, %v2461
    %v2505 = vpack.c.b16 %v2464, %v2463
    %v2506 = vpack.c.b16 %v2466, %v2465
    %v2507 = vpack.c.b16 %v2468, %v2467
    %v2508 = vpack.c.b16 %v2470, %v2469
    %v2509 = vpack.c.b16 %v2472, %v2471
    %v2510 = vpack.c.b16 %v2474, %v2473
    %v2511 = vpack.c.b16 %v2476, %v2475
    %v2512 = vpack.c.b16 %v2478, %v2477
    %v2513 = vpack.c.b16 %v2480, %v2479
    %v2514 = vpack.c.b16 %v2482, %v2481
    %v2515 = vpack.c.b16 %v2484, %v2483
    %v2516 = vpack.c.b16 %v2486, %v2485
    %v2517 = vpack.c.b16 %v2488, %v2487
    %v2518 = vpack.c.b16 %v2490, %v2489
    %v2519 = vpack.c.b16 %v2492, %v2491
    %v2520 = vpack.c.b16 %v2494, %v2493
    %v2521 = vpack.c.b16 %v2496, %v2495
    %v2522 = vpack.c.b16 %v2498, %v2497
    %2547 = vmatprep.subr.bf16.mxu0 0
    %2548 = vmatpush1.bf16.msra.mxu0 %v2499
    %2549 = vmatprep.subr.bf16.mxu0 0
    %2550 = vmatpush1.bf16.msra.mxu0 %v2500
    %2551 = vmatprep.subr.bf16.mxu0 0
    %2552 = vmatpush1.bf16.msra.mxu0 %v2501
    %2553 = vmatprep.subr.bf16.mxu0 0
    %2554 = vmatpush1.bf16.msra.mxu0 %v2502
    %2555 = vmatprep.subr.bf16.mxu0 0
    %2556 = vmatpush1.bf16.msra.mxu0 %v2503
    %2557 = vmatprep.subr.bf16.mxu0 0
    %2558 = vmatpush1.bf16.msra.mxu0 %v2504
    %2559 = vmatprep.subr.bf16.mxu0 0
    %2560 = vmatpush1.bf16.msra.mxu0 %v2505
    %2561 = vmatprep.subr.bf16.mxu0 0
    %2562 = vmatpush1.bf16.msra.mxu0 %v2506
    %2563 = vmatprep.subr.bf16.mxu0 0
    %2564 = vmatpush1.bf16.msra.mxu0 %v2507
    %2565 = vmatprep.subr.bf16.mxu0 0
    %2566 = vmatpush1.bf16.msra.mxu0 %v2508
    %2567 = vmatprep.subr.bf16.mxu0 0
    %2568 = vmatpush1.bf16.msra.mxu0 %v2509
    %2569 = vmatprep.subr.bf16.mxu0 0
    %2570 = vmatpush1.bf16.msra.mxu0 %v2510
    %2571 = vmatprep.subr.bf16.mxu0 0
    %2572 = vmatpush1.bf16.msra.mxu0 %v2511
    %2573 = vmatprep.subr.bf16.mxu0 0
    %2574 = vmatpush1.bf16.msra.mxu0 %v2512
    %2575 = vmatprep.subr.bf16.mxu0 0
    %2576 = vmatpush1.bf16.msra.mxu0 %v2513
    %2577 = vmatprep.subr.bf16.mxu0 0
    %2578 = vmatpush1.bf16.msra.mxu0 %v2514
    %2579 = vmatprep.mubr.bf16.mxu0 %v2349
    %2580 = vmatmul.mubr.bf16.gmra.mrb[0].mxu0 %v2332
    %v2581 = vpop.f32.mrb[0].mxu0
    %v2582 = vadd.f32 %v2282, %v2581
    %v2583 = vpop.f32.mrb[0].mxu0
    %v2584 = vpop.f32.mrb[0].mxu0
    %v2585 = vadd.f32 %v2285, %v2584
    %v2586 = vpop.f32.mrb[0].mxu0
    %2587 = vmatprep.mubr.bf16.mxu0 %v2384
    %2588 = vmatmul.mubr.bf16.gmra.mrb[0].mxu0 %v2375
    %v2589 = vpop.f32.mrb[0].mxu0
    %v2590 = vpop.f32.mrb[0].mxu0
    %v2591 = vpop.f32.mrb[0].mxu0
    %v2592 = vadd.f32 %v2292, %v2591
    %v2593 = vpop.f32.mrb[0].mxu0
    %2594 = vmatprep.mubr.bf16.mxu0 %v2383
    %2595 = vmatmul.mubr.bf16.gmra.mrb[0].mxu0 %v2374
    %v2596 = vpop.f32.mrb[0].mxu0
    %v2597 = vadd.f32 %v2297, %v2596
    %v2598 = vpop.f32.mrb[0].mxu0
    %v2599 = vpop.f32.mrb[0].mxu0
    %v2600 = vpop.f32.mrb[0].mxu0
    %2601 = vdwg.mxu0
    %2602 = vmatprep.subr.bf16.mxu0 0
    %2603 = vmatpush1.bf16.msra.mxu0 %v2515
    %2604 = vmatprep.subr.bf16.mxu0 0
    %2605 = vmatpush1.bf16.msra.mxu0 %v2516
    %2606 = vmatprep.subr.bf16.mxu0 0
    %2607 = vmatpush1.bf16.msra.mxu0 %v2517
    %2608 = vmatprep.subr.bf16.mxu0 0
    %2609 = vmatpush1.bf16.msra.mxu0 %v2518
    %2610 = vmatprep.subr.bf16.mxu0 0
    %2611 = vmatpush1.bf16.msra.mxu0 %v2519
    %2612 = vmatprep.subr.bf16.mxu0 0
    %2613 = vmatpush1.bf16.msra.mxu0 %v2520
    %2614 = vmatprep.subr.bf16.mxu0 0
    %2615 = vmatpush1.bf16.msra.mxu0 %v2521
    %2616 = vmatprep.subr.bf16.mxu0 0
    %2617 = vmatpush1.bf16.msra.mxu0 %v2522
    %2618 = vmatprep.subr.bf16.mxu0 0
    %2619 = vmatpush1.bf16.msra.mxu0 0
    %2620 = vmatprep.subr.bf16.mxu0 0
    %2621 = vmatpush1.bf16.msra.mxu0 0
    %2622 = vmatprep.subr.bf16.mxu0 0
    %2623 = vmatpush1.bf16.msra.mxu0 0
    %2624 = vmatprep.subr.bf16.mxu0 0
    %2625 = vmatpush1.bf16.msra.mxu0 0
    %2626 = vmatprep.subr.bf16.mxu0 0
    %2627 = vmatpush1.bf16.msra.mxu0 0
    %2628 = vmatprep.subr.bf16.mxu0 0
    %2629 = vmatpush1.bf16.msra.mxu0 0
    %2630 = vmatprep.subr.bf16.mxu0 0
    %2631 = vmatpush1.bf16.msra.mxu0 0
    %2632 = vmatprep.subr.bf16.mxu0 0
    %2633 = vmatpush1.bf16.msra.mxu0 0
    %2634 = vmatprep.mubr.bf16.mxu0 0
    %2635 = vmatmul.mubr.bf16.gmra.mrb[0].mxu0 %v2366
    %v2636 = vpop.f32.mrb[0].mxu0
    %v2637 = vadd.f32 %v2582, %v2636
    %v2638 = vpop.f32.mrb[0].mxu0
    %v2639 = vpop.f32.mrb[0].mxu0
    %v2640 = vadd.f32 %v2585, %v2639
    %v2641 = vpop.f32.mrb[0].mxu0
    %2642 = vmatprep.mubr.bf16.mxu0 0
    %2643 = vmatmul.mubr.bf16.gmra.mrb[0].mxu0 %v2393
    %v2644 = vpop.f32.mrb[0].mxu0
    %v2645 = vpop.f32.mrb[0].mxu0
    %v2646 = vpop.f32.mrb[0].mxu0
    %v2647 = vadd.f32 %v2592, %v2646
    %v2648 = vpop.f32.mrb[0].mxu0
    %2649 = vmatprep.mubr.bf16.mxu0 0
    %2650 = vmatmul.mubr.bf16.gmra.mrb[0].mxu0 %v2392
    %v2651 = vpop.f32.mrb[0].mxu0
    %v2652 = vadd.f32 %v2597, %v2651
    %v2653 = vpop.f32.mrb[0].mxu0
    %v2654 = vpop.f32.mrb[0].mxu0
    %v2655 = vpop.f32.mrb[0].mxu0
    %2656 = vdwg.mxu0
    %v2657 = vld [vmem:[#allocation4 + $0xc] sm:$0xff]
    %v2658 = vld [vmem:[#allocation4 + $0x14] sm:$0xf]
    %v2659 = vld [vmem:[#allocation4 + $0x18] sm:$0xff]
    %v2660 = vld [vmem:[#allocation4 + $0x20] sm:$0xf]
    %v2661 = vld [vmem:[#allocation4 + $0x24] sm:$0xff]
    %v2662 = vld [vmem:[#allocation4 + $0x2c] sm:$0xf]
    %v2663 = vld [vmem:[#allocation4 + $0x30] sm:$0xff]
    %v2664 = vld [vmem:[#allocation4 + $0x38] sm:$0xf]
    %v2665 = vld [vmem:[#allocation4 + $0x3c] sm:$0xff]
    %v2666 = vld [vmem:[#allocation4 + $0x44] sm:$0xf]
    %v2667 = vld [vmem:[#allocation4 + $0x48] sm:$0x11]
    %v2668 = vld [vmem:[#allocation4 + $0x50] sm:$0x1]
    %s2669 = scalar_lea.vmem [#allocation7], 384
    %v2670 = vld [vmem:[%s2669] sm:$0xf]
    %v2671 = vld [vmem:[%s2669 + $0x4] sm:$0xf]
    %v2672 = vld [vmem:[%s2669 + $0x8] sm:$0xf]
    %v2673 = vld [vmem:[%s2669 + $0xc] sm:$0xf]
    %v2674 = vld [vmem:[%s2669 + $0x10] sm:$0xf]
    %v2675 = vld [vmem:[%s2669 + $0x14] sm:$0xf]
    %v2676 = vld [vmem:[%s2669 + $0x18] sm:$0xf]
    %v2677 = vld [vmem:[%s2669 + $0x1c] sm:$0xf]
    %v2678 = vld [vmem:[%s2669 + $0x20] sm:$0xf]
    %v2679 = vld [vmem:[%s2669 + $0x24] sm:$0xf]
    %v2680 = vld [vmem:[%s2669 + $0x28] sm:$0xf]
    %v2681 = vld [vmem:[%s2669 + $0x2c] sm:$0xf]
    %v2682 = vld [vmem:[%s2669 + $0x30] sm:$0xf]
    %v2683 = vld [vmem:[%s2669 + $0x34] sm:$0xf]
    %v2684 = vld [vmem:[%s2669 + $0x38] sm:$0xf]
    %v2685 = vld [vmem:[%s2669 + $0x3c] sm:$0xf]
    %v2686 = vld [vmem:[%s2669 + $0x40] sm:$0xf]
    %v2687 = vld [vmem:[%s2669 + $0x44] sm:$0xf]
    %v2688 = vld [vmem:[%s2669 + $0x48] sm:$0xf]
    %v2689 = vld [vmem:[%s2669 + $0x4c] sm:$0xf]
    %v2690 = vld [vmem:[%s2669 + $0x50] sm:$0xf]
    %v2691 = vld [vmem:[%s2669 + $0x54] sm:$0xf]
    %v2692 = vld [vmem:[%s2669 + $0x58] sm:$0xf]
    %v2693 = vld [vmem:[%s2669 + $0x5c] sm:$0xf]
    %v2694 = vld [vmem:[%s2669 + $0x60] sm:$0xf]
    %v2695 = vld [vmem:[%s2669 + $0x64] sm:$0xf]
    %v2696 = vld [vmem:[%s2669 + $0x68] sm:$0xf]
    %v2697 = vld [vmem:[%s2669 + $0x6c] sm:$0xf]
    %v2698 = vld [vmem:[%s2669 + $0x70] sm:$0xf]
    %v2699 = vld [vmem:[%s2669 + $0x74] sm:$0xf]
    %v2700 = vld [vmem:[%s2669 + $0x78] sm:$0xf]
    %v2701 = vld [vmem:[%s2669 + $0x7c] sm:$0xf]
    %v2702 = vld [vmem:[%s2669 + $0x80] sm:$0xf]
    %v2703 = vld [vmem:[%s2669 + $0x84] sm:$0xf]
    %v2704 = vld [vmem:[%s2669 + $0x88] sm:$0xf]
    %v2705 = vld [vmem:[%s2669 + $0x8c] sm:$0xf]
    %v2706 = vld [vmem:[%s2669 + $0x90] sm:$0xf]
    %v2707 = vld [vmem:[%s2669 + $0x94] sm:$0xf]
    %v2708 = vld [vmem:[%s2669 + $0x98] sm:$0xf]
    %v2709 = vld [vmem:[%s2669 + $0x9c] sm:$0xf]
    %v2710 = vld [vmem:[%s2669 + $0xa0] sm:$0xf]
    %v2711 = vld [vmem:[%s2669 + $0xa4] sm:$0xf]
    %v2712 = vld [vmem:[%s2669 + $0xa8] sm:$0xf]
    %v2713 = vld [vmem:[%s2669 + $0xac] sm:$0xf]
    %v2714 = vld [vmem:[%s2669 + $0xb0] sm:$0xf]
    %v2715 = vld [vmem:[%s2669 + $0xb4] sm:$0xf]
    %v2716 = vld [vmem:[%s2669 + $0xb8] sm:$0xf]
    %v2717 = vld [vmem:[%s2669 + $0xbc] sm:$0xf]
    %v2730 = vunpack.c.l.b16 %v2657
    %v2731 = vunpack.c.h.b16 %v2657
    %v2732 = vunpack.c.l.b16 %v2658
    %v2733 = vunpack.c.l.b16 %v2659
    %v2734 = vunpack.c.h.b16 %v2659
    %v2735 = vunpack.c.l.b16 %v2660
    %v2736 = vunpack.c.l.b16 %v2661
    %v2737 = vunpack.c.h.b16 %v2661
    %v2738 = vunpack.c.l.b16 %v2662
    %v2739 = vunpack.c.l.b16 %v2663
    %v2740 = vunpack.c.h.b16 %v2663
    %v2741 = vunpack.c.l.b16 %v2664
    %v2742 = vunpack.c.l.b16 %v2665
    %v2743 = vunpack.c.h.b16 %v2665
    %v2744 = vunpack.c.l.b16 %v2666
    %v2745 = vunpack.c.l.b16 %v2667
    %v2746 = vunpack.c.h.b16 %v2667
    %v2747 = vunpack.c.l.b16 %v2668
    %v2748 = vpack.c.b16 %v2733, %v2730
    %v2749 = vpack.c.b16 %v2734, %v2731
    %v2750 = vpack.c.b16 %v2735, %v2732
    %v2751 = vpack.c.b16 %v2739, %v2736
    %v2752 = vpack.c.b16 %v2740, %v2737
    %v2753 = vpack.c.b16 %v2741, %v2738
    %v2754 = vpack.c.b16 %v2745, %v2742
    %v2755 = vpack.c.b16 %v2746, %v2743
    %v2756 = vpack.c.b16 %v2747, %v2744
    %v2758 = vshrl.u32 %v2748, 16
    %v2760 = vshll.u32 %v2748, 16
    %v2762 = vrot.slane %v2760, 1
    %v2763 = vor.u32 %v2758, %v2762
    %v2765 = vshll.u32 %v2751, 16
    %v2767 = vrot.slane %v2765, 1
    %v2768 = vsel %vm364, %v2763, %v2767
    %v2770 = vshrl.u32 %v2749, 16
    %v2772 = vshll.u32 %v2749, 16
    %v2774 = vrot.slane %v2772, 1
    %v2775 = vor.u32 %v2770, %v2774
    %v2777 = vshll.u32 %v2752, 16
    %v2779 = vrot.slane %v2777, 1
    %v2780 = vsel %vm364, %v2775, %v2779
    %v2782 = vshrl.u32 %v2750, 16
    %v2784 = vshll.u32 %v2750, 16
    %v2786 = vrot.slane %v2784, 1
    %v2787 = vor.u32 %v2782, %v2786
    %v2789 = vshll.u32 %v2753, 16
    %v2791 = vrot.slane %v2789, 1
    %v2792 = vsel %vm364, %v2787, %v2791
    %v2793 = vshrl.u32 %v2751, 16
    %v2795 = vor.u32 %v2793, %v2767
    %v2797 = vshll.u32 %v2754, 16
    %v2799 = vrot.slane %v2797, 1
    %v2800 = vsel %vm364, %v2795, %v2799
    %v2801 = vshrl.u32 %v2752, 16
    %v2803 = vor.u32 %v2801, %v2779
    %v2805 = vshll.u32 %v2755, 16
    %v2807 = vrot.slane %v2805, 1
    %v2808 = vsel %vm364, %v2803, %v2807
    %v2809 = vshrl.u32 %v2753, 16
    %v2811 = vor.u32 %v2809, %v2791
    %v2813 = vshll.u32 %v2756, 16
    %v2815 = vrot.slane %v2813, 1
    %v2816 = vsel %vm364, %v2811, %v2815
    %v2817 = vshrl.u32 %v2754, 16
    %v2819 = vor.u32 %v2817, %v2799
    %v2820 = vshrl.u32 %v2755, 16
    %v2822 = vor.u32 %v2820, %v2807
    %v2823 = vshrl.u32 %v2756, 16
    %v2825 = vor.u32 %v2823, %v2815
    %v2883 = vunpack.c.l.b16 %v2670
    %v2884 = vunpack.c.l.b16 %v2671
    %v2885 = vunpack.c.l.b16 %v2672
    %v2886 = vunpack.c.l.b16 %v2673
    %v2887 = vunpack.c.l.b16 %v2674
    %v2888 = vunpack.c.l.b16 %v2675
    %v2889 = vunpack.c.l.b16 %v2676
    %v2890 = vunpack.c.l.b16 %v2677
    %v2891 = vunpack.c.l.b16 %v2678
    %v2892 = vunpack.c.l.b16 %v2679
    %v2893 = vunpack.c.l.b16 %v2680
    %v2894 = vunpack.c.l.b16 %v2681
    %v2895 = vunpack.c.l.b16 %v2682
    %v2896 = vunpack.c.l.b16 %v2683
    %v2897 = vunpack.c.l.b16 %v2684
    %v2898 = vunpack.c.l.b16 %v2685
    %v2899 = vunpack.c.l.b16 %v2686
    %v2900 = vunpack.c.l.b16 %v2687
    %v2901 = vunpack.c.l.b16 %v2688
    %v2902 = vunpack.c.l.b16 %v2689
    %v2903 = vunpack.c.l.b16 %v2690
    %v2904 = vunpack.c.l.b16 %v2691
    %v2905 = vunpack.c.l.b16 %v2692
    %v2906 = vunpack.c.l.b16 %v2693
    %v2907 = vunpack.c.l.b16 %v2694
    %v2908 = vunpack.c.l.b16 %v2695
    %v2909 = vunpack.c.l.b16 %v2696
    %v2910 = vunpack.c.l.b16 %v2697
    %v2911 = vunpack.c.l.b16 %v2698
    %v2912 = vunpack.c.l.b16 %v2699
    %v2913 = vunpack.c.l.b16 %v2700
    %v2914 = vunpack.c.l.b16 %v2701
    %v2915 = vunpack.c.l.b16 %v2702
    %v2916 = vunpack.c.l.b16 %v2703
    %v2917 = vunpack.c.l.b16 %v2704
    %v2918 = vunpack.c.l.b16 %v2705
    %v2919 = vunpack.c.l.b16 %v2706
    %v2920 = vunpack.c.l.b16 %v2707
    %v2921 = vunpack.c.l.b16 %v2708
    %v2922 = vunpack.c.l.b16 %v2709
    %v2923 = vunpack.c.l.b16 %v2710
    %v2924 = vunpack.c.l.b16 %v2711
    %v2925 = vunpack.c.l.b16 %v2712
    %v2926 = vunpack.c.l.b16 %v2713
    %v2927 = vunpack.c.l.b16 %v2714
    %v2928 = vunpack.c.l.b16 %v2715
    %v2929 = vunpack.c.l.b16 %v2716
    %v2930 = vunpack.c.l.b16 %v2717
    %v2931 = vpack.c.b16 %v2884, %v2883
    %v2932 = vpack.c.b16 %v2886, %v2885
    %v2933 = vpack.c.b16 %v2888, %v2887
    %v2934 = vpack.c.b16 %v2890, %v2889
    %v2935 = vpack.c.b16 %v2892, %v2891
    %v2936 = vpack.c.b16 %v2894, %v2893
    %v2937 = vpack.c.b16 %v2896, %v2895
    %v2938 = vpack.c.b16 %v2898, %v2897
    %v2939 = vpack.c.b16 %v2900, %v2899
    %v2940 = vpack.c.b16 %v2902, %v2901
    %v2941 = vpack.c.b16 %v2904, %v2903
    %v2942 = vpack.c.b16 %v2906, %v2905
    %v2943 = vpack.c.b16 %v2908, %v2907
    %v2944 = vpack.c.b16 %v2910, %v2909
    %v2945 = vpack.c.b16 %v2912, %v2911
    %v2946 = vpack.c.b16 %v2914, %v2913
    %v2947 = vpack.c.b16 %v2916, %v2915
    %v2948 = vpack.c.b16 %v2918, %v2917
    %v2949 = vpack.c.b16 %v2920, %v2919
    %v2950 = vpack.c.b16 %v2922, %v2921
    %v2951 = vpack.c.b16 %v2924, %v2923
    %v2952 = vpack.c.b16 %v2926, %v2925
    %v2953 = vpack.c.b16 %v2928, %v2927
    %v2954 = vpack.c.b16 %v2930, %v2929
    %2979 = vmatprep.subr.bf16.mxu0 0
    %2980 = vmatpush1.bf16.msra.mxu0 %v2931
    %2981 = vmatprep.subr.bf16.mxu0 0
    %2982 = vmatpush1.bf16.msra.mxu0 %v2932
    %2983 = vmatprep.subr.bf16.mxu0 0
    %2984 = vmatpush1.bf16.msra.mxu0 %v2933
    %2985 = vmatprep.subr.bf16.mxu0 0
    %2986 = vmatpush1.bf16.msra.mxu0 %v2934
    %2987 = vmatprep.subr.bf16.mxu0 0
    %2988 = vmatpush1.bf16.msra.mxu0 %v2935
    %2989 = vmatprep.subr.bf16.mxu0 0
    %2990 = vmatpush1.bf16.msra.mxu0 %v2936
    %2991 = vmatprep.subr.bf16.mxu0 0
    %2992 = vmatpush1.bf16.msra.mxu0 %v2937
    %2993 = vmatprep.subr.bf16.mxu0 0
    %2994 = vmatpush1.bf16.msra.mxu0 %v2938
    %2995 = vmatprep.subr.bf16.mxu0 0
    %2996 = vmatpush1.bf16.msra.mxu0 %v2939
    %2997 = vmatprep.subr.bf16.mxu0 0
    %2998 = vmatpush1.bf16.msra.mxu0 %v2940
    %2999 = vmatprep.subr.bf16.mxu0 0
    %3000 = vmatpush1.bf16.msra.mxu0 %v2941
    %3001 = vmatprep.subr.bf16.mxu0 0
    %3002 = vmatpush1.bf16.msra.mxu0 %v2942
    %3003 = vmatprep.subr.bf16.mxu0 0
    %3004 = vmatpush1.bf16.msra.mxu0 %v2943
    %3005 = vmatprep.subr.bf16.mxu0 0
    %3006 = vmatpush1.bf16.msra.mxu0 %v2944
    %3007 = vmatprep.subr.bf16.mxu0 0
    %3008 = vmatpush1.bf16.msra.mxu0 %v2945
    %3009 = vmatprep.subr.bf16.mxu0 0
    %3010 = vmatpush1.bf16.msra.mxu0 %v2946
    %3011 = vmatprep.mubr.bf16.mxu0 %v2780
    %3012 = vmatmul.mubr.bf16.gmra.mrb[0].mxu0 %v2768
    %v3013 = vpop.f32.mrb[0].mxu0
    %v3014 = vadd.f32 0.0, %v3013
    %v3015 = vpop.f32.mrb[0].mxu0
    %v3016 = vpop.f32.mrb[0].mxu0
    %v3017 = vadd.f32 0.0, %v3016
    %v3018 = vpop.f32.mrb[0].mxu0
    %3019 = vmatprep.mubr.bf16.mxu0 %v2808
    %3020 = vmatmul.mubr.bf16.gmra.mrb[0].mxu0 %v2800
    %v3021 = vpop.f32.mrb[0].mxu0
    %v3022 = vpop.f32.mrb[0].mxu0
    %v3023 = vpop.f32.mrb[0].mxu0
    %v3024 = vadd.f32 0.0, %v3023
    %v3025 = vpop.f32.mrb[0].mxu0
    %3026 = vmatprep.mubr.bf16.mxu0 %v2822
    %3027 = vmatmul.mubr.bf16.gmra.mrb[0].mxu0 %v2819
    %v3028 = vpop.f32.mrb[0].mxu0
    %v3029 = vadd.f32 0.0, %v3028
    %v3030 = vpop.f32.mrb[0].mxu0
    %v3031 = vpop.f32.mrb[0].mxu0
    %v3032 = vpop.f32.mrb[0].mxu0
    %3033 = vdwg.mxu0
    %3034 = vmatprep.subr.bf16.mxu0 0
    %3035 = vmatpush1.bf16.msra.mxu0 %v2947
    %3036 = vmatprep.subr.bf16.mxu0 0
    %3037 = vmatpush1.bf16.msra.mxu0 %v2948
    %3038 = vmatprep.subr.bf16.mxu0 0
    %3039 = vmatpush1.bf16.msra.mxu0 %v2949
    %3040 = vmatprep.subr.bf16.mxu0 0
    %3041 = vmatpush1.bf16.msra.mxu0 %v2950
    %3042 = vmatprep.subr.bf16.mxu0 0
    %3043 = vmatpush1.bf16.msra.mxu0 %v2951
    %3044 = vmatprep.subr.bf16.mxu0 0
    %3045 = vmatpush1.bf16.msra.mxu0 %v2952
    %3046 = vmatprep.subr.bf16.mxu0 0
    %3047 = vmatpush1.bf16.msra.mxu0 %v2953
    %3048 = vmatprep.subr.bf16.mxu0 0
    %3049 = vmatpush1.bf16.msra.mxu0 %v2954
    %3050 = vmatprep.subr.bf16.mxu0 0
    %3051 = vmatpush1.bf16.msra.mxu0 0
    %3052 = vmatprep.subr.bf16.mxu0 0
    %3053 = vmatpush1.bf16.msra.mxu0 0
    %3054 = vmatprep.subr.bf16.mxu0 0
    %3055 = vmatpush1.bf16.msra.mxu0 0
    %3056 = vmatprep.subr.bf16.mxu0 0
    %3057 = vmatpush1.bf16.msra.mxu0 0
    %3058 = vmatprep.subr.bf16.mxu0 0
    %3059 = vmatpush1.bf16.msra.mxu0 0
    %3060 = vmatprep.subr.bf16.mxu0 0
    %3061 = vmatpush1.bf16.msra.mxu0 0
    %3062 = vmatprep.subr.bf16.mxu0 0
    %3063 = vmatpush1.bf16.msra.mxu0 0
    %3064 = vmatprep.subr.bf16.mxu0 0
    %3065 = vmatpush1.bf16.msra.mxu0 0
    %3066 = vmatprep.mubr.bf16.mxu0 0
    %3067 = vmatmul.mubr.bf16.gmra.mrb[0].mxu0 %v2792
    %v3068 = vpop.f32.mrb[0].mxu0
    %v3069 = vadd.f32 %v3014, %v3068
    %v3070 = vpop.f32.mrb[0].mxu0
    %v3071 = vpop.f32.mrb[0].mxu0
    %v3072 = vadd.f32 %v3017, %v3071
    %v3073 = vpop.f32.mrb[0].mxu0
    %3074 = vmatprep.mubr.bf16.mxu0 0
    %3075 = vmatmul.mubr.bf16.gmra.mrb[0].mxu0 %v2816
    %v3076 = vpop.f32.mrb[0].mxu0
    %v3077 = vpop.f32.mrb[0].mxu0
    %v3078 = vpop.f32.mrb[0].mxu0
    %v3079 = vadd.f32 %v3024, %v3078
    %v3080 = vpop.f32.mrb[0].mxu0
    %3081 = vmatprep.mubr.bf16.mxu0 0
    %3082 = vmatmul.mubr.bf16.gmra.mrb[0].mxu0 %v2825
    %v3083 = vpop.f32.mrb[0].mxu0
    %v3084 = vadd.f32 %v3029, %v3083
    %v3085 = vpop.f32.mrb[0].mxu0
    %v3086 = vpop.f32.mrb[0].mxu0
    %v3087 = vpop.f32.mrb[0].mxu0
    %3088 = vdwg.mxu0
    %v3089 = vadd.f32 %v2637, %v3069
    %v3090 = vadd.f32 %v2640, %v3072
    %v3091 = vadd.f32 %v2647, %v3079
    %v3092 = vadd.f32 %v2652, %v3084
    %v3093 = vld [vmem:[%s4 + $0x8] sm:$0x1]
    %v3094 = vlaneseq
    %v3095 = vshrl.u32 %v3094, 7
    %v3096 = vsub.s32 0, %v3095
    %v3097 = vrot.slane %v3093, %v3096
    %v3098 = vmul.f32 %v3089, %v3097
    %v3099 = vmul.f32 %v3090, %v3097
    %v3100 = vmul.f32 %v3091, %v3097
    %v3101 = vmul.f32 %v3092, %v3097
    %v3102 = vld [vmem:[%s4 + $0x9] sm:$0x1]
    %v3103 = vlaneseq
    %v3104 = vshrl.u32 %v3103, 7
    %v3105 = vsub.s32 0, %v3104
    %v3106 = vrot.slane %v3102, %v3105
    %v3107 = vadd.f32 %v3098, %v3106
    %v3108 = vadd.f32 %v3099, %v3106
    %v3109 = vadd.f32 %v3100, %v3106
    %v3110 = vadd.f32 %v3101, %v3106
    %v3111 = vmul.f32 %v3107, 0.2
    %v3112 = vmul.f32 %v3108, 0.2
    %v3113 = vmul.f32 %v3109, 0.2
    %v3114 = vmul.f32 %v3110, 0.2
    %v3115 = vmax.f32 %v3107, %v3111
    %v3116 = vmax.f32 %v3108, %v3112
    %v3117 = vmax.f32 %v3109, %v3113
    %v3118 = vmax.f32 %v3110, %v3114
    %3119 = vst [vmem:[%s5] sm:$0xff] %v3115
    %3120 = vst [vmem:[%s5 + $0x8] sm:$0xff] %v3116
    %s3121 = scalar_lea.vmem %s5, 16
    %3122 = vst [vmem:[%s3121] sm:$0xff] %v3117
    %3123 = vst [vmem:[%s3121 + $0x8] sm:$0xff] %v3118
    // Predicated region
    $region30: #{conv_down_forward.1} parent=1 // pred_check
      _
    $region31: #{conv_down_forward.1} parent=1 // pred_check_branch
      %3125 = sbr.rel (0) target = $region33
    $region32: #{conv_down_forward.1} parent=1 // pred_region
      _
    $region33: #{conv_down_forward.1} parent=1 // pred_fallthru
      _
    // Predicated region
    $region34: #{conv_down_forward.1} parent=1 // pred_check
      _
    $region35: #{conv_down_forward.1} parent=1 // pred_check_branch
      %3127 = sbr.rel (0) target = $region37
    $region36: #{conv_down_forward.1} parent=1 // pred_region
      _
    $region37: #{conv_down_forward.1} parent=1 // pred_fallthru
      _
    %3128 = vsyncpa [#allocation6], 1
    %3129 = vsyncpa [#allocation8], 1

</llo_original>
